<compile_context>
chip_gen: v5e
topology: v5e:2x2
jax: 0.10.0
libtpu: 0.0.40
codegen_flags: <defaults>
</compile_context>

<pallas_src>
import jax
import jax.numpy as jnp
from jax.experimental import pallas as pl
from jax.experimental.pallas import tpu as pltpu


# --------------------------------------------------------------------------
# Fused kernel: conv(im2col matmul) + ReLU + GAP + FC + ReLU + attention MIL
# --------------------------------------------------------------------------
def fused_kernel(patch_ref, cw_ref, cb_ref, pool_ref, fw_ref, fb_ref,
                 av_ref, aw_ref, seg_ref, clsw_ref, clsb_ref, out_ref):
    # Conv as one big lane-dense matmul: (BN*HW, 128)bf16 @ (128, 128)bf16 -> f32
    conv = jnp.dot(patch_ref[...], cw_ref[...],
                   preferred_element_type=jnp.float32) + cb_ref[...]
    conv = jnp.maximum(conv, 0.0)                                  # (BN*HW, CP)

    # Global average pool per tile as a matmul with the (BN, BN*HW) pooling
    # matrix (rows = 1/HW over each tile's spatial positions) -> rides the MXU.
    gap = jnp.dot(pool_ref[...], conv,
                  preferred_element_type=jnp.float32)              # (BN, CP)

    # FC + ReLU -> per-tile features (padded to 128 lanes; pad lanes are 0).
    feat = jnp.dot(gap, fw_ref[...],
                   preferred_element_type=jnp.float32) + fb_ref[...]
    feat = jnp.maximum(feat, 0.0)                                  # (BN, DP)

    # ---- tanh-attention MIL head (all resident in VMEM) ----
    a = jnp.tanh(jnp.dot(feat, av_ref[...],
                         preferred_element_type=jnp.float32))      # (BN, AP)
    s = jnp.sum(a * aw_ref[...], axis=1, keepdims=True)            # (BN, 1)
    # Global max subtraction is equivalent to per-bag max for softmax.
    s = s - jnp.max(s, axis=0, keepdims=True)
    e = jnp.exp(s)                                                 # (BN, 1)

    # Per-bag weighted sum via the (B, BN) segment matrix:
    #   pooled_b = (sum_n e_n * f_n) / (sum_n e_n)   over tiles n of bag b.
    num = jnp.dot(seg_ref[...], e * feat,
                  preferred_element_type=jnp.float32)              # (B, DP)
    den = jnp.dot(seg_ref[...], e,
                  preferred_element_type=jnp.float32)              # (B, 1)
    pooled = num * pl.reciprocal(den, approx=True)                 # (B, DP)

    out_ref[...] = (jnp.dot(pooled, clsw_ref[...],
                            preferred_element_type=jnp.float32)
                    + clsb_ref[...])                               # (B, NC)


# --------------------------------------------------------------------------
# Host-side glue: im2col (pure data movement), padding/packing, pallas_call
# --------------------------------------------------------------------------
def im2col(x, kh=3, kw=3, pad=1):
    # x: (M, C, H, W) -> (M*H*W, C*kh*kw), column order = c*(kh*kw) + i*kw + j
    M, C, H, W = x.shape
    xp = jnp.pad(x, ((0, 0), (0, 0), (pad, pad), (pad, pad)))
    cols = []
    for i in range(kh):
        for j in range(kw):
            cols.append(xp[:, :, i:i + H, j:j + W])                # (M, C, H, W)
    patches = jnp.stack(cols, axis=2)                              # (M, C, 9, H, W)
    patches = patches.transpose(0, 3, 4, 1, 2)                     # (M, H, W, C, 9)
    return patches.reshape(M * H * W, C * kh * kw)


def e2e_mil_forward(x, params):
    B, N, C, H, W = x.shape
    BN, HW = B * N, H * W
    Cout = params["conv_w"].shape[0]
    D = params["fc_w"].shape[1]
    A = params["att_V"].shape[1]
    NC = params["cls_w"].shape[1]
    K = C * 9
    KP = CP = DP = AP = 128        # lane-dense padded dims

    # im2col patches, K zero-padded to 128 lanes, bf16 for MXU/DMA.
    patches = im2col(x.reshape(BN, C, H, W))                       # (BN*HW, K)
    patches = jnp.pad(patches, ((0, 0), (0, KP - K))).astype(jnp.bfloat16)

    # Conv weight: OIHW -> (K, Cout), zero-padded to (128, 128), bf16.
    cw = params["conv_w"].reshape(Cout, K).T
    cw = jnp.pad(cw, ((0, KP - K), (0, CP - Cout))).astype(jnp.bfloat16)
    cb = jnp.pad(params["conv_b"].reshape(1, Cout), ((0, 0), (0, CP - Cout)))

    # Constant pooling matrix (per-tile spatial mean) and bag-segment matrix.
    pool = jnp.repeat(jnp.eye(BN, dtype=jnp.float32), HW, axis=1) / HW  # (BN, BN*HW)
    seg = jnp.repeat(jnp.eye(B, dtype=jnp.float32), N, axis=1)          # (B, BN)

    # Remaining (tiny) params, zero-padded to 128 lanes where useful.
    fw = jnp.pad(params["fc_w"], ((0, CP - Cout), (0, DP - D)))
    fb = jnp.pad(params["fc_b"].reshape(1, D), ((0, 0), (0, DP - D)))
    av = jnp.pad(params["att_V"], ((0, DP - D), (0, AP - A)))
    aw = jnp.pad(params["att_w"].reshape(1, A), ((0, 0), (0, AP - A)))
    clsw = jnp.pad(params["cls_w"], ((0, DP - D), (0, 0)))              # (DP, NC)
    clsb = params["cls_b"].reshape(1, NC)

    logits = pl.pallas_call(
        fused_kernel,
        out_shape=jax.ShapeDtypeStruct((B, NC), jnp.float32),
        grid_spec=pltpu.PrefetchScalarGridSpec(
            num_scalar_prefetch=0,
            grid=(1,),
            in_specs=[
                pl.BlockSpec((BN * HW, KP), lambda i: (0, 0)),   # patches
                pl.BlockSpec((KP, CP), lambda i: (0, 0)),        # conv_w
                pl.BlockSpec((1, CP), lambda i: (0, 0)),         # conv_b
                pl.BlockSpec((BN, BN * HW), lambda i: (0, 0)),   # pool matrix
                pl.BlockSpec((CP, DP), lambda i: (0, 0)),        # fc_w
                pl.BlockSpec((1, DP), lambda i: (0, 0)),         # fc_b
                pl.BlockSpec((DP, AP), lambda i: (0, 0)),        # att_V
                pl.BlockSpec((1, AP), lambda i: (0, 0)),         # att_w (row)
                pl.BlockSpec((B, BN), lambda i: (0, 0)),         # segment matrix
                pl.BlockSpec((DP, NC), lambda i: (0, 0)),        # cls_w
                pl.BlockSpec((1, NC), lambda i: (0, 0)),         # cls_b
            ],
            out_specs=pl.BlockSpec((B, NC), lambda i: (0, 0)),
        ),
        compiler_params=pltpu.CompilerParams(
            dimension_semantics=("arbitrary",)),
    )(patches, cw, cb, pool, fw, fb, av, aw, seg, clsw, clsb)

    return logits


# --------------------------------------------------------------------------
# Pure-JAX reference (same math, XLA ops) for correctness check
# --------------------------------------------------------------------------
def reference_forward(x, params):
    B, N, C, H, W = x.shape
    xt = x.reshape(B * N, C, H, W)
    conv = jax.lax.conv_general_dilated(
        xt, params["conv_w"], (1, 1), "SAME",
        dimension_numbers=("NCHW", "OIHW", "NCHW"))
    conv = jax.nn.relu(conv + params["conv_b"].reshape(1, -1, 1, 1))
    gap = conv.mean(axis=(2, 3))
    feat = jax.nn.relu(gap @ params["fc_w"] + params["fc_b"])
    feat = feat.reshape(B, N, -1)
    a = jnp.tanh(feat @ params["att_V"])
    s = a @ params["att_w"]
    attn = jax.nn.softmax(s, axis=1)
    pooled = (attn * feat).sum(axis=1)
    return pooled @ params["cls_w"] + params["cls_b"]


if __name__ == "__main__":
    B, N, C, H, W = 2, 8, 4, 16, 16
    Cout, D, A, NC = 8, 32, 16, 2

    key = jax.random.PRNGKey(0)
    ks = jax.random.split(key, 8)
    x = jax.random.normal(ks[0], (B, N, C, H, W), dtype=jnp.float32)

    params = {
        "conv_w": 0.1 * jax.random.normal(ks[1], (Cout, C, 3, 3), jnp.float32),
        "conv_b": 0.1 * jax.random.normal(ks[2], (Cout,), jnp.float32),
        "fc_w":   0.1 * jax.random.normal(ks[3], (Cout, D), jnp.float32),
        "fc_b":   0.1 * jax.random.normal(ks[4], (D,), jnp.float32),
        "att_V":  0.1 * jax.random.normal(ks[5], (D, A), jnp.float32),
        "att_w":  0.1 * jax.random.normal(ks[6], (A, 1), jnp.float32),
        "cls_w":  0.1 * jax.random.normal(ks[7], (D, NC), jnp.float32),
        "cls_b":  jnp.zeros((NC,), jnp.float32),
    }

    logits = jax.block_until_ready(e2e_mil_forward(x, params))
    ref = jax.block_until_ready(reference_forward(x, params))

    assert logits.shape == (B, NC), logits.shape
    assert jnp.allclose(logits, ref, atol=2e-2, rtol=2e-2), (logits, ref)
    print("KERNEL_OK")
</pallas_src>

<mosaic_0001>
module attributes {stable_mosaic.version = 11 : i64} {
  func.func @fused_kernel(%arg0: i32, %arg1: memref<4096x128xbf16, #tpu.memory_space<vmem>>, %arg2: memref<128x128xbf16, #tpu.memory_space<vmem>>, %arg3: memref<1x128xf32, #tpu.memory_space<vmem>>, %arg4: memref<16x4096xf32, #tpu.memory_space<vmem>>, %arg5: memref<128x128xf32, #tpu.memory_space<vmem>>, %arg6: memref<1x128xf32, #tpu.memory_space<vmem>>, %arg7: memref<128x128xf32, #tpu.memory_space<vmem>>, %arg8: memref<1x128xf32, #tpu.memory_space<vmem>>, %arg9: memref<2x16xf32, #tpu.memory_space<vmem>>, %arg10: memref<128x2xf32, #tpu.memory_space<vmem>>, %arg11: memref<1x2xf32, #tpu.memory_space<vmem>>, %arg12: memref<2x2xf32, #tpu.memory_space<vmem>>) attributes {dimension_semantics = [#tpu.dimension_semantics<arbitrary>], iteration_bounds = array<i64: 1>, scalar_prefetch = 0 : i64, scratch_operands = 0 : i64, tpu.core_type = #tpu.core_type<tc>, window_params = [{pipeline_mode = #tpu.pipeline_mode<synchronous>, transform_indices = @transform_0, window_bounds = array<i64: 4096, 128>}, {pipeline_mode = #tpu.pipeline_mode<synchronous>, transform_indices = @transform_1, window_bounds = array<i64: 128, 128>}, {pipeline_mode = #tpu.pipeline_mode<synchronous>, transform_indices = @transform_2, window_bounds = array<i64: 1, 128>}, {pipeline_mode = #tpu.pipeline_mode<synchronous>, transform_indices = @transform_3, window_bounds = array<i64: 16, 4096>}, {pipeline_mode = #tpu.pipeline_mode<synchronous>, transform_indices = @transform_4, window_bounds = array<i64: 128, 128>}, {pipeline_mode = #tpu.pipeline_mode<synchronous>, transform_indices = @transform_5, window_bounds = array<i64: 1, 128>}, {pipeline_mode = #tpu.pipeline_mode<synchronous>, transform_indices = @transform_6, window_bounds = array<i64: 128, 128>}, {pipeline_mode = #tpu.pipeline_mode<synchronous>, transform_indices = @transform_7, window_bounds = array<i64: 1, 128>}, {pipeline_mode = #tpu.pipeline_mode<synchronous>, transform_indices = @transform_8, window_bounds = array<i64: 2, 16>}, {pipeline_mode = #tpu.pipeline_mode<synchronous>, transform_indices = @transform_9, window_bounds = array<i64: 128, 2>}, {pipeline_mode = #tpu.pipeline_mode<synchronous>, transform_indices = @transform_10, window_bounds = array<i64: 1, 2>}, {pipeline_mode = #tpu.pipeline_mode<synchronous>, transform_indices = @transform_11, window_bounds = array<i64: 2, 2>}]} {
    %c0 = arith.constant 0 : index
    %c0_0 = arith.constant 0 : index
    %0 = vector.load %arg1[%c0, %c0_0] : memref<4096x128xbf16, #tpu.memory_space<vmem>>, vector<4096x128xbf16>
    %c0_1 = arith.constant 0 : index
    %c0_2 = arith.constant 0 : index
    %1 = vector.load %arg2[%c0_1, %c0_2] : memref<128x128xbf16, #tpu.memory_space<vmem>>, vector<128x128xbf16>
    %cst = arith.constant dense<0.000000e+00> : vector<4096x128xf32>
    %2 = tpu.matmul %0, %1, %cst {dimension_numbers = #tpu.dot_dimension_numbers<[1], [0], [0], [1], [0, 0, 1, 1], [], []>} : vector<4096x128xbf16>, vector<128x128xbf16>, vector<4096x128xf32> -> vector<4096x128xf32>
    %c0_3 = arith.constant 0 : index
    %c0_4 = arith.constant 0 : index
    %3 = vector.load %arg3[%c0_3, %c0_4] : memref<1x128xf32, #tpu.memory_space<vmem>>, vector<1x128xf32>
    %4 = vector.broadcast %3 : vector<1x128xf32> to vector<4096x128xf32>
    %5 = arith.addf %2, %4 : vector<4096x128xf32>
    %cst_5 = arith.constant 0.000000e+00 : f32
    %6 = vector.broadcast %cst_5 : f32 to vector<4096x128xf32>
    %7 = arith.maximumf %5, %6 : vector<4096x128xf32>
    %c0_6 = arith.constant 0 : index
    %c0_7 = arith.constant 0 : index
    %8 = vector.load %arg4[%c0_6, %c0_7] : memref<16x4096xf32, #tpu.memory_space<vmem>>, vector<16x4096xf32>
    %cst_8 = arith.constant dense<0.000000e+00> : vector<16x128xf32>
    %9 = tpu.matmul %8, %7, %cst_8 {dimension_numbers = #tpu.dot_dimension_numbers<[1], [0], [0], [1], [0, 0, 1, 1], [], []>} : vector<16x4096xf32>, vector<4096x128xf32>, vector<16x128xf32> -> vector<16x128xf32>
    %c0_9 = arith.constant 0 : index
    %c0_10 = arith.constant 0 : index
    %10 = vector.load %arg5[%c0_9, %c0_10] : memref<128x128xf32, #tpu.memory_space<vmem>>, vector<128x128xf32>
    %cst_11 = arith.constant dense<0.000000e+00> : vector<16x128xf32>
    %11 = tpu.matmul %9, %10, %cst_11 {dimension_numbers = #tpu.dot_dimension_numbers<[1], [0], [0], [1], [0, 0, 1, 1], [], []>} : vector<16x128xf32>, vector<128x128xf32>, vector<16x128xf32> -> vector<16x128xf32>
    %c0_12 = arith.constant 0 : index
    %c0_13 = arith.constant 0 : index
    %12 = vector.load %arg6[%c0_12, %c0_13] : memref<1x128xf32, #tpu.memory_space<vmem>>, vector<1x128xf32>
    %13 = vector.broadcast %12 : vector<1x128xf32> to vector<16x128xf32>
    %14 = arith.addf %11, %13 : vector<16x128xf32>
    %cst_14 = arith.constant 0.000000e+00 : f32
    %15 = vector.broadcast %cst_14 : f32 to vector<16x128xf32>
    %16 = arith.maximumf %14, %15 : vector<16x128xf32>
    %c0_15 = arith.constant 0 : index
    %c0_16 = arith.constant 0 : index
    %17 = vector.load %arg7[%c0_15, %c0_16] : memref<128x128xf32, #tpu.memory_space<vmem>>, vector<128x128xf32>
    %cst_17 = arith.constant dense<0.000000e+00> : vector<16x128xf32>
    %18 = tpu.matmul %16, %17, %cst_17 {dimension_numbers = #tpu.dot_dimension_numbers<[1], [0], [0], [1], [0, 0, 1, 1], [], []>} : vector<16x128xf32>, vector<128x128xf32>, vector<16x128xf32> -> vector<16x128xf32>
    %19 = math.tanh %18 : vector<16x128xf32>
    %c0_18 = arith.constant 0 : index
    %c0_19 = arith.constant 0 : index
    %20 = vector.load %arg8[%c0_18, %c0_19] : memref<1x128xf32, #tpu.memory_space<vmem>>, vector<1x128xf32>
    %21 = vector.broadcast %20 : vector<1x128xf32> to vector<16x128xf32>
    %22 = arith.mulf %19, %21 : vector<16x128xf32>
    %cst_20 = arith.constant dense<0.000000e+00> : vector<16xf32>
    %23 = vector.multi_reduction <add>, %22, %cst_20 [1] : vector<16x128xf32> to vector<16xf32>
    %24 = vector.shape_cast %23 : vector<16xf32> to vector<16x1xf32>
    %cst_21 = arith.constant dense<0xFF800000> : vector<1xf32>
    %25 = vector.multi_reduction <maximumf>, %24, %cst_21 [0] : vector<16x1xf32> to vector<1xf32>
    %26 = vector.shape_cast %25 : vector<1xf32> to vector<1x1xf32>
    %27 = vector.broadcast %26 : vector<1x1xf32> to vector<16x1xf32>
    %28 = arith.subf %24, %27 : vector<16x1xf32>
    %29 = math.exp %28 : vector<16x1xf32>
    %c0_22 = arith.constant 0 : index
    %c0_23 = arith.constant 0 : index
    %30 = vector.load %arg9[%c0_22, %c0_23] : memref<2x16xf32, #tpu.memory_space<vmem>>, vector<2x16xf32>
    %31 = vector.broadcast %29 : vector<16x1xf32> to vector<16x128xf32>
    %32 = arith.mulf %31, %16 : vector<16x128xf32>
    %cst_24 = arith.constant dense<0.000000e+00> : vector<2x128xf32>
    %33 = tpu.matmul %30, %32, %cst_24 {dimension_numbers = #tpu.dot_dimension_numbers<[1], [0], [0], [1], [0, 0, 1, 1], [], []>} : vector<2x16xf32>, vector<16x128xf32>, vector<2x128xf32> -> vector<2x128xf32>
    %c0_25 = arith.constant 0 : index
    %c0_26 = arith.constant 0 : index
    %34 = vector.load %arg9[%c0_25, %c0_26] : memref<2x16xf32, #tpu.memory_space<vmem>>, vector<2x16xf32>
    %cst_27 = arith.constant dense<0.000000e+00> : vector<2x1xf32>
    %35 = tpu.matmul %34, %29, %cst_27 {dimension_numbers = #tpu.dot_dimension_numbers<[1], [0], [0], [1], [0, 0, 1, 1], [], []>} : vector<2x16xf32>, vector<16x1xf32>, vector<2x1xf32> -> vector<2x1xf32>
    %36 = tpu.reciprocal %35 {approx = true} : vector<2x1xf32> -> vector<2x1xf32>
    %37 = vector.broadcast %36 : vector<2x1xf32> to vector<2x128xf32>
    %38 = arith.mulf %33, %37 : vector<2x128xf32>
    %c0_28 = arith.constant 0 : index
    %c0_29 = arith.constant 0 : index
    %39 = vector.load %arg10[%c0_28, %c0_29] : memref<128x2xf32, #tpu.memory_space<vmem>>, vector<128x2xf32>
    %cst_30 = arith.constant dense<0.000000e+00> : vector<2x2xf32>
    %40 = tpu.matmul %38, %39, %cst_30 {dimension_numbers = #tpu.dot_dimension_numbers<[1], [0], [0], [1], [0, 0, 1, 1], [], []>} : vector<2x128xf32>, vector<128x2xf32>, vector<2x2xf32> -> vector<2x2xf32>
    %c0_31 = arith.constant 0 : index
    %c0_32 = arith.constant 0 : index
    %41 = vector.load %arg11[%c0_31, %c0_32] : memref<1x2xf32, #tpu.memory_space<vmem>>, vector<1x2xf32>
    %42 = vector.broadcast %41 : vector<1x2xf32> to vector<2x2xf32>
    %43 = arith.addf %40, %42 : vector<2x2xf32>
    %c0_33 = arith.constant 0 : index
    %c0_34 = arith.constant 0 : index
    %44 = vector.load %arg12[%c0_33, %c0_34] : memref<2x2xf32, #tpu.memory_space<vmem>>, vector<2x2xf32>
    tpu.vector_store %arg12[%c0_33, %c0_34], %43 {strides = array<i32>} : memref<2x2xf32, #tpu.memory_space<vmem>>, vector<2x2xf32>,
    return
  }
  func.func @transform_0(%arg0: i32) -> (i32, i32) {
    %c0_i32 = arith.constant 0 : i32
    %c0_i32_0 = arith.constant 0 : i32
    %c0_i32_1 = arith.constant 0 : i32
    return %c0_i32, %c0_i32_0 : i32, i32
  }
  func.func @transform_1(%arg0: i32) -> (i32, i32) {
    %c0_i32 = arith.constant 0 : i32
    %c0_i32_0 = arith.constant 0 : i32
    %c0_i32_1 = arith.constant 0 : i32
    return %c0_i32, %c0_i32_0 : i32, i32
  }
  func.func @transform_2(%arg0: i32) -> (i32, i32) {
    %c0_i32 = arith.constant 0 : i32
    %c0_i32_0 = arith.constant 0 : i32
    %c0_i32_1 = arith.constant 0 : i32
    return %c0_i32, %c0_i32_0 : i32, i32
  }
  func.func @transform_3(%arg0: i32) -> (i32, i32) {
    %c0_i32 = arith.constant 0 : i32
    %c0_i32_0 = arith.constant 0 : i32
    %c0_i32_1 = arith.constant 0 : i32
    return %c0_i32, %c0_i32_0 : i32, i32
  }
  func.func @transform_4(%arg0: i32) -> (i32, i32) {
    %c0_i32 = arith.constant 0 : i32
    %c0_i32_0 = arith.constant 0 : i32
    %c0_i32_1 = arith.constant 0 : i32
    return %c0_i32, %c0_i32_0 : i32, i32
  }
  func.func @transform_5(%arg0: i32) -> (i32, i32) {
    %c0_i32 = arith.constant 0 : i32
    %c0_i32_0 = arith.constant 0 : i32
    %c0_i32_1 = arith.constant 0 : i32
    return %c0_i32, %c0_i32_0 : i32, i32
  }
  func.func @transform_6(%arg0: i32) -> (i32, i32) {
    %c0_i32 = arith.constant 0 : i32
    %c0_i32_0 = arith.constant 0 : i32
    %c0_i32_1 = arith.constant 0 : i32
    return %c0_i32, %c0_i32_0 : i32, i32
  }
  func.func @transform_7(%arg0: i32) -> (i32, i32) {
    %c0_i32 = arith.constant 0 : i32
    %c0_i32_0 = arith.constant 0 : i32
    %c0_i32_1 = arith.constant 0 : i32
    return %c0_i32, %c0_i32_0 : i32, i32
  }
  func.func @transform_8(%arg0: i32) -> (i32, i32) {
    %c0_i32 = arith.constant 0 : i32
    %c0_i32_0 = arith.constant 0 : i32
    %c0_i32_1 = arith.constant 0 : i32
    return %c0_i32, %c0_i32_0 : i32, i32
  }
  func.func @transform_9(%arg0: i32) -> (i32, i32) {
    %c0_i32 = arith.constant 0 : i32
    %c0_i32_0 = arith.constant 0 : i32
    %c0_i32_1 = arith.constant 0 : i32
    return %c0_i32, %c0_i32_0 : i32, i32
  }
  func.func @transform_10(%arg0: i32) -> (i32, i32) {
    %c0_i32 = arith.constant 0 : i32
    %c0_i32_0 = arith.constant 0 : i32
    %c0_i32_1 = arith.constant 0 : i32
    return %c0_i32, %c0_i32_0 : i32, i32
  }
  func.func @transform_11(%arg0: i32) -> (i32, i32) {
    %c0_i32 = arith.constant 0 : i32
    %c0_i32_0 = arith.constant 0 : i32
    %c0_i32_1 = arith.constant 0 : i32
    return %c0_i32, %c0_i32_0 : i32, i32
  }
}

</mosaic_0001>

<llo_original>
// kernel: tpu_custom_call.1
$region0: #{tpu_custom_call.1}
  #allocation0 [shape = 'u32[]', space=smem, size = 0x4, offset = 0x4, fixed_abs, tag = 'smem constant byte address 0x4 - core index']
  #allocation1 [shape = 'u32[72,128]{1,0:T(1,128)}', space=vmem, size = 0x9000, scoped, tag = 'internal scratch']
  %s0 = inlined_call_operand.hbm [shape: bf16[4096,128], index: 0, kind: input, shape index: {}]
  %s1 = inlined_call_operand.hbm [shape: bf16[128,128], index: 1, kind: input, shape index: {}]
  %s2 = inlined_call_operand.vmem [shape: f32[1,128], index: 2, kind: input, shape index: {}]
  %s3 = inlined_call_operand.hbm [shape: f32[16,4096], index: 3, kind: input, shape index: {}]
  %s4 = inlined_call_operand.vmem [shape: f32[128,128], index: 4, kind: input, shape index: {}]
  %s5 = inlined_call_operand.hbm [shape: f32[1,128], index: 5, kind: input, shape index: {}]
  %s6 = inlined_call_operand.hbm [shape: f32[128,128], index: 6, kind: input, shape index: {}]
  %s7 = inlined_call_operand.vmem [shape: f32[1,128], index: 7, kind: input, shape index: {}]
  %s8 = inlined_call_operand.vmem [shape: f32[2,16], index: 8, kind: input, shape index: {}]
  %s9 = inlined_call_operand.vmem [shape: f32[128,2], index: 9, kind: input, shape index: {}]
  %s10 = inlined_call_operand.vmem [shape: f32[1,2], index: 10, kind: input, shape index: {}]
  %s11 = inlined_call_operand.hbm [shape: f32[2,2], index: 11, kind: output, shape index: {}]
  %s12 = sld [smem:[#allocation0]]
  $region74: #{tpu_custom_call.1} parent=0
    _
  %s14 = ssub.s32 1, %s12
  %s15 = scalar_select 0, %s14, %s12
  $region1: #{tpu_custom_call.1} parent=0
    #allocation2 [shape = 'u8[1048576]{0}', space=vmem, size = 0x100000, scoped, tag = 'input window, operand 0, single buffered']
    #allocation3 [shape = 's32[1]{0}', space=sflag, size = 0x4, scoped, tag = 'scoped memory for tpu_custom_call.1']
    #allocation4 [shape = 's32[1]{0}', space=sflag, size = 0x4, scoped, tag = 'scoped memory for tpu_custom_call.1']
    #allocation5 [shape = 'u8[32768]{0}', space=vmem, size = 0x8000, scoped, tag = 'input window, operand 1, single buffered']
    #allocation6 [shape = 's32[1]{0}', space=sflag, size = 0x4, scoped, tag = 'scoped memory for tpu_custom_call.1']
    #allocation7 [shape = 'u8[262144]{0}', space=vmem, size = 0x40000, scoped, tag = 'input window, operand 3, single buffered']
    #allocation8 [shape = 'u8[512]{0}', space=vmem, size = 0x400, scoped, tag = 'input window, operand 5, single buffered']
    #allocation9 [shape = 's32[1]{0}', space=sflag, size = 0x4, scoped, tag = 'scoped memory for tpu_custom_call.1']
    #allocation10 [shape = 'u8[65536]{0}', space=vmem, size = 0x10000, scoped, tag = 'input window, operand 6, single buffered']
    #allocation11 [shape = 'u8[1024]{0}', space=vmem, size = 0x400, scoped, tag = 'output window, operand 0, single buffered']
    %16 = vsyncpa [#allocation3], 0
    %17 = vsyncpa [#allocation6], 0
    %18 = vsyncpa [#allocation9], 0
    %19 = vsyncpa [#allocation4], 0
    // Predicated region
    $region2: #{tpu_custom_call.1} parent=1 // pred_check
      _
    $region3: #{tpu_custom_call.1} parent=1 // pred_check_branch
      %21 = sbr.rel (0) target = $region5
    $region4: #{tpu_custom_call.1} parent=1 // pred_region
      %23 = vsyncadd [#allocation3], 0
      %s24 = sshll.u32 %s0, 4
      %s25 = int_to_ptr.hbm [resolvable:$true] %s24
      %s26 = sshll.u32 [#allocation2], 4
      %s27 = int_to_ptr.vmem [resolvable:$true] %s26
      %32 = dma.hbm_to_vmem [thread:$0]  %s25, 32768, %s27, [#allocation3], 64, 64, 4
    $region5: #{tpu_custom_call.1} parent=1 // pred_fallthru
      _
    // Predicated region
    $region6: #{tpu_custom_call.1} parent=1 // pred_check
      _
    $region7: #{tpu_custom_call.1} parent=1 // pred_check_branch
      %34 = sbr.rel (0) target = $region9
    $region8: #{tpu_custom_call.1} parent=1 // pred_region
      %36 = vsyncadd [#allocation6], 0
      %s37 = sshll.u32 %s1, 4
      %s38 = int_to_ptr.hbm [resolvable:$true] %s37
      %s39 = sshll.u32 [#allocation5], 4
      %s40 = int_to_ptr.vmem [resolvable:$true] %s39
      %45 = dma.hbm_to_vmem [thread:$0]  %s38, 1024, %s40, [#allocation6], 64, 64, 4
    $region9: #{tpu_custom_call.1} parent=1 // pred_fallthru
      _
    // Predicated region
    $region10: #{tpu_custom_call.1} parent=1 // pred_check
      _
    $region11: #{tpu_custom_call.1} parent=1 // pred_check_branch
      %47 = sbr.rel (0) target = $region13
    $region12: #{tpu_custom_call.1} parent=1 // pred_region
      _
    $region13: #{tpu_custom_call.1} parent=1 // pred_fallthru
      _
    // Predicated region
    $region14: #{tpu_custom_call.1} parent=1 // pred_check
      _
    $region15: #{tpu_custom_call.1} parent=1 // pred_check_branch
      %49 = sbr.rel (0) target = $region17
    $region16: #{tpu_custom_call.1} parent=1 // pred_region
      %51 = vsyncadd [#allocation6], 0
      %s52 = sshll.u32 %s3, 4
      %s53 = int_to_ptr.hbm [resolvable:$true] %s52
      %s54 = sshll.u32 [#allocation7], 4
      %s55 = int_to_ptr.vmem [resolvable:$true] %s54
      %60 = dma.hbm_to_vmem [thread:$0]  %s53, 8192, %s55, [#allocation6], 4096, 4096, 256
    $region17: #{tpu_custom_call.1} parent=1 // pred_fallthru
      _
    // Predicated region
    $region18: #{tpu_custom_call.1} parent=1 // pred_check
      _
    $region19: #{tpu_custom_call.1} parent=1 // pred_check_branch
      %62 = sbr.rel (0) target = $region21
    $region20: #{tpu_custom_call.1} parent=1 // pred_region
      _
    $region21: #{tpu_custom_call.1} parent=1 // pred_fallthru
      _
    // Predicated region
    $region22: #{tpu_custom_call.1} parent=1 // pred_check
      _
    $region23: #{tpu_custom_call.1} parent=1 // pred_check_branch
      %64 = sbr.rel (0) target = $region25
    $region24: #{tpu_custom_call.1} parent=1 // pred_region
      %66 = vsyncadd [#allocation9], 0
      %s68 = sshll.u32 %s5, 4
      %s69 = int_to_ptr.hbm [resolvable:$true] %s68
      %s70 = sshll.u32 [#allocation8], 4
      %s71 = int_to_ptr.vmem [resolvable:$true] %s70
      %73 = dma.hbm_to_vmem [thread:$0]  %s69, 16, %s71, [#allocation9]
    $region25: #{tpu_custom_call.1} parent=1 // pred_fallthru
      _
    // Predicated region
    $region26: #{tpu_custom_call.1} parent=1 // pred_check
      _
    $region27: #{tpu_custom_call.1} parent=1 // pred_check_branch
      %75 = sbr.rel (0) target = $region29
    $region28: #{tpu_custom_call.1} parent=1 // pred_region
      %77 = vsyncadd [#allocation9], 0
      %s78 = sshll.u32 %s6, 4
      %s79 = int_to_ptr.hbm [resolvable:$true] %s78
      %s80 = sshll.u32 [#allocation10], 4
      %s81 = int_to_ptr.vmem [resolvable:$true] %s80
      %86 = dma.hbm_to_vmem [thread:$0]  %s79, 2048, %s81, [#allocation9], 128, 128, 8
    $region29: #{tpu_custom_call.1} parent=1 // pred_fallthru
      _
    // Predicated region
    $region30: #{tpu_custom_call.1} parent=1 // pred_check
      _
    $region31: #{tpu_custom_call.1} parent=1 // pred_check_branch
      %88 = sbr.rel (0) target = $region33
    $region32: #{tpu_custom_call.1} parent=1 // pred_region
      _
    $region33: #{tpu_custom_call.1} parent=1 // pred_fallthru
      _
    // Predicated region
    $region34: #{tpu_custom_call.1} parent=1 // pred_check
      _
    $region35: #{tpu_custom_call.1} parent=1 // pred_check_branch
      %90 = sbr.rel (0) target = $region37
    $region36: #{tpu_custom_call.1} parent=1 // pred_region
      _
    $region37: #{tpu_custom_call.1} parent=1 // pred_fallthru
      _
    // Predicated region
    $region38: #{tpu_custom_call.1} parent=1 // pred_check
      _
    $region39: #{tpu_custom_call.1} parent=1 // pred_check_branch
      %92 = sbr.rel (0) target = $region41
    $region40: #{tpu_custom_call.1} parent=1 // pred_region
      _
    $region41: #{tpu_custom_call.1} parent=1 // pred_fallthru
      _
    // Predicated region
    $region42: #{tpu_custom_call.1} parent=1 // pred_check
      _
    $region43: #{tpu_custom_call.1} parent=1 // pred_check_branch
      %94 = sbr.rel (0) target = $region45
    $region44: #{tpu_custom_call.1} parent=1 // pred_region
      _
    $region45: #{tpu_custom_call.1} parent=1 // pred_fallthru
      _
    // Predicated region
    $region46: #{tpu_custom_call.1} parent=1 // pred_check
      _
    $region47: #{tpu_custom_call.1} parent=1 // pred_check_branch
      %96 = sbr.rel (0) target = $region49
    $region48: #{tpu_custom_call.1} parent=1 // pred_region
      %98 = dma.done [#allocation3], 32768
    $region49: #{tpu_custom_call.1} parent=1 // pred_fallthru
      _
    // Predicated region
    $region50: #{tpu_custom_call.1} parent=1 // pred_check
      _
    $region51: #{tpu_custom_call.1} parent=1 // pred_check_branch
      %100 = sbr.rel (0) target = $region53
    $region52: #{tpu_custom_call.1} parent=1 // pred_region
      %102 = dma.done [#allocation6], 1024
    $region53: #{tpu_custom_call.1} parent=1 // pred_fallthru
      _
    // Predicated region
    $region54: #{tpu_custom_call.1} parent=1 // pred_check
      _
    $region55: #{tpu_custom_call.1} parent=1 // pred_check_branch
      %104 = sbr.rel (0) target = $region57
    $region56: #{tpu_custom_call.1} parent=1 // pred_region
      %106 = dma.done [#allocation6], 8192
    $region57: #{tpu_custom_call.1} parent=1 // pred_fallthru
      _
    // Predicated region
    $region58: #{tpu_custom_call.1} parent=1 // pred_check
      _
    $region59: #{tpu_custom_call.1} parent=1 // pred_check_branch
      %108 = sbr.rel (0) target = $region61
    $region60: #{tpu_custom_call.1} parent=1 // pred_region
      %110 = dma.done [#allocation9], 16
    $region61: #{tpu_custom_call.1} parent=1 // pred_fallthru
      _
    // Predicated region
    $region62: #{tpu_custom_call.1} parent=1 // pred_check
      _
    $region63: #{tpu_custom_call.1} parent=1 // pred_check_branch
      %112 = sbr.rel (0) target = $region65
    $region64: #{tpu_custom_call.1} parent=1 // pred_region
      %114 = dma.done [#allocation9], 2048
    $region65: #{tpu_custom_call.1} parent=1 // pred_fallthru
      _
    %v115 = vld [vmem:[#allocation2] sm:$0xf]
    %v116 = vld [vmem:[#allocation2 + $0x4] sm:$0xf]
    %v117 = vld [vmem:[#allocation2 + $0x8] sm:$0xf]
    %v118 = vld [vmem:[#allocation2 + $0xc] sm:$0xf]
    %v119 = vld [vmem:[#allocation2 + $0x10] sm:$0xf]
    %v120 = vld [vmem:[#allocation2 + $0x14] sm:$0xf]
    %v121 = vld [vmem:[#allocation2 + $0x18] sm:$0xf]
    %v122 = vld [vmem:[#allocation2 + $0x1c] sm:$0xf]
    %v123 = vld [vmem:[#allocation2 + $0x20] sm:$0xf]
    %v124 = vld [vmem:[#allocation2 + $0x24] sm:$0xf]
    %v125 = vld [vmem:[#allocation2 + $0x28] sm:$0xf]
    %v126 = vld [vmem:[#allocation2 + $0x2c] sm:$0xf]
    %v127 = vld [vmem:[#allocation2 + $0x30] sm:$0xf]
    %v128 = vld [vmem:[#allocation2 + $0x34] sm:$0xf]
    %v129 = vld [vmem:[#allocation2 + $0x38] sm:$0xf]
    %v130 = vld [vmem:[#allocation2 + $0x3c] sm:$0xf]
    %v131 = vld [vmem:[#allocation2 + $0x40] sm:$0xf]
    %v132 = vld [vmem:[#allocation2 + $0x44] sm:$0xf]
    %v133 = vld [vmem:[#allocation2 + $0x48] sm:$0xf]
    %v134 = vld [vmem:[#allocation2 + $0x4c] sm:$0xf]
    %v135 = vld [vmem:[#allocation2 + $0x50] sm:$0xf]
    %v136 = vld [vmem:[#allocation2 + $0x54] sm:$0xf]
    %v137 = vld [vmem:[#allocation2 + $0x58] sm:$0xf]
    %v138 = vld [vmem:[#allocation2 + $0x5c] sm:$0xf]
    %v139 = vld [vmem:[#allocation2 + $0x60] sm:$0xf]
    %v140 = vld [vmem:[#allocation2 + $0x64] sm:$0xf]
    %v141 = vld [vmem:[#allocation2 + $0x68] sm:$0xf]
    %v142 = vld [vmem:[#allocation2 + $0x6c] sm:$0xf]
    %v143 = vld [vmem:[#allocation2 + $0x70] sm:$0xf]
    %v144 = vld [vmem:[#allocation2 + $0x74] sm:$0xf]
    %v145 = vld [vmem:[#allocation2 + $0x78] sm:$0xf]
    %v146 = vld [vmem:[#allocation2 + $0x7c] sm:$0xf]
    %v147 = vld [vmem:[#allocation2 + $0x80] sm:$0xf]
    %v148 = vld [vmem:[#allocation2 + $0x84] sm:$0xf]
    %v149 = vld [vmem:[#allocation2 + $0x88] sm:$0xf]
    %v150 = vld [vmem:[#allocation2 + $0x8c] sm:$0xf]
    %v151 = vld [vmem:[#allocation2 + $0x90] sm:$0xf]
    %v152 = vld [vmem:[#allocation2 + $0x94] sm:$0xf]
    %v153 = vld [vmem:[#allocation2 + $0x98] sm:$0xf]
    %v154 = vld [vmem:[#allocation2 + $0x9c] sm:$0xf]
    %v155 = vld [vmem:[#allocation2 + $0xa0] sm:$0xf]
    %v156 = vld [vmem:[#allocation2 + $0xa4] sm:$0xf]
    %v157 = vld [vmem:[#allocation2 + $0xa8] sm:$0xf]
    %v158 = vld [vmem:[#allocation2 + $0xac] sm:$0xf]
    %v159 = vld [vmem:[#allocation2 + $0xb0] sm:$0xf]
    %v160 = vld [vmem:[#allocation2 + $0xb4] sm:$0xf]
    %v161 = vld [vmem:[#allocation2 + $0xb8] sm:$0xf]
    %v162 = vld [vmem:[#allocation2 + $0xbc] sm:$0xf]
    %v163 = vld [vmem:[#allocation2 + $0xc0] sm:$0xf]
    %v164 = vld [vmem:[#allocation2 + $0xc4] sm:$0xf]
    %v165 = vld [vmem:[#allocation2 + $0xc8] sm:$0xf]
    %v166 = vld [vmem:[#allocation2 + $0xcc] sm:$0xf]
    %v167 = vld [vmem:[#allocation2 + $0xd0] sm:$0xf]
    %v168 = vld [vmem:[#allocation2 + $0xd4] sm:$0xf]
    %v169 = vld [vmem:[#allocation2 + $0xd8] sm:$0xf]
    %v170 = vld [vmem:[#allocation2 + $0xdc] sm:$0xf]
    %v171 = vld [vmem:[#allocation2 + $0xe0] sm:$0xf]
    %v172 = vld [vmem:[#allocation2 + $0xe4] sm:$0xf]
    %v173 = vld [vmem:[#allocation2 + $0xe8] sm:$0xf]
    %v174 = vld [vmem:[#allocation2 + $0xec] sm:$0xf]
    %v175 = vld [vmem:[#allocation2 + $0xf0] sm:$0xf]
    %v176 = vld [vmem:[#allocation2 + $0xf4] sm:$0xf]
    %v177 = vld [vmem:[#allocation2 + $0xf8] sm:$0xf]
    %v178 = vld [vmem:[#allocation2 + $0xfc] sm:$0xf]
    %v179 = vld [vmem:[#allocation2 + $0x100] sm:$0xf]
    %v180 = vld [vmem:[#allocation2 + $0x104] sm:$0xf]
    %v181 = vld [vmem:[#allocation2 + $0x108] sm:$0xf]
    %v182 = vld [vmem:[#allocation2 + $0x10c] sm:$0xf]
    %v183 = vld [vmem:[#allocation2 + $0x110] sm:$0xf]
    %v184 = vld [vmem:[#allocation2 + $0x114] sm:$0xf]
    %v185 = vld [vmem:[#allocation2 + $0x118] sm:$0xf]
    %v186 = vld [vmem:[#allocation2 + $0x11c] sm:$0xf]
    %v187 = vld [vmem:[#allocation2 + $0x120] sm:$0xf]
    %v188 = vld [vmem:[#allocation2 + $0x124] sm:$0xf]
    %v189 = vld [vmem:[#allocation2 + $0x128] sm:$0xf]
    %v190 = vld [vmem:[#allocation2 + $0x12c] sm:$0xf]
    %v191 = vld [vmem:[#allocation2 + $0x130] sm:$0xf]
    %v192 = vld [vmem:[#allocation2 + $0x134] sm:$0xf]
    %v193 = vld [vmem:[#allocation2 + $0x138] sm:$0xf]
    %v194 = vld [vmem:[#allocation2 + $0x13c] sm:$0xf]
    %v195 = vld [vmem:[#allocation2 + $0x140] sm:$0xf]
    %v196 = vld [vmem:[#allocation2 + $0x144] sm:$0xf]
    %v197 = vld [vmem:[#allocation2 + $0x148] sm:$0xf]
    %v198 = vld [vmem:[#allocation2 + $0x14c] sm:$0xf]
    %v199 = vld [vmem:[#allocation2 + $0x150] sm:$0xf]
    %v200 = vld [vmem:[#allocation2 + $0x154] sm:$0xf]
    %v201 = vld [vmem:[#allocation2 + $0x158] sm:$0xf]
    %v202 = vld [vmem:[#allocation2 + $0x15c] sm:$0xf]
    %v203 = vld [vmem:[#allocation2 + $0x160] sm:$0xf]
    %v204 = vld [vmem:[#allocation2 + $0x164] sm:$0xf]
    %v205 = vld [vmem:[#allocation2 + $0x168] sm:$0xf]
    %v206 = vld [vmem:[#allocation2 + $0x16c] sm:$0xf]
    %v207 = vld [vmem:[#allocation2 + $0x170] sm:$0xf]
    %v208 = vld [vmem:[#allocation2 + $0x174] sm:$0xf]
    %v209 = vld [vmem:[#allocation2 + $0x178] sm:$0xf]
    %v210 = vld [vmem:[#allocation2 + $0x17c] sm:$0xf]
    %v211 = vld [vmem:[#allocation2 + $0x180] sm:$0xf]
    %v212 = vld [vmem:[#allocation2 + $0x184] sm:$0xf]
    %v213 = vld [vmem:[#allocation2 + $0x188] sm:$0xf]
    %v214 = vld [vmem:[#allocation2 + $0x18c] sm:$0xf]
    %v215 = vld [vmem:[#allocation2 + $0x190] sm:$0xf]
    %v216 = vld [vmem:[#allocation2 + $0x194] sm:$0xf]
    %v217 = vld [vmem:[#allocation2 + $0x198] sm:$0xf]
    %v218 = vld [vmem:[#allocation2 + $0x19c] sm:$0xf]
    %v219 = vld [vmem:[#allocation2 + $0x1a0] sm:$0xf]
    %v220 = vld [vmem:[#allocation2 + $0x1a4] sm:$0xf]
    %v221 = vld [vmem:[#allocation2 + $0x1a8] sm:$0xf]
    %v222 = vld [vmem:[#allocation2 + $0x1ac] sm:$0xf]
    %v223 = vld [vmem:[#allocation2 + $0x1b0] sm:$0xf]
    %v224 = vld [vmem:[#allocation2 + $0x1b4] sm:$0xf]
    %v225 = vld [vmem:[#allocation2 + $0x1b8] sm:$0xf]
    %v226 = vld [vmem:[#allocation2 + $0x1bc] sm:$0xf]
    %v227 = vld [vmem:[#allocation2 + $0x1c0] sm:$0xf]
    %v228 = vld [vmem:[#allocation2 + $0x1c4] sm:$0xf]
    %v229 = vld [vmem:[#allocation2 + $0x1c8] sm:$0xf]
    %v230 = vld [vmem:[#allocation2 + $0x1cc] sm:$0xf]
    %v231 = vld [vmem:[#allocation2 + $0x1d0] sm:$0xf]
    %v232 = vld [vmem:[#allocation2 + $0x1d4] sm:$0xf]
    %v233 = vld [vmem:[#allocation2 + $0x1d8] sm:$0xf]
    %v234 = vld [vmem:[#allocation2 + $0x1dc] sm:$0xf]
    %v235 = vld [vmem:[#allocation2 + $0x1e0] sm:$0xf]
    %v236 = vld [vmem:[#allocation2 + $0x1e4] sm:$0xf]
    %v237 = vld [vmem:[#allocation2 + $0x1e8] sm:$0xf]
    %v238 = vld [vmem:[#allocation2 + $0x1ec] sm:$0xf]
    %v239 = vld [vmem:[#allocation2 + $0x1f0] sm:$0xf]
    %v240 = vld [vmem:[#allocation2 + $0x1f4] sm:$0xf]
    %v241 = vld [vmem:[#allocation2 + $0x1f8] sm:$0xf]
    %v242 = vld [vmem:[#allocation2 + $0x1fc] sm:$0xf]
    %v243 = vld [vmem:[#allocation2 + $0x200] sm:$0xf]
    %v244 = vld [vmem:[#allocation2 + $0x204] sm:$0xf]
    %v245 = vld [vmem:[#allocation2 + $0x208] sm:$0xf]
    %v246 = vld [vmem:[#allocation2 + $0x20c] sm:$0xf]
    %v247 = vld [vmem:[#allocation2 + $0x210] sm:$0xf]
    %v248 = vld [vmem:[#allocation2 + $0x214] sm:$0xf]
    %v249 = vld [vmem:[#allocation2 + $0x218] sm:$0xf]
    %v250 = vld [vmem:[#allocation2 + $0x21c] sm:$0xf]
    %v251 = vld [vmem:[#allocation2 + $0x220] sm:$0xf]
    %v252 = vld [vmem:[#allocation2 + $0x224] sm:$0xf]
    %v253 = vld [vmem:[#allocation2 + $0x228] sm:$0xf]
    %v254 = vld [vmem:[#allocation2 + $0x22c] sm:$0xf]
    %v255 = vld [vmem:[#allocation2 + $0x230] sm:$0xf]
    %v256 = vld [vmem:[#allocation2 + $0x234] sm:$0xf]
    %v257 = vld [vmem:[#allocation2 + $0x238] sm:$0xf]
    %v258 = vld [vmem:[#allocation2 + $0x23c] sm:$0xf]
    %v259 = vld [vmem:[#allocation2 + $0x240] sm:$0xf]
    %v260 = vld [vmem:[#allocation2 + $0x244] sm:$0xf]
    %v261 = vld [vmem:[#allocation2 + $0x248] sm:$0xf]
    %v262 = vld [vmem:[#allocation2 + $0x24c] sm:$0xf]
    %v263 = vld [vmem:[#allocation2 + $0x250] sm:$0xf]
    %v264 = vld [vmem:[#allocation2 + $0x254] sm:$0xf]
    %v265 = vld [vmem:[#allocation2 + $0x258] sm:$0xf]
    %v266 = vld [vmem:[#allocation2 + $0x25c] sm:$0xf]
    %v267 = vld [vmem:[#allocation2 + $0x260] sm:$0xf]
    %v268 = vld [vmem:[#allocation2 + $0x264] sm:$0xf]
    %v269 = vld [vmem:[#allocation2 + $0x268] sm:$0xf]
    %v270 = vld [vmem:[#allocation2 + $0x26c] sm:$0xf]
    %v271 = vld [vmem:[#allocation2 + $0x270] sm:$0xf]
    %v272 = vld [vmem:[#allocation2 + $0x274] sm:$0xf]
    %v273 = vld [vmem:[#allocation2 + $0x278] sm:$0xf]
    %v274 = vld [vmem:[#allocation2 + $0x27c] sm:$0xf]
    %v275 = vld [vmem:[#allocation2 + $0x280] sm:$0xf]
    %v276 = vld [vmem:[#allocation2 + $0x284] sm:$0xf]
    %v277 = vld [vmem:[#allocation2 + $0x288] sm:$0xf]
    %v278 = vld [vmem:[#allocation2 + $0x28c] sm:$0xf]
    %v279 = vld [vmem:[#allocation2 + $0x290] sm:$0xf]
    %v280 = vld [vmem:[#allocation2 + $0x294] sm:$0xf]
    %v281 = vld [vmem:[#allocation2 + $0x298] sm:$0xf]
    %v282 = vld [vmem:[#allocation2 + $0x29c] sm:$0xf]
    %v283 = vld [vmem:[#allocation2 + $0x2a0] sm:$0xf]
    %v284 = vld [vmem:[#allocation2 + $0x2a4] sm:$0xf]
    %v285 = vld [vmem:[#allocation2 + $0x2a8] sm:$0xf]
    %v286 = vld [vmem:[#allocation2 + $0x2ac] sm:$0xf]
    %v287 = vld [vmem:[#allocation2 + $0x2b0] sm:$0xf]
    %v288 = vld [vmem:[#allocation2 + $0x2b4] sm:$0xf]
    %v289 = vld [vmem:[#allocation2 + $0x2b8] sm:$0xf]
    %v290 = vld [vmem:[#allocation2 + $0x2bc] sm:$0xf]
    %v291 = vld [vmem:[#allocation2 + $0x2c0] sm:$0xf]
    %v292 = vld [vmem:[#allocation2 + $0x2c4] sm:$0xf]
    %v293 = vld [vmem:[#allocation2 + $0x2c8] sm:$0xf]
    %v294 = vld [vmem:[#allocation2 + $0x2cc] sm:$0xf]
    %v295 = vld [vmem:[#allocation2 + $0x2d0] sm:$0xf]
    %v296 = vld [vmem:[#allocation2 + $0x2d4] sm:$0xf]
    %v297 = vld [vmem:[#allocation2 + $0x2d8] sm:$0xf]
    %v298 = vld [vmem:[#allocation2 + $0x2dc] sm:$0xf]
    %v299 = vld [vmem:[#allocation2 + $0x2e0] sm:$0xf]
    %v300 = vld [vmem:[#allocation2 + $0x2e4] sm:$0xf]
    %v301 = vld [vmem:[#allocation2 + $0x2e8] sm:$0xf]
    %v302 = vld [vmem:[#allocation2 + $0x2ec] sm:$0xf]
    %v303 = vld [vmem:[#allocation2 + $0x2f0] sm:$0xf]
    %v304 = vld [vmem:[#allocation2 + $0x2f4] sm:$0xf]
    %v305 = vld [vmem:[#allocation2 + $0x2f8] sm:$0xf]
    %v306 = vld [vmem:[#allocation2 + $0x2fc] sm:$0xf]
    %v307 = vld [vmem:[#allocation2 + $0x300] sm:$0xf]
    %v308 = vld [vmem:[#allocation2 + $0x304] sm:$0xf]
    %v309 = vld [vmem:[#allocation2 + $0x308] sm:$0xf]
    %v310 = vld [vmem:[#allocation2 + $0x30c] sm:$0xf]
    %v311 = vld [vmem:[#allocation2 + $0x310] sm:$0xf]
    %v312 = vld [vmem:[#allocation2 + $0x314] sm:$0xf]
    %v313 = vld [vmem:[#allocation2 + $0x318] sm:$0xf]
    %v314 = vld [vmem:[#allocation2 + $0x31c] sm:$0xf]
    %v315 = vld [vmem:[#allocation2 + $0x320] sm:$0xf]
    %v316 = vld [vmem:[#allocation2 + $0x324] sm:$0xf]
    %v317 = vld [vmem:[#allocation2 + $0x328] sm:$0xf]
    %v318 = vld [vmem:[#allocation2 + $0x32c] sm:$0xf]
    %v319 = vld [vmem:[#allocation2 + $0x330] sm:$0xf]
    %v320 = vld [vmem:[#allocation2 + $0x334] sm:$0xf]
    %v321 = vld [vmem:[#allocation2 + $0x338] sm:$0xf]
    %v322 = vld [vmem:[#allocation2 + $0x33c] sm:$0xf]
    %v323 = vld [vmem:[#allocation2 + $0x340] sm:$0xf]
    %v324 = vld [vmem:[#allocation2 + $0x344] sm:$0xf]
    %v325 = vld [vmem:[#allocation2 + $0x348] sm:$0xf]
    %v326 = vld [vmem:[#allocation2 + $0x34c] sm:$0xf]
    %v327 = vld [vmem:[#allocation2 + $0x350] sm:$0xf]
    %v328 = vld [vmem:[#allocation2 + $0x354] sm:$0xf]
    %v329 = vld [vmem:[#allocation2 + $0x358] sm:$0xf]
    %v330 = vld [vmem:[#allocation2 + $0x35c] sm:$0xf]
    %v331 = vld [vmem:[#allocation2 + $0x360] sm:$0xf]
    %v332 = vld [vmem:[#allocation2 + $0x364] sm:$0xf]
    %v333 = vld [vmem:[#allocation2 + $0x368] sm:$0xf]
    %v334 = vld [vmem:[#allocation2 + $0x36c] sm:$0xf]
    %v335 = vld [vmem:[#allocation2 + $0x370] sm:$0xf]
    %v336 = vld [vmem:[#allocation2 + $0x374] sm:$0xf]
    %v337 = vld [vmem:[#allocation2 + $0x378] sm:$0xf]
    %v338 = vld [vmem:[#allocation2 + $0x37c] sm:$0xf]
    %v339 = vld [vmem:[#allocation2 + $0x380] sm:$0xf]
    %v340 = vld [vmem:[#allocation2 + $0x384] sm:$0xf]
    %v341 = vld [vmem:[#allocation2 + $0x388] sm:$0xf]
    %v342 = vld [vmem:[#allocation2 + $0x38c] sm:$0xf]
    %v343 = vld [vmem:[#allocation2 + $0x390] sm:$0xf]
    %v344 = vld [vmem:[#allocation2 + $0x394] sm:$0xf]
    %v345 = vld [vmem:[#allocation2 + $0x398] sm:$0xf]
    %v346 = vld [vmem:[#allocation2 + $0x39c] sm:$0xf]
    %v347 = vld [vmem:[#allocation2 + $0x3a0] sm:$0xf]
    %v348 = vld [vmem:[#allocation2 + $0x3a4] sm:$0xf]
    %v349 = vld [vmem:[#allocation2 + $0x3a8] sm:$0xf]
    %v350 = vld [vmem:[#allocation2 + $0x3ac] sm:$0xf]
    %v351 = vld [vmem:[#allocation2 + $0x3b0] sm:$0xf]
    %v352 = vld [vmem:[#allocation2 + $0x3b4] sm:$0xf]
    %v353 = vld [vmem:[#allocation2 + $0x3b8] sm:$0xf]
    %v354 = vld [vmem:[#allocation2 + $0x3bc] sm:$0xf]
    %v355 = vld [vmem:[#allocation2 + $0x3c0] sm:$0xf]
    %v356 = vld [vmem:[#allocation2 + $0x3c4] sm:$0xf]
    %v357 = vld [vmem:[#allocation2 + $0x3c8] sm:$0xf]
    %v358 = vld [vmem:[#allocation2 + $0x3cc] sm:$0xf]
    %v359 = vld [vmem:[#allocation2 + $0x3d0] sm:$0xf]
    %v360 = vld [vmem:[#allocation2 + $0x3d4] sm:$0xf]
    %v361 = vld [vmem:[#allocation2 + $0x3d8] sm:$0xf]
    %v362 = vld [vmem:[#allocation2 + $0x3dc] sm:$0xf]
    %v363 = vld [vmem:[#allocation2 + $0x3e0] sm:$0xf]
    %v364 = vld [vmem:[#allocation2 + $0x3e4] sm:$0xf]
    %v365 = vld [vmem:[#allocation2 + $0x3e8] sm:$0xf]
    %v366 = vld [vmem:[#allocation2 + $0x3ec] sm:$0xf]
    %v367 = vld [vmem:[#allocation2 + $0x3f0] sm:$0xf]
    %v368 = vld [vmem:[#allocation2 + $0x3f4] sm:$0xf]
    %v369 = vld [vmem:[#allocation2 + $0x3f8] sm:$0xf]
    %v370 = vld [vmem:[#allocation2 + $0x3fc] sm:$0xf]
    %v371 = vld [vmem:[#allocation2 + $0x400] sm:$0xf]
    %v372 = vld [vmem:[#allocation2 + $0x404] sm:$0xf]
    %v373 = vld [vmem:[#allocation2 + $0x408] sm:$0xf]
    %v374 = vld [vmem:[#allocation2 + $0x40c] sm:$0xf]
    %v375 = vld [vmem:[#allocation2 + $0x410] sm:$0xf]
    %v376 = vld [vmem:[#allocation2 + $0x414] sm:$0xf]
    %v377 = vld [vmem:[#allocation2 + $0x418] sm:$0xf]
    %v378 = vld [vmem:[#allocation2 + $0x41c] sm:$0xf]
    %v379 = vld [vmem:[#allocation2 + $0x420] sm:$0xf]
    %v380 = vld [vmem:[#allocation2 + $0x424] sm:$0xf]
    %v381 = vld [vmem:[#allocation2 + $0x428] sm:$0xf]
    %v382 = vld [vmem:[#allocation2 + $0x42c] sm:$0xf]
    %v383 = vld [vmem:[#allocation2 + $0x430] sm:$0xf]
    %v384 = vld [vmem:[#allocation2 + $0x434] sm:$0xf]
    %v385 = vld [vmem:[#allocation2 + $0x438] sm:$0xf]
    %v386 = vld [vmem:[#allocation2 + $0x43c] sm:$0xf]
    %v387 = vld [vmem:[#allocation2 + $0x440] sm:$0xf]
    %v388 = vld [vmem:[#allocation2 + $0x444] sm:$0xf]
    %v389 = vld [vmem:[#allocation2 + $0x448] sm:$0xf]
    %v390 = vld [vmem:[#allocation2 + $0x44c] sm:$0xf]
    %v391 = vld [vmem:[#allocation2 + $0x450] sm:$0xf]
    %v392 = vld [vmem:[#allocation2 + $0x454] sm:$0xf]
    %v393 = vld [vmem:[#allocation2 + $0x458] sm:$0xf]
    %v394 = vld [vmem:[#allocation2 + $0x45c] sm:$0xf]
    %v395 = vld [vmem:[#allocation2 + $0x460] sm:$0xf]
    %v396 = vld [vmem:[#allocation2 + $0x464] sm:$0xf]
    %v397 = vld [vmem:[#allocation2 + $0x468] sm:$0xf]
    %v398 = vld [vmem:[#allocation2 + $0x46c] sm:$0xf]
    %v399 = vld [vmem:[#allocation2 + $0x470] sm:$0xf]
    %v400 = vld [vmem:[#allocation2 + $0x474] sm:$0xf]
    %v401 = vld [vmem:[#allocation2 + $0x478] sm:$0xf]
    %v402 = vld [vmem:[#allocation2 + $0x47c] sm:$0xf]
    %v403 = vld [vmem:[#allocation2 + $0x480] sm:$0xf]
    %v404 = vld [vmem:[#allocation2 + $0x484] sm:$0xf]
    %v405 = vld [vmem:[#allocation2 + $0x488] sm:$0xf]
    %v406 = vld [vmem:[#allocation2 + $0x48c] sm:$0xf]
    %v407 = vld [vmem:[#allocation2 + $0x490] sm:$0xf]
    %v408 = vld [vmem:[#allocation2 + $0x494] sm:$0xf]
    %v409 = vld [vmem:[#allocation2 + $0x498] sm:$0xf]
    %v410 = vld [vmem:[#allocation2 + $0x49c] sm:$0xf]
    %v411 = vld [vmem:[#allocation2 + $0x4a0] sm:$0xf]
    %v412 = vld [vmem:[#allocation2 + $0x4a4] sm:$0xf]
    %v413 = vld [vmem:[#allocation2 + $0x4a8] sm:$0xf]
    %v414 = vld [vmem:[#allocation2 + $0x4ac] sm:$0xf]
    %v415 = vld [vmem:[#allocation2 + $0x4b0] sm:$0xf]
    %v416 = vld [vmem:[#allocation2 + $0x4b4] sm:$0xf]
    %v417 = vld [vmem:[#allocation2 + $0x4b8] sm:$0xf]
    %v418 = vld [vmem:[#allocation2 + $0x4bc] sm:$0xf]
    %v419 = vld [vmem:[#allocation2 + $0x4c0] sm:$0xf]
    %v420 = vld [vmem:[#allocation2 + $0x4c4] sm:$0xf]
    %v421 = vld [vmem:[#allocation2 + $0x4c8] sm:$0xf]
    %v422 = vld [vmem:[#allocation2 + $0x4cc] sm:$0xf]
    %v423 = vld [vmem:[#allocation2 + $0x4d0] sm:$0xf]
    %v424 = vld [vmem:[#allocation2 + $0x4d4] sm:$0xf]
    %v425 = vld [vmem:[#allocation2 + $0x4d8] sm:$0xf]
    %v426 = vld [vmem:[#allocation2 + $0x4dc] sm:$0xf]
    %v427 = vld [vmem:[#allocation2 + $0x4e0] sm:$0xf]
    %v428 = vld [vmem:[#allocation2 + $0x4e4] sm:$0xf]
    %v429 = vld [vmem:[#allocation2 + $0x4e8] sm:$0xf]
    %v430 = vld [vmem:[#allocation2 + $0x4ec] sm:$0xf]
    %v431 = vld [vmem:[#allocation2 + $0x4f0] sm:$0xf]
    %v432 = vld [vmem:[#allocation2 + $0x4f4] sm:$0xf]
    %v433 = vld [vmem:[#allocation2 + $0x4f8] sm:$0xf]
    %v434 = vld [vmem:[#allocation2 + $0x4fc] sm:$0xf]
    %v435 = vld [vmem:[#allocation2 + $0x500] sm:$0xf]
    %v436 = vld [vmem:[#allocation2 + $0x504] sm:$0xf]
    %v437 = vld [vmem:[#allocation2 + $0x508] sm:$0xf]
    %v438 = vld [vmem:[#allocation2 + $0x50c] sm:$0xf]
    %v439 = vld [vmem:[#allocation2 + $0x510] sm:$0xf]
    %v440 = vld [vmem:[#allocation2 + $0x514] sm:$0xf]
    %v441 = vld [vmem:[#allocation2 + $0x518] sm:$0xf]
    %v442 = vld [vmem:[#allocation2 + $0x51c] sm:$0xf]
    %v443 = vld [vmem:[#allocation2 + $0x520] sm:$0xf]
    %v444 = vld [vmem:[#allocation2 + $0x524] sm:$0xf]
    %v445 = vld [vmem:[#allocation2 + $0x528] sm:$0xf]
    %v446 = vld [vmem:[#allocation2 + $0x52c] sm:$0xf]
    %v447 = vld [vmem:[#allocation2 + $0x530] sm:$0xf]
    %v448 = vld [vmem:[#allocation2 + $0x534] sm:$0xf]
    %v449 = vld [vmem:[#allocation2 + $0x538] sm:$0xf]
    %v450 = vld [vmem:[#allocation2 + $0x53c] sm:$0xf]
    %v451 = vld [vmem:[#allocation2 + $0x540] sm:$0xf]
    %v452 = vld [vmem:[#allocation2 + $0x544] sm:$0xf]
    %v453 = vld [vmem:[#allocation2 + $0x548] sm:$0xf]
    %v454 = vld [vmem:[#allocation2 + $0x54c] sm:$0xf]
    %v455 = vld [vmem:[#allocation2 + $0x550] sm:$0xf]
    %v456 = vld [vmem:[#allocation2 + $0x554] sm:$0xf]
    %v457 = vld [vmem:[#allocation2 + $0x558] sm:$0xf]
    %v458 = vld [vmem:[#allocation2 + $0x55c] sm:$0xf]
    %v459 = vld [vmem:[#allocation2 + $0x560] sm:$0xf]
    %v460 = vld [vmem:[#allocation2 + $0x564] sm:$0xf]
    %v461 = vld [vmem:[#allocation2 + $0x568] sm:$0xf]
    %v462 = vld [vmem:[#allocation2 + $0x56c] sm:$0xf]
    %v463 = vld [vmem:[#allocation2 + $0x570] sm:$0xf]
    %v464 = vld [vmem:[#allocation2 + $0x574] sm:$0xf]
    %v465 = vld [vmem:[#allocation2 + $0x578] sm:$0xf]
    %v466 = vld [vmem:[#allocation2 + $0x57c] sm:$0xf]
    %v467 = vld [vmem:[#allocation2 + $0x580] sm:$0xf]
    %v468 = vld [vmem:[#allocation2 + $0x584] sm:$0xf]
    %v469 = vld [vmem:[#allocation2 + $0x588] sm:$0xf]
    %v470 = vld [vmem:[#allocation2 + $0x58c] sm:$0xf]
    %v471 = vld [vmem:[#allocation2 + $0x590] sm:$0xf]
    %v472 = vld [vmem:[#allocation2 + $0x594] sm:$0xf]
    %v473 = vld [vmem:[#allocation2 + $0x598] sm:$0xf]
    %v474 = vld [vmem:[#allocation2 + $0x59c] sm:$0xf]
    %v475 = vld [vmem:[#allocation2 + $0x5a0] sm:$0xf]
    %v476 = vld [vmem:[#allocation2 + $0x5a4] sm:$0xf]
    %v477 = vld [vmem:[#allocation2 + $0x5a8] sm:$0xf]
    %v478 = vld [vmem:[#allocation2 + $0x5ac] sm:$0xf]
    %v479 = vld [vmem:[#allocation2 + $0x5b0] sm:$0xf]
    %v480 = vld [vmem:[#allocation2 + $0x5b4] sm:$0xf]
    %v481 = vld [vmem:[#allocation2 + $0x5b8] sm:$0xf]
    %v482 = vld [vmem:[#allocation2 + $0x5bc] sm:$0xf]
    %v483 = vld [vmem:[#allocation2 + $0x5c0] sm:$0xf]
    %v484 = vld [vmem:[#allocation2 + $0x5c4] sm:$0xf]
    %v485 = vld [vmem:[#allocation2 + $0x5c8] sm:$0xf]
    %v486 = vld [vmem:[#allocation2 + $0x5cc] sm:$0xf]
    %v487 = vld [vmem:[#allocation2 + $0x5d0] sm:$0xf]
    %v488 = vld [vmem:[#allocation2 + $0x5d4] sm:$0xf]
    %v489 = vld [vmem:[#allocation2 + $0x5d8] sm:$0xf]
    %v490 = vld [vmem:[#allocation2 + $0x5dc] sm:$0xf]
    %v491 = vld [vmem:[#allocation2 + $0x5e0] sm:$0xf]
    %v492 = vld [vmem:[#allocation2 + $0x5e4] sm:$0xf]
    %v493 = vld [vmem:[#allocation2 + $0x5e8] sm:$0xf]
    %v494 = vld [vmem:[#allocation2 + $0x5ec] sm:$0xf]
    %v495 = vld [vmem:[#allocation2 + $0x5f0] sm:$0xf]
    %v496 = vld [vmem:[#allocation2 + $0x5f4] sm:$0xf]
    %v497 = vld [vmem:[#allocation2 + $0x5f8] sm:$0xf]
    %v498 = vld [vmem:[#allocation2 + $0x5fc] sm:$0xf]
    %v499 = vld [vmem:[#allocation2 + $0x600] sm:$0xf]
    %v500 = vld [vmem:[#allocation2 + $0x604] sm:$0xf]
    %v501 = vld [vmem:[#allocation2 + $0x608] sm:$0xf]
    %v502 = vld [vmem:[#allocation2 + $0x60c] sm:$0xf]
    %v503 = vld [vmem:[#allocation2 + $0x610] sm:$0xf]
    %v504 = vld [vmem:[#allocation2 + $0x614] sm:$0xf]
    %v505 = vld [vmem:[#allocation2 + $0x618] sm:$0xf]
    %v506 = vld [vmem:[#allocation2 + $0x61c] sm:$0xf]
    %v507 = vld [vmem:[#allocation2 + $0x620] sm:$0xf]
    %v508 = vld [vmem:[#allocation2 + $0x624] sm:$0xf]
    %v509 = vld [vmem:[#allocation2 + $0x628] sm:$0xf]
    %v510 = vld [vmem:[#allocation2 + $0x62c] sm:$0xf]
    %v511 = vld [vmem:[#allocation2 + $0x630] sm:$0xf]
    %v512 = vld [vmem:[#allocation2 + $0x634] sm:$0xf]
    %v513 = vld [vmem:[#allocation2 + $0x638] sm:$0xf]
    %v514 = vld [vmem:[#allocation2 + $0x63c] sm:$0xf]
    %v515 = vld [vmem:[#allocation2 + $0x640] sm:$0xf]
    %v516 = vld [vmem:[#allocation2 + $0x644] sm:$0xf]
    %v517 = vld [vmem:[#allocation2 + $0x648] sm:$0xf]
    %v518 = vld [vmem:[#allocation2 + $0x64c] sm:$0xf]
    %v519 = vld [vmem:[#allocation2 + $0x650] sm:$0xf]
    %v520 = vld [vmem:[#allocation2 + $0x654] sm:$0xf]
    %v521 = vld [vmem:[#allocation2 + $0x658] sm:$0xf]
    %v522 = vld [vmem:[#allocation2 + $0x65c] sm:$0xf]
    %v523 = vld [vmem:[#allocation2 + $0x660] sm:$0xf]
    %v524 = vld [vmem:[#allocation2 + $0x664] sm:$0xf]
    %v525 = vld [vmem:[#allocation2 + $0x668] sm:$0xf]
    %v526 = vld [vmem:[#allocation2 + $0x66c] sm:$0xf]
    %v527 = vld [vmem:[#allocation2 + $0x670] sm:$0xf]
    %v528 = vld [vmem:[#allocation2 + $0x674] sm:$0xf]
    %v529 = vld [vmem:[#allocation2 + $0x678] sm:$0xf]
    %v530 = vld [vmem:[#allocation2 + $0x67c] sm:$0xf]
    %v531 = vld [vmem:[#allocation2 + $0x680] sm:$0xf]
    %v532 = vld [vmem:[#allocation2 + $0x684] sm:$0xf]
    %v533 = vld [vmem:[#allocation2 + $0x688] sm:$0xf]
    %v534 = vld [vmem:[#allocation2 + $0x68c] sm:$0xf]
    %v535 = vld [vmem:[#allocation2 + $0x690] sm:$0xf]
    %v536 = vld [vmem:[#allocation2 + $0x694] sm:$0xf]
    %v537 = vld [vmem:[#allocation2 + $0x698] sm:$0xf]
    %v538 = vld [vmem:[#allocation2 + $0x69c] sm:$0xf]
    %v539 = vld [vmem:[#allocation2 + $0x6a0] sm:$0xf]
    %v540 = vld [vmem:[#allocation2 + $0x6a4] sm:$0xf]
    %v541 = vld [vmem:[#allocation2 + $0x6a8] sm:$0xf]
    %v542 = vld [vmem:[#allocation2 + $0x6ac] sm:$0xf]
    %v543 = vld [vmem:[#allocation2 + $0x6b0] sm:$0xf]
    %v544 = vld [vmem:[#allocation2 + $0x6b4] sm:$0xf]
    %v545 = vld [vmem:[#allocation2 + $0x6b8] sm:$0xf]
    %v546 = vld [vmem:[#allocation2 + $0x6bc] sm:$0xf]
    %v547 = vld [vmem:[#allocation2 + $0x6c0] sm:$0xf]
    %v548 = vld [vmem:[#allocation2 + $0x6c4] sm:$0xf]
    %v549 = vld [vmem:[#allocation2 + $0x6c8] sm:$0xf]
    %v550 = vld [vmem:[#allocation2 + $0x6cc] sm:$0xf]
    %v551 = vld [vmem:[#allocation2 + $0x6d0] sm:$0xf]
    %v552 = vld [vmem:[#allocation2 + $0x6d4] sm:$0xf]
    %v553 = vld [vmem:[#allocation2 + $0x6d8] sm:$0xf]
    %v554 = vld [vmem:[#allocation2 + $0x6dc] sm:$0xf]
    %v555 = vld [vmem:[#allocation2 + $0x6e0] sm:$0xf]
    %v556 = vld [vmem:[#allocation2 + $0x6e4] sm:$0xf]
    %v557 = vld [vmem:[#allocation2 + $0x6e8] sm:$0xf]
    %v558 = vld [vmem:[#allocation2 + $0x6ec] sm:$0xf]
    %v559 = vld [vmem:[#allocation2 + $0x6f0] sm:$0xf]
    %v560 = vld [vmem:[#allocation2 + $0x6f4] sm:$0xf]
    %v561 = vld [vmem:[#allocation2 + $0x6f8] sm:$0xf]
    %v562 = vld [vmem:[#allocation2 + $0x6fc] sm:$0xf]
    %v563 = vld [vmem:[#allocation2 + $0x700] sm:$0xf]
    %v564 = vld [vmem:[#allocation2 + $0x704] sm:$0xf]
    %v565 = vld [vmem:[#allocation2 + $0x708] sm:$0xf]
    %v566 = vld [vmem:[#allocation2 + $0x70c] sm:$0xf]
    %v567 = vld [vmem:[#allocation2 + $0x710] sm:$0xf]
    %v568 = vld [vmem:[#allocation2 + $0x714] sm:$0xf]
    %v569 = vld [vmem:[#allocation2 + $0x718] sm:$0xf]
    %v570 = vld [vmem:[#allocation2 + $0x71c] sm:$0xf]
    %v571 = vld [vmem:[#allocation2 + $0x720] sm:$0xf]
    %v572 = vld [vmem:[#allocation2 + $0x724] sm:$0xf]
    %v573 = vld [vmem:[#allocation2 + $0x728] sm:$0xf]
    %v574 = vld [vmem:[#allocation2 + $0x72c] sm:$0xf]
    %v575 = vld [vmem:[#allocation2 + $0x730] sm:$0xf]
    %v576 = vld [vmem:[#allocation2 + $0x734] sm:$0xf]
    %v577 = vld [vmem:[#allocation2 + $0x738] sm:$0xf]
    %v578 = vld [vmem:[#allocation2 + $0x73c] sm:$0xf]
    %v579 = vld [vmem:[#allocation2 + $0x740] sm:$0xf]
    %v580 = vld [vmem:[#allocation2 + $0x744] sm:$0xf]
    %v581 = vld [vmem:[#allocation2 + $0x748] sm:$0xf]
    %v582 = vld [vmem:[#allocation2 + $0x74c] sm:$0xf]
    %v583 = vld [vmem:[#allocation2 + $0x750] sm:$0xf]
    %v584 = vld [vmem:[#allocation2 + $0x754] sm:$0xf]
    %v585 = vld [vmem:[#allocation2 + $0x758] sm:$0xf]
    %v586 = vld [vmem:[#allocation2 + $0x75c] sm:$0xf]
    %v587 = vld [vmem:[#allocation2 + $0x760] sm:$0xf]
    %v588 = vld [vmem:[#allocation2 + $0x764] sm:$0xf]
    %v589 = vld [vmem:[#allocation2 + $0x768] sm:$0xf]
    %v590 = vld [vmem:[#allocation2 + $0x76c] sm:$0xf]
    %v591 = vld [vmem:[#allocation2 + $0x770] sm:$0xf]
    %v592 = vld [vmem:[#allocation2 + $0x774] sm:$0xf]
    %v593 = vld [vmem:[#allocation2 + $0x778] sm:$0xf]
    %v594 = vld [vmem:[#allocation2 + $0x77c] sm:$0xf]
    %v595 = vld [vmem:[#allocation2 + $0x780] sm:$0xf]
    %v596 = vld [vmem:[#allocation2 + $0x784] sm:$0xf]
    %v597 = vld [vmem:[#allocation2 + $0x788] sm:$0xf]
    %v598 = vld [vmem:[#allocation2 + $0x78c] sm:$0xf]
    %v599 = vld [vmem:[#allocation2 + $0x790] sm:$0xf]
    %v600 = vld [vmem:[#allocation2 + $0x794] sm:$0xf]
    %v601 = vld [vmem:[#allocation2 + $0x798] sm:$0xf]
    %v602 = vld [vmem:[#allocation2 + $0x79c] sm:$0xf]
    %v603 = vld [vmem:[#allocation2 + $0x7a0] sm:$0xf]
    %v604 = vld [vmem:[#allocation2 + $0x7a4] sm:$0xf]
    %v605 = vld [vmem:[#allocation2 + $0x7a8] sm:$0xf]
    %v606 = vld [vmem:[#allocation2 + $0x7ac] sm:$0xf]
    %v607 = vld [vmem:[#allocation2 + $0x7b0] sm:$0xf]
    %v608 = vld [vmem:[#allocation2 + $0x7b4] sm:$0xf]
    %v609 = vld [vmem:[#allocation2 + $0x7b8] sm:$0xf]
    %v610 = vld [vmem:[#allocation2 + $0x7bc] sm:$0xf]
    %v611 = vld [vmem:[#allocation2 + $0x7c0] sm:$0xf]
    %v612 = vld [vmem:[#allocation2 + $0x7c4] sm:$0xf]
    %v613 = vld [vmem:[#allocation2 + $0x7c8] sm:$0xf]
    %v614 = vld [vmem:[#allocation2 + $0x7cc] sm:$0xf]
    %v615 = vld [vmem:[#allocation2 + $0x7d0] sm:$0xf]
    %v616 = vld [vmem:[#allocation2 + $0x7d4] sm:$0xf]
    %v617 = vld [vmem:[#allocation2 + $0x7d8] sm:$0xf]
    %v618 = vld [vmem:[#allocation2 + $0x7dc] sm:$0xf]
    %v619 = vld [vmem:[#allocation2 + $0x7e0] sm:$0xf]
    %v620 = vld [vmem:[#allocation2 + $0x7e4] sm:$0xf]
    %v621 = vld [vmem:[#allocation2 + $0x7e8] sm:$0xf]
    %v622 = vld [vmem:[#allocation2 + $0x7ec] sm:$0xf]
    %v623 = vld [vmem:[#allocation2 + $0x7f0] sm:$0xf]
    %v624 = vld [vmem:[#allocation2 + $0x7f4] sm:$0xf]
    %v625 = vld [vmem:[#allocation2 + $0x7f8] sm:$0xf]
    %v626 = vld [vmem:[#allocation2 + $0x7fc] sm:$0xf]
    %v627 = vld [vmem:[#allocation5] sm:$0xf]
    %v628 = vld [vmem:[#allocation5 + $0x4] sm:$0xf]
    %v629 = vld [vmem:[#allocation5 + $0x8] sm:$0xf]
    %v630 = vld [vmem:[#allocation5 + $0xc] sm:$0xf]
    %v631 = vld [vmem:[#allocation5 + $0x10] sm:$0xf]
    %v632 = vld [vmem:[#allocation5 + $0x14] sm:$0xf]
    %v633 = vld [vmem:[#allocation5 + $0x18] sm:$0xf]
    %v634 = vld [vmem:[#allocation5 + $0x1c] sm:$0xf]
    %v635 = vld [vmem:[#allocation5 + $0x20] sm:$0xf]
    %v636 = vld [vmem:[#allocation5 + $0x24] sm:$0xf]
    %v637 = vld [vmem:[#allocation5 + $0x28] sm:$0xf]
    %v638 = vld [vmem:[#allocation5 + $0x2c] sm:$0xf]
    %v639 = vld [vmem:[#allocation5 + $0x30] sm:$0xf]
    %v640 = vld [vmem:[#allocation5 + $0x34] sm:$0xf]
    %v641 = vld [vmem:[#allocation5 + $0x38] sm:$0xf]
    %v642 = vld [vmem:[#allocation5 + $0x3c] sm:$0xf]
    %v643 = vld [vmem:[%s2] sm:$0x1]
    %v645 = vperm.slane %v643, 0
    %v1159 = vunpack.c.l.b16 %v115
    %v1160 = vunpack.c.l.b16 %v116
    %v1161 = vunpack.c.l.b16 %v117
    %v1162 = vunpack.c.l.b16 %v118
    %v1163 = vunpack.c.l.b16 %v119
    %v1164 = vunpack.c.l.b16 %v120
    %v1165 = vunpack.c.l.b16 %v121
    %v1166 = vunpack.c.l.b16 %v122
    %v1167 = vunpack.c.l.b16 %v123
    %v1168 = vunpack.c.l.b16 %v124
    %v1169 = vunpack.c.l.b16 %v125
    %v1170 = vunpack.c.l.b16 %v126
    %v1171 = vunpack.c.l.b16 %v127
    %v1172 = vunpack.c.l.b16 %v128
    %v1173 = vunpack.c.l.b16 %v129
    %v1174 = vunpack.c.l.b16 %v130
    %v1175 = vunpack.c.l.b16 %v131
    %v1176 = vunpack.c.l.b16 %v132
    %v1177 = vunpack.c.l.b16 %v133
    %v1178 = vunpack.c.l.b16 %v134
    %v1179 = vunpack.c.l.b16 %v135
    %v1180 = vunpack.c.l.b16 %v136
    %v1181 = vunpack.c.l.b16 %v137
    %v1182 = vunpack.c.l.b16 %v138
    %v1183 = vunpack.c.l.b16 %v139
    %v1184 = vunpack.c.l.b16 %v140
    %v1185 = vunpack.c.l.b16 %v141
    %v1186 = vunpack.c.l.b16 %v142
    %v1187 = vunpack.c.l.b16 %v143
    %v1188 = vunpack.c.l.b16 %v144
    %v1189 = vunpack.c.l.b16 %v145
    %v1190 = vunpack.c.l.b16 %v146
    %v1191 = vunpack.c.l.b16 %v147
    %v1192 = vunpack.c.l.b16 %v148
    %v1193 = vunpack.c.l.b16 %v149
    %v1194 = vunpack.c.l.b16 %v150
    %v1195 = vunpack.c.l.b16 %v151
    %v1196 = vunpack.c.l.b16 %v152
    %v1197 = vunpack.c.l.b16 %v153
    %v1198 = vunpack.c.l.b16 %v154
    %v1199 = vunpack.c.l.b16 %v155
    %v1200 = vunpack.c.l.b16 %v156
    %v1201 = vunpack.c.l.b16 %v157
    %v1202 = vunpack.c.l.b16 %v158
    %v1203 = vunpack.c.l.b16 %v159
    %v1204 = vunpack.c.l.b16 %v160
    %v1205 = vunpack.c.l.b16 %v161
    %v1206 = vunpack.c.l.b16 %v162
    %v1207 = vunpack.c.l.b16 %v163
    %v1208 = vunpack.c.l.b16 %v164
    %v1209 = vunpack.c.l.b16 %v165
    %v1210 = vunpack.c.l.b16 %v166
    %v1211 = vunpack.c.l.b16 %v167
    %v1212 = vunpack.c.l.b16 %v168
    %v1213 = vunpack.c.l.b16 %v169
    %v1214 = vunpack.c.l.b16 %v170
    %v1215 = vunpack.c.l.b16 %v171
    %v1216 = vunpack.c.l.b16 %v172
    %v1217 = vunpack.c.l.b16 %v173
    %v1218 = vunpack.c.l.b16 %v174
    %v1219 = vunpack.c.l.b16 %v175
    %v1220 = vunpack.c.l.b16 %v176
    %v1221 = vunpack.c.l.b16 %v177
    %v1222 = vunpack.c.l.b16 %v178
    %v1223 = vunpack.c.l.b16 %v179
    %v1224 = vunpack.c.l.b16 %v180
    %v1225 = vunpack.c.l.b16 %v181
    %v1226 = vunpack.c.l.b16 %v182
    %v1227 = vunpack.c.l.b16 %v183
    %v1228 = vunpack.c.l.b16 %v184
    %v1229 = vunpack.c.l.b16 %v185
    %v1230 = vunpack.c.l.b16 %v186
    %v1231 = vunpack.c.l.b16 %v187
    %v1232 = vunpack.c.l.b16 %v188
    %v1233 = vunpack.c.l.b16 %v189
    %v1234 = vunpack.c.l.b16 %v190
    %v1235 = vunpack.c.l.b16 %v191
    %v1236 = vunpack.c.l.b16 %v192
    %v1237 = vunpack.c.l.b16 %v193
    %v1238 = vunpack.c.l.b16 %v194
    %v1239 = vunpack.c.l.b16 %v195
    %v1240 = vunpack.c.l.b16 %v196
    %v1241 = vunpack.c.l.b16 %v197
    %v1242 = vunpack.c.l.b16 %v198
    %v1243 = vunpack.c.l.b16 %v199
    %v1244 = vunpack.c.l.b16 %v200
    %v1245 = vunpack.c.l.b16 %v201
    %v1246 = vunpack.c.l.b16 %v202
    %v1247 = vunpack.c.l.b16 %v203
    %v1248 = vunpack.c.l.b16 %v204
    %v1249 = vunpack.c.l.b16 %v205
    %v1250 = vunpack.c.l.b16 %v206
    %v1251 = vunpack.c.l.b16 %v207
    %v1252 = vunpack.c.l.b16 %v208
    %v1253 = vunpack.c.l.b16 %v209
    %v1254 = vunpack.c.l.b16 %v210
    %v1255 = vunpack.c.l.b16 %v211
    %v1256 = vunpack.c.l.b16 %v212
    %v1257 = vunpack.c.l.b16 %v213
    %v1258 = vunpack.c.l.b16 %v214
    %v1259 = vunpack.c.l.b16 %v215
    %v1260 = vunpack.c.l.b16 %v216
    %v1261 = vunpack.c.l.b16 %v217
    %v1262 = vunpack.c.l.b16 %v218
    %v1263 = vunpack.c.l.b16 %v219
    %v1264 = vunpack.c.l.b16 %v220
    %v1265 = vunpack.c.l.b16 %v221
    %v1266 = vunpack.c.l.b16 %v222
    %v1267 = vunpack.c.l.b16 %v223
    %v1268 = vunpack.c.l.b16 %v224
    %v1269 = vunpack.c.l.b16 %v225
    %v1270 = vunpack.c.l.b16 %v226
    %v1271 = vunpack.c.l.b16 %v227
    %v1272 = vunpack.c.l.b16 %v228
    %v1273 = vunpack.c.l.b16 %v229
    %v1274 = vunpack.c.l.b16 %v230
    %v1275 = vunpack.c.l.b16 %v231
    %v1276 = vunpack.c.l.b16 %v232
    %v1277 = vunpack.c.l.b16 %v233
    %v1278 = vunpack.c.l.b16 %v234
    %v1279 = vunpack.c.l.b16 %v235
    %v1280 = vunpack.c.l.b16 %v236
    %v1281 = vunpack.c.l.b16 %v237
    %v1282 = vunpack.c.l.b16 %v238
    %v1283 = vunpack.c.l.b16 %v239
    %v1284 = vunpack.c.l.b16 %v240
    %v1285 = vunpack.c.l.b16 %v241
    %v1286 = vunpack.c.l.b16 %v242
    %v1287 = vunpack.c.l.b16 %v243
    %v1288 = vunpack.c.l.b16 %v244
    %v1289 = vunpack.c.l.b16 %v245
    %v1290 = vunpack.c.l.b16 %v246
    %v1291 = vunpack.c.l.b16 %v247
    %v1292 = vunpack.c.l.b16 %v248
    %v1293 = vunpack.c.l.b16 %v249
    %v1294 = vunpack.c.l.b16 %v250
    %v1295 = vunpack.c.l.b16 %v251
    %v1296 = vunpack.c.l.b16 %v252
    %v1297 = vunpack.c.l.b16 %v253
    %v1298 = vunpack.c.l.b16 %v254
    %v1299 = vunpack.c.l.b16 %v255
    %v1300 = vunpack.c.l.b16 %v256
    %v1301 = vunpack.c.l.b16 %v257
    %v1302 = vunpack.c.l.b16 %v258
    %v1303 = vunpack.c.l.b16 %v259
    %v1304 = vunpack.c.l.b16 %v260
    %v1305 = vunpack.c.l.b16 %v261
    %v1306 = vunpack.c.l.b16 %v262
    %v1307 = vunpack.c.l.b16 %v263
    %v1308 = vunpack.c.l.b16 %v264
    %v1309 = vunpack.c.l.b16 %v265
    %v1310 = vunpack.c.l.b16 %v266
    %v1311 = vunpack.c.l.b16 %v267
    %v1312 = vunpack.c.l.b16 %v268
    %v1313 = vunpack.c.l.b16 %v269
    %v1314 = vunpack.c.l.b16 %v270
    %v1315 = vunpack.c.l.b16 %v271
    %v1316 = vunpack.c.l.b16 %v272
    %v1317 = vunpack.c.l.b16 %v273
    %v1318 = vunpack.c.l.b16 %v274
    %v1319 = vunpack.c.l.b16 %v275
    %v1320 = vunpack.c.l.b16 %v276
    %v1321 = vunpack.c.l.b16 %v277
    %v1322 = vunpack.c.l.b16 %v278
    %v1323 = vunpack.c.l.b16 %v279
    %v1324 = vunpack.c.l.b16 %v280
    %v1325 = vunpack.c.l.b16 %v281
    %v1326 = vunpack.c.l.b16 %v282
    %v1327 = vunpack.c.l.b16 %v283
    %v1328 = vunpack.c.l.b16 %v284
    %v1329 = vunpack.c.l.b16 %v285
    %v1330 = vunpack.c.l.b16 %v286
    %v1331 = vunpack.c.l.b16 %v287
    %v1332 = vunpack.c.l.b16 %v288
    %v1333 = vunpack.c.l.b16 %v289
    %v1334 = vunpack.c.l.b16 %v290
    %v1335 = vunpack.c.l.b16 %v291
    %v1336 = vunpack.c.l.b16 %v292
    %v1337 = vunpack.c.l.b16 %v293
    %v1338 = vunpack.c.l.b16 %v294
    %v1339 = vunpack.c.l.b16 %v295
    %v1340 = vunpack.c.l.b16 %v296
    %v1341 = vunpack.c.l.b16 %v297
    %v1342 = vunpack.c.l.b16 %v298
    %v1343 = vunpack.c.l.b16 %v299
    %v1344 = vunpack.c.l.b16 %v300
    %v1345 = vunpack.c.l.b16 %v301
    %v1346 = vunpack.c.l.b16 %v302
    %v1347 = vunpack.c.l.b16 %v303
    %v1348 = vunpack.c.l.b16 %v304
    %v1349 = vunpack.c.l.b16 %v305
    %v1350 = vunpack.c.l.b16 %v306
    %v1351 = vunpack.c.l.b16 %v307
    %v1352 = vunpack.c.l.b16 %v308
    %v1353 = vunpack.c.l.b16 %v309
    %v1354 = vunpack.c.l.b16 %v310
    %v1355 = vunpack.c.l.b16 %v311
    %v1356 = vunpack.c.l.b16 %v312
    %v1357 = vunpack.c.l.b16 %v313
    %v1358 = vunpack.c.l.b16 %v314
    %v1359 = vunpack.c.l.b16 %v315
    %v1360 = vunpack.c.l.b16 %v316
    %v1361 = vunpack.c.l.b16 %v317
    %v1362 = vunpack.c.l.b16 %v318
    %v1363 = vunpack.c.l.b16 %v319
    %v1364 = vunpack.c.l.b16 %v320
    %v1365 = vunpack.c.l.b16 %v321
    %v1366 = vunpack.c.l.b16 %v322
    %v1367 = vunpack.c.l.b16 %v323
    %v1368 = vunpack.c.l.b16 %v324
    %v1369 = vunpack.c.l.b16 %v325
    %v1370 = vunpack.c.l.b16 %v326
    %v1371 = vunpack.c.l.b16 %v327
    %v1372 = vunpack.c.l.b16 %v328
    %v1373 = vunpack.c.l.b16 %v329
    %v1374 = vunpack.c.l.b16 %v330
    %v1375 = vunpack.c.l.b16 %v331
    %v1376 = vunpack.c.l.b16 %v332
    %v1377 = vunpack.c.l.b16 %v333
    %v1378 = vunpack.c.l.b16 %v334
    %v1379 = vunpack.c.l.b16 %v335
    %v1380 = vunpack.c.l.b16 %v336
    %v1381 = vunpack.c.l.b16 %v337
    %v1382 = vunpack.c.l.b16 %v338
    %v1383 = vunpack.c.l.b16 %v339
    %v1384 = vunpack.c.l.b16 %v340
    %v1385 = vunpack.c.l.b16 %v341
    %v1386 = vunpack.c.l.b16 %v342
    %v1387 = vunpack.c.l.b16 %v343
    %v1388 = vunpack.c.l.b16 %v344
    %v1389 = vunpack.c.l.b16 %v345
    %v1390 = vunpack.c.l.b16 %v346
    %v1391 = vunpack.c.l.b16 %v347
    %v1392 = vunpack.c.l.b16 %v348
    %v1393 = vunpack.c.l.b16 %v349
    %v1394 = vunpack.c.l.b16 %v350
    %v1395 = vunpack.c.l.b16 %v351
    %v1396 = vunpack.c.l.b16 %v352
    %v1397 = vunpack.c.l.b16 %v353
    %v1398 = vunpack.c.l.b16 %v354
    %v1399 = vunpack.c.l.b16 %v355
    %v1400 = vunpack.c.l.b16 %v356
    %v1401 = vunpack.c.l.b16 %v357
    %v1402 = vunpack.c.l.b16 %v358
    %v1403 = vunpack.c.l.b16 %v359
    %v1404 = vunpack.c.l.b16 %v360
    %v1405 = vunpack.c.l.b16 %v361
    %v1406 = vunpack.c.l.b16 %v362
    %v1407 = vunpack.c.l.b16 %v363
    %v1408 = vunpack.c.l.b16 %v364
    %v1409 = vunpack.c.l.b16 %v365
    %v1410 = vunpack.c.l.b16 %v366
    %v1411 = vunpack.c.l.b16 %v367
    %v1412 = vunpack.c.l.b16 %v368
    %v1413 = vunpack.c.l.b16 %v369
    %v1414 = vunpack.c.l.b16 %v370
    %v1415 = vunpack.c.l.b16 %v371
    %v1416 = vunpack.c.l.b16 %v372
    %v1417 = vunpack.c.l.b16 %v373
    %v1418 = vunpack.c.l.b16 %v374
    %v1419 = vunpack.c.l.b16 %v375
    %v1420 = vunpack.c.l.b16 %v376
    %v1421 = vunpack.c.l.b16 %v377
    %v1422 = vunpack.c.l.b16 %v378
    %v1423 = vunpack.c.l.b16 %v379
    %v1424 = vunpack.c.l.b16 %v380
    %v1425 = vunpack.c.l.b16 %v381
    %v1426 = vunpack.c.l.b16 %v382
    %v1427 = vunpack.c.l.b16 %v383
    %v1428 = vunpack.c.l.b16 %v384
    %v1429 = vunpack.c.l.b16 %v385
    %v1430 = vunpack.c.l.b16 %v386
    %v1431 = vunpack.c.l.b16 %v387
    %v1432 = vunpack.c.l.b16 %v388
    %v1433 = vunpack.c.l.b16 %v389
    %v1434 = vunpack.c.l.b16 %v390
    %v1435 = vunpack.c.l.b16 %v391
    %v1436 = vunpack.c.l.b16 %v392
    %v1437 = vunpack.c.l.b16 %v393
    %v1438 = vunpack.c.l.b16 %v394
    %v1439 = vunpack.c.l.b16 %v395
    %v1440 = vunpack.c.l.b16 %v396
    %v1441 = vunpack.c.l.b16 %v397
    %v1442 = vunpack.c.l.b16 %v398
    %v1443 = vunpack.c.l.b16 %v399
    %v1444 = vunpack.c.l.b16 %v400
    %v1445 = vunpack.c.l.b16 %v401
    %v1446 = vunpack.c.l.b16 %v402
    %v1447 = vunpack.c.l.b16 %v403
    %v1448 = vunpack.c.l.b16 %v404
    %v1449 = vunpack.c.l.b16 %v405
    %v1450 = vunpack.c.l.b16 %v406
    %v1451 = vunpack.c.l.b16 %v407
    %v1452 = vunpack.c.l.b16 %v408
    %v1453 = vunpack.c.l.b16 %v409
    %v1454 = vunpack.c.l.b16 %v410
    %v1455 = vunpack.c.l.b16 %v411
    %v1456 = vunpack.c.l.b16 %v412
    %v1457 = vunpack.c.l.b16 %v413
    %v1458 = vunpack.c.l.b16 %v414
    %v1459 = vunpack.c.l.b16 %v415
    %v1460 = vunpack.c.l.b16 %v416
    %v1461 = vunpack.c.l.b16 %v417
    %v1462 = vunpack.c.l.b16 %v418
    %v1463 = vunpack.c.l.b16 %v419
    %v1464 = vunpack.c.l.b16 %v420
    %v1465 = vunpack.c.l.b16 %v421
    %v1466 = vunpack.c.l.b16 %v422
    %v1467 = vunpack.c.l.b16 %v423
    %v1468 = vunpack.c.l.b16 %v424
    %v1469 = vunpack.c.l.b16 %v425
    %v1470 = vunpack.c.l.b16 %v426
    %v1471 = vunpack.c.l.b16 %v427
    %v1472 = vunpack.c.l.b16 %v428
    %v1473 = vunpack.c.l.b16 %v429
    %v1474 = vunpack.c.l.b16 %v430
    %v1475 = vunpack.c.l.b16 %v431
    %v1476 = vunpack.c.l.b16 %v432
    %v1477 = vunpack.c.l.b16 %v433
    %v1478 = vunpack.c.l.b16 %v434
    %v1479 = vunpack.c.l.b16 %v435
    %v1480 = vunpack.c.l.b16 %v436
    %v1481 = vunpack.c.l.b16 %v437
    %v1482 = vunpack.c.l.b16 %v438
    %v1483 = vunpack.c.l.b16 %v439
    %v1484 = vunpack.c.l.b16 %v440
    %v1485 = vunpack.c.l.b16 %v441
    %v1486 = vunpack.c.l.b16 %v442
    %v1487 = vunpack.c.l.b16 %v443
    %v1488 = vunpack.c.l.b16 %v444
    %v1489 = vunpack.c.l.b16 %v445
    %v1490 = vunpack.c.l.b16 %v446
    %v1491 = vunpack.c.l.b16 %v447
    %v1492 = vunpack.c.l.b16 %v448
    %v1493 = vunpack.c.l.b16 %v449
    %v1494 = vunpack.c.l.b16 %v450
    %v1495 = vunpack.c.l.b16 %v451
    %v1496 = vunpack.c.l.b16 %v452
    %v1497 = vunpack.c.l.b16 %v453
    %v1498 = vunpack.c.l.b16 %v454
    %v1499 = vunpack.c.l.b16 %v455
    %v1500 = vunpack.c.l.b16 %v456
    %v1501 = vunpack.c.l.b16 %v457
    %v1502 = vunpack.c.l.b16 %v458
    %v1503 = vunpack.c.l.b16 %v459
    %v1504 = vunpack.c.l.b16 %v460
    %v1505 = vunpack.c.l.b16 %v461
    %v1506 = vunpack.c.l.b16 %v462
    %v1507 = vunpack.c.l.b16 %v463
    %v1508 = vunpack.c.l.b16 %v464
    %v1509 = vunpack.c.l.b16 %v465
    %v1510 = vunpack.c.l.b16 %v466
    %v1511 = vunpack.c.l.b16 %v467
    %v1512 = vunpack.c.l.b16 %v468
    %v1513 = vunpack.c.l.b16 %v469
    %v1514 = vunpack.c.l.b16 %v470
    %v1515 = vunpack.c.l.b16 %v471
    %v1516 = vunpack.c.l.b16 %v472
    %v1517 = vunpack.c.l.b16 %v473
    %v1518 = vunpack.c.l.b16 %v474
    %v1519 = vunpack.c.l.b16 %v475
    %v1520 = vunpack.c.l.b16 %v476
    %v1521 = vunpack.c.l.b16 %v477
    %v1522 = vunpack.c.l.b16 %v478
    %v1523 = vunpack.c.l.b16 %v479
    %v1524 = vunpack.c.l.b16 %v480
    %v1525 = vunpack.c.l.b16 %v481
    %v1526 = vunpack.c.l.b16 %v482
    %v1527 = vunpack.c.l.b16 %v483
    %v1528 = vunpack.c.l.b16 %v484
    %v1529 = vunpack.c.l.b16 %v485
    %v1530 = vunpack.c.l.b16 %v486
    %v1531 = vunpack.c.l.b16 %v487
    %v1532 = vunpack.c.l.b16 %v488
    %v1533 = vunpack.c.l.b16 %v489
    %v1534 = vunpack.c.l.b16 %v490
    %v1535 = vunpack.c.l.b16 %v491
    %v1536 = vunpack.c.l.b16 %v492
    %v1537 = vunpack.c.l.b16 %v493
    %v1538 = vunpack.c.l.b16 %v494
    %v1539 = vunpack.c.l.b16 %v495
    %v1540 = vunpack.c.l.b16 %v496
    %v1541 = vunpack.c.l.b16 %v497
    %v1542 = vunpack.c.l.b16 %v498
    %v1543 = vunpack.c.l.b16 %v499
    %v1544 = vunpack.c.l.b16 %v500
    %v1545 = vunpack.c.l.b16 %v501
    %v1546 = vunpack.c.l.b16 %v502
    %v1547 = vunpack.c.l.b16 %v503
    %v1548 = vunpack.c.l.b16 %v504
    %v1549 = vunpack.c.l.b16 %v505
    %v1550 = vunpack.c.l.b16 %v506
    %v1551 = vunpack.c.l.b16 %v507
    %v1552 = vunpack.c.l.b16 %v508
    %v1553 = vunpack.c.l.b16 %v509
    %v1554 = vunpack.c.l.b16 %v510
    %v1555 = vunpack.c.l.b16 %v511
    %v1556 = vunpack.c.l.b16 %v512
    %v1557 = vunpack.c.l.b16 %v513
    %v1558 = vunpack.c.l.b16 %v514
    %v1559 = vunpack.c.l.b16 %v515
    %v1560 = vunpack.c.l.b16 %v516
    %v1561 = vunpack.c.l.b16 %v517
    %v1562 = vunpack.c.l.b16 %v518
    %v1563 = vunpack.c.l.b16 %v519
    %v1564 = vunpack.c.l.b16 %v520
    %v1565 = vunpack.c.l.b16 %v521
    %v1566 = vunpack.c.l.b16 %v522
    %v1567 = vunpack.c.l.b16 %v523
    %v1568 = vunpack.c.l.b16 %v524
    %v1569 = vunpack.c.l.b16 %v525
    %v1570 = vunpack.c.l.b16 %v526
    %v1571 = vunpack.c.l.b16 %v527
    %v1572 = vunpack.c.l.b16 %v528
    %v1573 = vunpack.c.l.b16 %v529
    %v1574 = vunpack.c.l.b16 %v530
    %v1575 = vunpack.c.l.b16 %v531
    %v1576 = vunpack.c.l.b16 %v532
    %v1577 = vunpack.c.l.b16 %v533
    %v1578 = vunpack.c.l.b16 %v534
    %v1579 = vunpack.c.l.b16 %v535
    %v1580 = vunpack.c.l.b16 %v536
    %v1581 = vunpack.c.l.b16 %v537
    %v1582 = vunpack.c.l.b16 %v538
    %v1583 = vunpack.c.l.b16 %v539
    %v1584 = vunpack.c.l.b16 %v540
    %v1585 = vunpack.c.l.b16 %v541
    %v1586 = vunpack.c.l.b16 %v542
    %v1587 = vunpack.c.l.b16 %v543
    %v1588 = vunpack.c.l.b16 %v544
    %v1589 = vunpack.c.l.b16 %v545
    %v1590 = vunpack.c.l.b16 %v546
    %v1591 = vunpack.c.l.b16 %v547
    %v1592 = vunpack.c.l.b16 %v548
    %v1593 = vunpack.c.l.b16 %v549
    %v1594 = vunpack.c.l.b16 %v550
    %v1595 = vunpack.c.l.b16 %v551
    %v1596 = vunpack.c.l.b16 %v552
    %v1597 = vunpack.c.l.b16 %v553
    %v1598 = vunpack.c.l.b16 %v554
    %v1599 = vunpack.c.l.b16 %v555
    %v1600 = vunpack.c.l.b16 %v556
    %v1601 = vunpack.c.l.b16 %v557
    %v1602 = vunpack.c.l.b16 %v558
    %v1603 = vunpack.c.l.b16 %v559
    %v1604 = vunpack.c.l.b16 %v560
    %v1605 = vunpack.c.l.b16 %v561
    %v1606 = vunpack.c.l.b16 %v562
    %v1607 = vunpack.c.l.b16 %v563
    %v1608 = vunpack.c.l.b16 %v564
    %v1609 = vunpack.c.l.b16 %v565
    %v1610 = vunpack.c.l.b16 %v566
    %v1611 = vunpack.c.l.b16 %v567
    %v1612 = vunpack.c.l.b16 %v568
    %v1613 = vunpack.c.l.b16 %v569
    %v1614 = vunpack.c.l.b16 %v570
    %v1615 = vunpack.c.l.b16 %v571
    %v1616 = vunpack.c.l.b16 %v572
    %v1617 = vunpack.c.l.b16 %v573
    %v1618 = vunpack.c.l.b16 %v574
    %v1619 = vunpack.c.l.b16 %v575
    %v1620 = vunpack.c.l.b16 %v576
    %v1621 = vunpack.c.l.b16 %v577
    %v1622 = vunpack.c.l.b16 %v578
    %v1623 = vunpack.c.l.b16 %v579
    %v1624 = vunpack.c.l.b16 %v580
    %v1625 = vunpack.c.l.b16 %v581
    %v1626 = vunpack.c.l.b16 %v582
    %v1627 = vunpack.c.l.b16 %v583
    %v1628 = vunpack.c.l.b16 %v584
    %v1629 = vunpack.c.l.b16 %v585
    %v1630 = vunpack.c.l.b16 %v586
    %v1631 = vunpack.c.l.b16 %v587
    %v1632 = vunpack.c.l.b16 %v588
    %v1633 = vunpack.c.l.b16 %v589
    %v1634 = vunpack.c.l.b16 %v590
    %v1635 = vunpack.c.l.b16 %v591
    %v1636 = vunpack.c.l.b16 %v592
    %v1637 = vunpack.c.l.b16 %v593
    %v1638 = vunpack.c.l.b16 %v594
    %v1639 = vunpack.c.l.b16 %v595
    %v1640 = vunpack.c.l.b16 %v596
    %v1641 = vunpack.c.l.b16 %v597
    %v1642 = vunpack.c.l.b16 %v598
    %v1643 = vunpack.c.l.b16 %v599
    %v1644 = vunpack.c.l.b16 %v600
    %v1645 = vunpack.c.l.b16 %v601
    %v1646 = vunpack.c.l.b16 %v602
    %v1647 = vunpack.c.l.b16 %v603
    %v1648 = vunpack.c.l.b16 %v604
    %v1649 = vunpack.c.l.b16 %v605
    %v1650 = vunpack.c.l.b16 %v606
    %v1651 = vunpack.c.l.b16 %v607
    %v1652 = vunpack.c.l.b16 %v608
    %v1653 = vunpack.c.l.b16 %v609
    %v1654 = vunpack.c.l.b16 %v610
    %v1655 = vunpack.c.l.b16 %v611
    %v1656 = vunpack.c.l.b16 %v612
    %v1657 = vunpack.c.l.b16 %v613
    %v1658 = vunpack.c.l.b16 %v614
    %v1659 = vunpack.c.l.b16 %v615
    %v1660 = vunpack.c.l.b16 %v616
    %v1661 = vunpack.c.l.b16 %v617
    %v1662 = vunpack.c.l.b16 %v618
    %v1663 = vunpack.c.l.b16 %v619
    %v1664 = vunpack.c.l.b16 %v620
    %v1665 = vunpack.c.l.b16 %v621
    %v1666 = vunpack.c.l.b16 %v622
    %v1667 = vunpack.c.l.b16 %v623
    %v1668 = vunpack.c.l.b16 %v624
    %v1669 = vunpack.c.l.b16 %v625
    %v1670 = vunpack.c.l.b16 %v626
    %v1671 = vpack.c.b16 %v1160, %v1159
    %v1672 = vpack.c.b16 %v1162, %v1161
    %v1673 = vpack.c.b16 %v1164, %v1163
    %v1674 = vpack.c.b16 %v1166, %v1165
    %v1675 = vpack.c.b16 %v1168, %v1167
    %v1676 = vpack.c.b16 %v1170, %v1169
    %v1677 = vpack.c.b16 %v1172, %v1171
    %v1678 = vpack.c.b16 %v1174, %v1173
    %v1679 = vpack.c.b16 %v1176, %v1175
    %v1680 = vpack.c.b16 %v1178, %v1177
    %v1681 = vpack.c.b16 %v1180, %v1179
    %v1682 = vpack.c.b16 %v1182, %v1181
    %v1683 = vpack.c.b16 %v1184, %v1183
    %v1684 = vpack.c.b16 %v1186, %v1185
    %v1685 = vpack.c.b16 %v1188, %v1187
    %v1686 = vpack.c.b16 %v1190, %v1189
    %v1687 = vpack.c.b16 %v1192, %v1191
    %v1688 = vpack.c.b16 %v1194, %v1193
    %v1689 = vpack.c.b16 %v1196, %v1195
    %v1690 = vpack.c.b16 %v1198, %v1197
    %v1691 = vpack.c.b16 %v1200, %v1199
    %v1692 = vpack.c.b16 %v1202, %v1201
    %v1693 = vpack.c.b16 %v1204, %v1203
    %v1694 = vpack.c.b16 %v1206, %v1205
    %v1695 = vpack.c.b16 %v1208, %v1207
    %v1696 = vpack.c.b16 %v1210, %v1209
    %v1697 = vpack.c.b16 %v1212, %v1211
    %v1698 = vpack.c.b16 %v1214, %v1213
    %v1699 = vpack.c.b16 %v1216, %v1215
    %v1700 = vpack.c.b16 %v1218, %v1217
    %v1701 = vpack.c.b16 %v1220, %v1219
    %v1702 = vpack.c.b16 %v1222, %v1221
    %v1703 = vpack.c.b16 %v1224, %v1223
    %v1704 = vpack.c.b16 %v1226, %v1225
    %v1705 = vpack.c.b16 %v1228, %v1227
    %v1706 = vpack.c.b16 %v1230, %v1229
    %v1707 = vpack.c.b16 %v1232, %v1231
    %v1708 = vpack.c.b16 %v1234, %v1233
    %v1709 = vpack.c.b16 %v1236, %v1235
    %v1710 = vpack.c.b16 %v1238, %v1237
    %v1711 = vpack.c.b16 %v1240, %v1239
    %v1712 = vpack.c.b16 %v1242, %v1241
    %v1713 = vpack.c.b16 %v1244, %v1243
    %v1714 = vpack.c.b16 %v1246, %v1245
    %v1715 = vpack.c.b16 %v1248, %v1247
    %v1716 = vpack.c.b16 %v1250, %v1249
    %v1717 = vpack.c.b16 %v1252, %v1251
    %v1718 = vpack.c.b16 %v1254, %v1253
    %v1719 = vpack.c.b16 %v1256, %v1255
    %v1720 = vpack.c.b16 %v1258, %v1257
    %v1721 = vpack.c.b16 %v1260, %v1259
    %v1722 = vpack.c.b16 %v1262, %v1261
    %v1723 = vpack.c.b16 %v1264, %v1263
    %v1724 = vpack.c.b16 %v1266, %v1265
    %v1725 = vpack.c.b16 %v1268, %v1267
    %v1726 = vpack.c.b16 %v1270, %v1269
    %v1727 = vpack.c.b16 %v1272, %v1271
    %v1728 = vpack.c.b16 %v1274, %v1273
    %v1729 = vpack.c.b16 %v1276, %v1275
    %v1730 = vpack.c.b16 %v1278, %v1277
    %v1731 = vpack.c.b16 %v1280, %v1279
    %v1732 = vpack.c.b16 %v1282, %v1281
    %v1733 = vpack.c.b16 %v1284, %v1283
    %v1734 = vpack.c.b16 %v1286, %v1285
    %v1735 = vpack.c.b16 %v1288, %v1287
    %v1736 = vpack.c.b16 %v1290, %v1289
    %v1737 = vpack.c.b16 %v1292, %v1291
    %v1738 = vpack.c.b16 %v1294, %v1293
    %v1739 = vpack.c.b16 %v1296, %v1295
    %v1740 = vpack.c.b16 %v1298, %v1297
    %v1741 = vpack.c.b16 %v1300, %v1299
    %v1742 = vpack.c.b16 %v1302, %v1301
    %v1743 = vpack.c.b16 %v1304, %v1303
    %v1744 = vpack.c.b16 %v1306, %v1305
    %v1745 = vpack.c.b16 %v1308, %v1307
    %v1746 = vpack.c.b16 %v1310, %v1309
    %v1747 = vpack.c.b16 %v1312, %v1311
    %v1748 = vpack.c.b16 %v1314, %v1313
    %v1749 = vpack.c.b16 %v1316, %v1315
    %v1750 = vpack.c.b16 %v1318, %v1317
    %v1751 = vpack.c.b16 %v1320, %v1319
    %v1752 = vpack.c.b16 %v1322, %v1321
    %v1753 = vpack.c.b16 %v1324, %v1323
    %v1754 = vpack.c.b16 %v1326, %v1325
    %v1755 = vpack.c.b16 %v1328, %v1327
    %v1756 = vpack.c.b16 %v1330, %v1329
    %v1757 = vpack.c.b16 %v1332, %v1331
    %v1758 = vpack.c.b16 %v1334, %v1333
    %v1759 = vpack.c.b16 %v1336, %v1335
    %v1760 = vpack.c.b16 %v1338, %v1337
    %v1761 = vpack.c.b16 %v1340, %v1339
    %v1762 = vpack.c.b16 %v1342, %v1341
    %v1763 = vpack.c.b16 %v1344, %v1343
    %v1764 = vpack.c.b16 %v1346, %v1345
    %v1765 = vpack.c.b16 %v1348, %v1347
    %v1766 = vpack.c.b16 %v1350, %v1349
    %v1767 = vpack.c.b16 %v1352, %v1351
    %v1768 = vpack.c.b16 %v1354, %v1353
    %v1769 = vpack.c.b16 %v1356, %v1355
    %v1770 = vpack.c.b16 %v1358, %v1357
    %v1771 = vpack.c.b16 %v1360, %v1359
    %v1772 = vpack.c.b16 %v1362, %v1361
    %v1773 = vpack.c.b16 %v1364, %v1363
    %v1774 = vpack.c.b16 %v1366, %v1365
    %v1775 = vpack.c.b16 %v1368, %v1367
    %v1776 = vpack.c.b16 %v1370, %v1369
    %v1777 = vpack.c.b16 %v1372, %v1371
    %v1778 = vpack.c.b16 %v1374, %v1373
    %v1779 = vpack.c.b16 %v1376, %v1375
    %v1780 = vpack.c.b16 %v1378, %v1377
    %v1781 = vpack.c.b16 %v1380, %v1379
    %v1782 = vpack.c.b16 %v1382, %v1381
    %v1783 = vpack.c.b16 %v1384, %v1383
    %v1784 = vpack.c.b16 %v1386, %v1385
    %v1785 = vpack.c.b16 %v1388, %v1387
    %v1786 = vpack.c.b16 %v1390, %v1389
    %v1787 = vpack.c.b16 %v1392, %v1391
    %v1788 = vpack.c.b16 %v1394, %v1393
    %v1789 = vpack.c.b16 %v1396, %v1395
    %v1790 = vpack.c.b16 %v1398, %v1397
    %v1791 = vpack.c.b16 %v1400, %v1399
    %v1792 = vpack.c.b16 %v1402, %v1401
    %v1793 = vpack.c.b16 %v1404, %v1403
    %v1794 = vpack.c.b16 %v1406, %v1405
    %v1795 = vpack.c.b16 %v1408, %v1407
    %v1796 = vpack.c.b16 %v1410, %v1409
    %v1797 = vpack.c.b16 %v1412, %v1411
    %v1798 = vpack.c.b16 %v1414, %v1413
    %v1799 = vpack.c.b16 %v1416, %v1415
    %v1800 = vpack.c.b16 %v1418, %v1417
    %v1801 = vpack.c.b16 %v1420, %v1419
    %v1802 = vpack.c.b16 %v1422, %v1421
    %v1803 = vpack.c.b16 %v1424, %v1423
    %v1804 = vpack.c.b16 %v1426, %v1425
    %v1805 = vpack.c.b16 %v1428, %v1427
    %v1806 = vpack.c.b16 %v1430, %v1429
    %v1807 = vpack.c.b16 %v1432, %v1431
    %v1808 = vpack.c.b16 %v1434, %v1433
    %v1809 = vpack.c.b16 %v1436, %v1435
    %v1810 = vpack.c.b16 %v1438, %v1437
    %v1811 = vpack.c.b16 %v1440, %v1439
    %v1812 = vpack.c.b16 %v1442, %v1441
    %v1813 = vpack.c.b16 %v1444, %v1443
    %v1814 = vpack.c.b16 %v1446, %v1445
    %v1815 = vpack.c.b16 %v1448, %v1447
    %v1816 = vpack.c.b16 %v1450, %v1449
    %v1817 = vpack.c.b16 %v1452, %v1451
    %v1818 = vpack.c.b16 %v1454, %v1453
    %v1819 = vpack.c.b16 %v1456, %v1455
    %v1820 = vpack.c.b16 %v1458, %v1457
    %v1821 = vpack.c.b16 %v1460, %v1459
    %v1822 = vpack.c.b16 %v1462, %v1461
    %v1823 = vpack.c.b16 %v1464, %v1463
    %v1824 = vpack.c.b16 %v1466, %v1465
    %v1825 = vpack.c.b16 %v1468, %v1467
    %v1826 = vpack.c.b16 %v1470, %v1469
    %v1827 = vpack.c.b16 %v1472, %v1471
    %v1828 = vpack.c.b16 %v1474, %v1473
    %v1829 = vpack.c.b16 %v1476, %v1475
    %v1830 = vpack.c.b16 %v1478, %v1477
    %v1831 = vpack.c.b16 %v1480, %v1479
    %v1832 = vpack.c.b16 %v1482, %v1481
    %v1833 = vpack.c.b16 %v1484, %v1483
    %v1834 = vpack.c.b16 %v1486, %v1485
    %v1835 = vpack.c.b16 %v1488, %v1487
    %v1836 = vpack.c.b16 %v1490, %v1489
    %v1837 = vpack.c.b16 %v1492, %v1491
    %v1838 = vpack.c.b16 %v1494, %v1493
    %v1839 = vpack.c.b16 %v1496, %v1495
    %v1840 = vpack.c.b16 %v1498, %v1497
    %v1841 = vpack.c.b16 %v1500, %v1499
    %v1842 = vpack.c.b16 %v1502, %v1501
    %v1843 = vpack.c.b16 %v1504, %v1503
    %v1844 = vpack.c.b16 %v1506, %v1505
    %v1845 = vpack.c.b16 %v1508, %v1507
    %v1846 = vpack.c.b16 %v1510, %v1509
    %v1847 = vpack.c.b16 %v1512, %v1511
    %v1848 = vpack.c.b16 %v1514, %v1513
    %v1849 = vpack.c.b16 %v1516, %v1515
    %v1850 = vpack.c.b16 %v1518, %v1517
    %v1851 = vpack.c.b16 %v1520, %v1519
    %v1852 = vpack.c.b16 %v1522, %v1521
    %v1853 = vpack.c.b16 %v1524, %v1523
    %v1854 = vpack.c.b16 %v1526, %v1525
    %v1855 = vpack.c.b16 %v1528, %v1527
    %v1856 = vpack.c.b16 %v1530, %v1529
    %v1857 = vpack.c.b16 %v1532, %v1531
    %v1858 = vpack.c.b16 %v1534, %v1533
    %v1859 = vpack.c.b16 %v1536, %v1535
    %v1860 = vpack.c.b16 %v1538, %v1537
    %v1861 = vpack.c.b16 %v1540, %v1539
    %v1862 = vpack.c.b16 %v1542, %v1541
    %v1863 = vpack.c.b16 %v1544, %v1543
    %v1864 = vpack.c.b16 %v1546, %v1545
    %v1865 = vpack.c.b16 %v1548, %v1547
    %v1866 = vpack.c.b16 %v1550, %v1549
    %v1867 = vpack.c.b16 %v1552, %v1551
    %v1868 = vpack.c.b16 %v1554, %v1553
    %v1869 = vpack.c.b16 %v1556, %v1555
    %v1870 = vpack.c.b16 %v1558, %v1557
    %v1871 = vpack.c.b16 %v1560, %v1559
    %v1872 = vpack.c.b16 %v1562, %v1561
    %v1873 = vpack.c.b16 %v1564, %v1563
    %v1874 = vpack.c.b16 %v1566, %v1565
    %v1875 = vpack.c.b16 %v1568, %v1567
    %v1876 = vpack.c.b16 %v1570, %v1569
    %v1877 = vpack.c.b16 %v1572, %v1571
    %v1878 = vpack.c.b16 %v1574, %v1573
    %v1879 = vpack.c.b16 %v1576, %v1575
    %v1880 = vpack.c.b16 %v1578, %v1577
    %v1881 = vpack.c.b16 %v1580, %v1579
    %v1882 = vpack.c.b16 %v1582, %v1581
    %v1883 = vpack.c.b16 %v1584, %v1583
    %v1884 = vpack.c.b16 %v1586, %v1585
    %v1885 = vpack.c.b16 %v1588, %v1587
    %v1886 = vpack.c.b16 %v1590, %v1589
    %v1887 = vpack.c.b16 %v1592, %v1591
    %v1888 = vpack.c.b16 %v1594, %v1593
    %v1889 = vpack.c.b16 %v1596, %v1595
    %v1890 = vpack.c.b16 %v1598, %v1597
    %v1891 = vpack.c.b16 %v1600, %v1599
    %v1892 = vpack.c.b16 %v1602, %v1601
    %v1893 = vpack.c.b16 %v1604, %v1603
    %v1894 = vpack.c.b16 %v1606, %v1605
    %v1895 = vpack.c.b16 %v1608, %v1607
    %v1896 = vpack.c.b16 %v1610, %v1609
    %v1897 = vpack.c.b16 %v1612, %v1611
    %v1898 = vpack.c.b16 %v1614, %v1613
    %v1899 = vpack.c.b16 %v1616, %v1615
    %v1900 = vpack.c.b16 %v1618, %v1617
    %v1901 = vpack.c.b16 %v1620, %v1619
    %v1902 = vpack.c.b16 %v1622, %v1621
    %v1903 = vpack.c.b16 %v1624, %v1623
    %v1904 = vpack.c.b16 %v1626, %v1625
    %v1905 = vpack.c.b16 %v1628, %v1627
    %v1906 = vpack.c.b16 %v1630, %v1629
    %v1907 = vpack.c.b16 %v1632, %v1631
    %v1908 = vpack.c.b16 %v1634, %v1633
    %v1909 = vpack.c.b16 %v1636, %v1635
    %v1910 = vpack.c.b16 %v1638, %v1637
    %v1911 = vpack.c.b16 %v1640, %v1639
    %v1912 = vpack.c.b16 %v1642, %v1641
    %v1913 = vpack.c.b16 %v1644, %v1643
    %v1914 = vpack.c.b16 %v1646, %v1645
    %v1915 = vpack.c.b16 %v1648, %v1647
    %v1916 = vpack.c.b16 %v1650, %v1649
    %v1917 = vpack.c.b16 %v1652, %v1651
    %v1918 = vpack.c.b16 %v1654, %v1653
    %v1919 = vpack.c.b16 %v1656, %v1655
    %v1920 = vpack.c.b16 %v1658, %v1657
    %v1921 = vpack.c.b16 %v1660, %v1659
    %v1922 = vpack.c.b16 %v1662, %v1661
    %v1923 = vpack.c.b16 %v1664, %v1663
    %v1924 = vpack.c.b16 %v1666, %v1665
    %v1925 = vpack.c.b16 %v1668, %v1667
    %v1926 = vpack.c.b16 %v1670, %v1669
    %v2199 = vunpack.c.l.b16 %v627
    %v2200 = vunpack.c.l.b16 %v628
    %v2201 = vunpack.c.l.b16 %v629
    %v2202 = vunpack.c.l.b16 %v630
    %v2203 = vunpack.c.l.b16 %v631
    %v2204 = vunpack.c.l.b16 %v632
    %v2205 = vunpack.c.l.b16 %v633
    %v2206 = vunpack.c.l.b16 %v634
    %v2207 = vunpack.c.l.b16 %v635
    %v2208 = vunpack.c.l.b16 %v636
    %v2209 = vunpack.c.l.b16 %v637
    %v2210 = vunpack.c.l.b16 %v638
    %v2211 = vunpack.c.l.b16 %v639
    %v2212 = vunpack.c.l.b16 %v640
    %v2213 = vunpack.c.l.b16 %v641
    %v2214 = vunpack.c.l.b16 %v642
    %v2215 = vpack.c.b16 %v2200, %v2199
    %v2216 = vpack.c.b16 %v2202, %v2201
    %v2217 = vpack.c.b16 %v2204, %v2203
    %v2218 = vpack.c.b16 %v2206, %v2205
    %v2219 = vpack.c.b16 %v2208, %v2207
    %v2220 = vpack.c.b16 %v2210, %v2209
    %v2221 = vpack.c.b16 %v2212, %v2211
    %v2222 = vpack.c.b16 %v2214, %v2213
    %2231 = vmatpush.bf16.msra.mxu0 %v2222
    %2232 = vmatpush.bf16.msra.mxu0 %v2221
    %2233 = vmatpush.bf16.msra.mxu0 %v2220
    %2234 = vmatpush.bf16.msra.mxu0 %v2219
    %2235 = vmatpush.bf16.msra.mxu0 %v2218
    %2236 = vmatpush.bf16.msra.mxu0 %v2217
    %2237 = vmatpush.bf16.msra.mxu0 %v2216
    %2238 = vmatpush.bf16.msra.mxu0 %v2215
    %2239 = vmatmul.bf16.gmra.mxu0 %v1671
    %v2240 = vpop.f32.mrf.mxu0
    %v2241 = vadd.f32 %v645, %v2240
    %v2242 = vpop.f32.mrf.mxu0
    %v2243 = vadd.f32 %v645, %v2242
    %2244 = vmatmul.bf16.gmra.mxu0 %v1672
    %v2245 = vpop.f32.mrf.mxu0
    %v2246 = vadd.f32 %v645, %v2245
    %v2247 = vpop.f32.mrf.mxu0
    %v2248 = vadd.f32 %v645, %v2247
    %2249 = vmatmul.bf16.gmra.mxu0 %v1673
    %v2250 = vpop.f32.mrf.mxu0
    %v2251 = vadd.f32 %v645, %v2250
    %v2252 = vpop.f32.mrf.mxu0
    %v2253 = vadd.f32 %v645, %v2252
    %2254 = vmatmul.bf16.gmra.mxu0 %v1674
    %v2255 = vpop.f32.mrf.mxu0
    %v2256 = vadd.f32 %v645, %v2255
    %v2257 = vpop.f32.mrf.mxu0
    %v2258 = vadd.f32 %v645, %v2257
    %2259 = vmatmul.bf16.gmra.mxu0 %v1675
    %v2260 = vpop.f32.mrf.mxu0
    %v2261 = vadd.f32 %v645, %v2260
    %v2262 = vpop.f32.mrf.mxu0
    %v2263 = vadd.f32 %v645, %v2262
    %2264 = vmatmul.bf16.gmra.mxu0 %v1676
    %v2265 = vpop.f32.mrf.mxu0
    %v2266 = vadd.f32 %v645, %v2265
    %v2267 = vpop.f32.mrf.mxu0
    %v2268 = vadd.f32 %v645, %v2267
    %2269 = vmatmul.bf16.gmra.mxu0 %v1677
    %v2270 = vpop.f32.mrf.mxu0
    %v2271 = vadd.f32 %v645, %v2270
    %v2272 = vpop.f32.mrf.mxu0
    %v2273 = vadd.f32 %v645, %v2272
    %2274 = vmatmul.bf16.gmra.mxu0 %v1678
    %v2275 = vpop.f32.mrf.mxu0
    %v2276 = vadd.f32 %v645, %v2275
    %v2277 = vpop.f32.mrf.mxu0
    %v2278 = vadd.f32 %v645, %v2277
    %2279 = vmatmul.bf16.gmra.mxu0 %v1679
    %v2280 = vpop.f32.mrf.mxu0
    %v2281 = vadd.f32 %v645, %v2280
    %v2282 = vpop.f32.mrf.mxu0
    %v2283 = vadd.f32 %v645, %v2282
    %2284 = vmatmul.bf16.gmra.mxu0 %v1680
    %v2285 = vpop.f32.mrf.mxu0
    %v2286 = vadd.f32 %v645, %v2285
    %v2287 = vpop.f32.mrf.mxu0
    %v2288 = vadd.f32 %v645, %v2287
    %2289 = vmatmul.bf16.gmra.mxu0 %v1681
    %v2290 = vpop.f32.mrf.mxu0
    %v2291 = vadd.f32 %v645, %v2290
    %v2292 = vpop.f32.mrf.mxu0
    %v2293 = vadd.f32 %v645, %v2292
    %2294 = vmatmul.bf16.gmra.mxu0 %v1682
    %v2295 = vpop.f32.mrf.mxu0
    %v2296 = vadd.f32 %v645, %v2295
    %v2297 = vpop.f32.mrf.mxu0
    %v2298 = vadd.f32 %v645, %v2297
    %2299 = vmatmul.bf16.gmra.mxu0 %v1683
    %v2300 = vpop.f32.mrf.mxu0
    %v2301 = vadd.f32 %v645, %v2300
    %v2302 = vpop.f32.mrf.mxu0
    %v2303 = vadd.f32 %v645, %v2302
    %2304 = vmatmul.bf16.gmra.mxu0 %v1684
    %v2305 = vpop.f32.mrf.mxu0
    %v2306 = vadd.f32 %v645, %v2305
    %v2307 = vpop.f32.mrf.mxu0
    %v2308 = vadd.f32 %v645, %v2307
    %2309 = vmatmul.bf16.gmra.mxu0 %v1685
    %v2310 = vpop.f32.mrf.mxu0
    %v2311 = vadd.f32 %v645, %v2310
    %v2312 = vpop.f32.mrf.mxu0
    %v2313 = vadd.f32 %v645, %v2312
    %2314 = vmatmul.bf16.gmra.mxu0 %v1686
    %v2315 = vpop.f32.mrf.mxu0
    %v2316 = vadd.f32 %v645, %v2315
    %v2317 = vpop.f32.mrf.mxu0
    %v2318 = vadd.f32 %v645, %v2317
    %2319 = vmatmul.bf16.gmra.mxu0 %v1687
    %v2320 = vpop.f32.mrf.mxu0
    %v2321 = vadd.f32 %v645, %v2320
    %v2322 = vpop.f32.mrf.mxu0
    %v2323 = vadd.f32 %v645, %v2322
    %2324 = vmatmul.bf16.gmra.mxu0 %v1688
    %v2325 = vpop.f32.mrf.mxu0
    %v2326 = vadd.f32 %v645, %v2325
    %v2327 = vpop.f32.mrf.mxu0
    %v2328 = vadd.f32 %v645, %v2327
    %2329 = vmatmul.bf16.gmra.mxu0 %v1689
    %v2330 = vpop.f32.mrf.mxu0
    %v2331 = vadd.f32 %v645, %v2330
    %v2332 = vpop.f32.mrf.mxu0
    %v2333 = vadd.f32 %v645, %v2332
    %2334 = vmatmul.bf16.gmra.mxu0 %v1690
    %v2335 = vpop.f32.mrf.mxu0
    %v2336 = vadd.f32 %v645, %v2335
    %v2337 = vpop.f32.mrf.mxu0
    %v2338 = vadd.f32 %v645, %v2337
    %2339 = vmatmul.bf16.gmra.mxu0 %v1691
    %v2340 = vpop.f32.mrf.mxu0
    %v2341 = vadd.f32 %v645, %v2340
    %v2342 = vpop.f32.mrf.mxu0
    %v2343 = vadd.f32 %v645, %v2342
    %2344 = vmatmul.bf16.gmra.mxu0 %v1692
    %v2345 = vpop.f32.mrf.mxu0
    %v2346 = vadd.f32 %v645, %v2345
    %v2347 = vpop.f32.mrf.mxu0
    %v2348 = vadd.f32 %v645, %v2347
    %2349 = vmatmul.bf16.gmra.mxu0 %v1693
    %v2350 = vpop.f32.mrf.mxu0
    %v2351 = vadd.f32 %v645, %v2350
    %v2352 = vpop.f32.mrf.mxu0
    %v2353 = vadd.f32 %v645, %v2352
    %2354 = vmatmul.bf16.gmra.mxu0 %v1694
    %v2355 = vpop.f32.mrf.mxu0
    %v2356 = vadd.f32 %v645, %v2355
    %v2357 = vpop.f32.mrf.mxu0
    %v2358 = vadd.f32 %v645, %v2357
    %2359 = vmatmul.bf16.gmra.mxu0 %v1695
    %v2360 = vpop.f32.mrf.mxu0
    %v2361 = vadd.f32 %v645, %v2360
    %v2362 = vpop.f32.mrf.mxu0
    %v2363 = vadd.f32 %v645, %v2362
    %2364 = vmatmul.bf16.gmra.mxu0 %v1696
    %v2365 = vpop.f32.mrf.mxu0
    %v2366 = vadd.f32 %v645, %v2365
    %v2367 = vpop.f32.mrf.mxu0
    %v2368 = vadd.f32 %v645, %v2367
    %2369 = vmatmul.bf16.gmra.mxu0 %v1697
    %v2370 = vpop.f32.mrf.mxu0
    %v2371 = vadd.f32 %v645, %v2370
    %v2372 = vpop.f32.mrf.mxu0
    %v2373 = vadd.f32 %v645, %v2372
    %2374 = vmatmul.bf16.gmra.mxu0 %v1698
    %v2375 = vpop.f32.mrf.mxu0
    %v2376 = vadd.f32 %v645, %v2375
    %v2377 = vpop.f32.mrf.mxu0
    %v2378 = vadd.f32 %v645, %v2377
    %2379 = vmatmul.bf16.gmra.mxu0 %v1699
    %v2380 = vpop.f32.mrf.mxu0
    %v2381 = vadd.f32 %v645, %v2380
    %v2382 = vpop.f32.mrf.mxu0
    %v2383 = vadd.f32 %v645, %v2382
    %2384 = vmatmul.bf16.gmra.mxu0 %v1700
    %v2385 = vpop.f32.mrf.mxu0
    %v2386 = vadd.f32 %v645, %v2385
    %v2387 = vpop.f32.mrf.mxu0
    %v2388 = vadd.f32 %v645, %v2387
    %2389 = vmatmul.bf16.gmra.mxu0 %v1701
    %v2390 = vpop.f32.mrf.mxu0
    %v2391 = vadd.f32 %v645, %v2390
    %v2392 = vpop.f32.mrf.mxu0
    %v2393 = vadd.f32 %v645, %v2392
    %2394 = vmatmul.bf16.gmra.mxu0 %v1702
    %v2395 = vpop.f32.mrf.mxu0
    %v2396 = vadd.f32 %v645, %v2395
    %v2397 = vpop.f32.mrf.mxu0
    %v2398 = vadd.f32 %v645, %v2397
    %2399 = vmatmul.bf16.gmra.mxu0 %v1703
    %v2400 = vpop.f32.mrf.mxu0
    %v2401 = vadd.f32 %v645, %v2400
    %v2402 = vpop.f32.mrf.mxu0
    %v2403 = vadd.f32 %v645, %v2402
    %2404 = vmatmul.bf16.gmra.mxu0 %v1704
    %v2405 = vpop.f32.mrf.mxu0
    %v2406 = vadd.f32 %v645, %v2405
    %v2407 = vpop.f32.mrf.mxu0
    %v2408 = vadd.f32 %v645, %v2407
    %2409 = vmatmul.bf16.gmra.mxu0 %v1705
    %v2410 = vpop.f32.mrf.mxu0
    %v2411 = vadd.f32 %v645, %v2410
    %v2412 = vpop.f32.mrf.mxu0
    %v2413 = vadd.f32 %v645, %v2412
    %2414 = vmatmul.bf16.gmra.mxu0 %v1706
    %v2415 = vpop.f32.mrf.mxu0
    %v2416 = vadd.f32 %v645, %v2415
    %v2417 = vpop.f32.mrf.mxu0
    %v2418 = vadd.f32 %v645, %v2417
    %2419 = vmatmul.bf16.gmra.mxu0 %v1707
    %v2420 = vpop.f32.mrf.mxu0
    %v2421 = vadd.f32 %v645, %v2420
    %v2422 = vpop.f32.mrf.mxu0
    %v2423 = vadd.f32 %v645, %v2422
    %2424 = vmatmul.bf16.gmra.mxu0 %v1708
    %v2425 = vpop.f32.mrf.mxu0
    %v2426 = vadd.f32 %v645, %v2425
    %v2427 = vpop.f32.mrf.mxu0
    %v2428 = vadd.f32 %v645, %v2427
    %2429 = vmatmul.bf16.gmra.mxu0 %v1709
    %v2430 = vpop.f32.mrf.mxu0
    %v2431 = vadd.f32 %v645, %v2430
    %v2432 = vpop.f32.mrf.mxu0
    %v2433 = vadd.f32 %v645, %v2432
    %2434 = vmatmul.bf16.gmra.mxu0 %v1710
    %v2435 = vpop.f32.mrf.mxu0
    %v2436 = vadd.f32 %v645, %v2435
    %v2437 = vpop.f32.mrf.mxu0
    %v2438 = vadd.f32 %v645, %v2437
    %2439 = vmatmul.bf16.gmra.mxu0 %v1711
    %v2440 = vpop.f32.mrf.mxu0
    %v2441 = vadd.f32 %v645, %v2440
    %v2442 = vpop.f32.mrf.mxu0
    %v2443 = vadd.f32 %v645, %v2442
    %2444 = vmatmul.bf16.gmra.mxu0 %v1712
    %v2445 = vpop.f32.mrf.mxu0
    %v2446 = vadd.f32 %v645, %v2445
    %v2447 = vpop.f32.mrf.mxu0
    %v2448 = vadd.f32 %v645, %v2447
    %2449 = vmatmul.bf16.gmra.mxu0 %v1713
    %v2450 = vpop.f32.mrf.mxu0
    %v2451 = vadd.f32 %v645, %v2450
    %v2452 = vpop.f32.mrf.mxu0
    %v2453 = vadd.f32 %v645, %v2452
    %2454 = vmatmul.bf16.gmra.mxu0 %v1714
    %v2455 = vpop.f32.mrf.mxu0
    %v2456 = vadd.f32 %v645, %v2455
    %v2457 = vpop.f32.mrf.mxu0
    %v2458 = vadd.f32 %v645, %v2457
    %2459 = vmatmul.bf16.gmra.mxu0 %v1715
    %v2460 = vpop.f32.mrf.mxu0
    %v2461 = vadd.f32 %v645, %v2460
    %v2462 = vpop.f32.mrf.mxu0
    %v2463 = vadd.f32 %v645, %v2462
    %2464 = vmatmul.bf16.gmra.mxu0 %v1716
    %v2465 = vpop.f32.mrf.mxu0
    %v2466 = vadd.f32 %v645, %v2465
    %v2467 = vpop.f32.mrf.mxu0
    %v2468 = vadd.f32 %v645, %v2467
    %2469 = vmatmul.bf16.gmra.mxu0 %v1717
    %v2470 = vpop.f32.mrf.mxu0
    %v2471 = vadd.f32 %v645, %v2470
    %v2472 = vpop.f32.mrf.mxu0
    %v2473 = vadd.f32 %v645, %v2472
    %2474 = vmatmul.bf16.gmra.mxu0 %v1718
    %v2475 = vpop.f32.mrf.mxu0
    %v2476 = vadd.f32 %v645, %v2475
    %v2477 = vpop.f32.mrf.mxu0
    %v2478 = vadd.f32 %v645, %v2477
    %2479 = vmatmul.bf16.gmra.mxu0 %v1719
    %v2480 = vpop.f32.mrf.mxu0
    %v2481 = vadd.f32 %v645, %v2480
    %v2482 = vpop.f32.mrf.mxu0
    %v2483 = vadd.f32 %v645, %v2482
    %2484 = vmatmul.bf16.gmra.mxu0 %v1720
    %v2485 = vpop.f32.mrf.mxu0
    %v2486 = vadd.f32 %v645, %v2485
    %v2487 = vpop.f32.mrf.mxu0
    %v2488 = vadd.f32 %v645, %v2487
    %2489 = vmatmul.bf16.gmra.mxu0 %v1721
    %v2490 = vpop.f32.mrf.mxu0
    %v2491 = vadd.f32 %v645, %v2490
    %v2492 = vpop.f32.mrf.mxu0
    %v2493 = vadd.f32 %v645, %v2492
    %2494 = vmatmul.bf16.gmra.mxu0 %v1722
    %v2495 = vpop.f32.mrf.mxu0
    %v2496 = vadd.f32 %v645, %v2495
    %v2497 = vpop.f32.mrf.mxu0
    %v2498 = vadd.f32 %v645, %v2497
    %2499 = vmatmul.bf16.gmra.mxu0 %v1723
    %v2500 = vpop.f32.mrf.mxu0
    %v2501 = vadd.f32 %v645, %v2500
    %v2502 = vpop.f32.mrf.mxu0
    %v2503 = vadd.f32 %v645, %v2502
    %2504 = vmatmul.bf16.gmra.mxu0 %v1724
    %v2505 = vpop.f32.mrf.mxu0
    %v2506 = vadd.f32 %v645, %v2505
    %v2507 = vpop.f32.mrf.mxu0
    %v2508 = vadd.f32 %v645, %v2507
    %2509 = vmatmul.bf16.gmra.mxu0 %v1725
    %v2510 = vpop.f32.mrf.mxu0
    %v2511 = vadd.f32 %v645, %v2510
    %v2512 = vpop.f32.mrf.mxu0
    %v2513 = vadd.f32 %v645, %v2512
    %2514 = vmatmul.bf16.gmra.mxu0 %v1726
    %v2515 = vpop.f32.mrf.mxu0
    %v2516 = vadd.f32 %v645, %v2515
    %v2517 = vpop.f32.mrf.mxu0
    %v2518 = vadd.f32 %v645, %v2517
    %2519 = vmatmul.bf16.gmra.mxu0 %v1727
    %v2520 = vpop.f32.mrf.mxu0
    %v2521 = vadd.f32 %v645, %v2520
    %v2522 = vpop.f32.mrf.mxu0
    %v2523 = vadd.f32 %v645, %v2522
    %2524 = vmatmul.bf16.gmra.mxu0 %v1728
    %v2525 = vpop.f32.mrf.mxu0
    %v2526 = vadd.f32 %v645, %v2525
    %v2527 = vpop.f32.mrf.mxu0
    %v2528 = vadd.f32 %v645, %v2527
    %2529 = vmatmul.bf16.gmra.mxu0 %v1729
    %v2530 = vpop.f32.mrf.mxu0
    %v2531 = vadd.f32 %v645, %v2530
    %v2532 = vpop.f32.mrf.mxu0
    %v2533 = vadd.f32 %v645, %v2532
    %2534 = vmatmul.bf16.gmra.mxu0 %v1730
    %v2535 = vpop.f32.mrf.mxu0
    %v2536 = vadd.f32 %v645, %v2535
    %v2537 = vpop.f32.mrf.mxu0
    %v2538 = vadd.f32 %v645, %v2537
    %2539 = vmatmul.bf16.gmra.mxu0 %v1731
    %v2540 = vpop.f32.mrf.mxu0
    %v2541 = vadd.f32 %v645, %v2540
    %v2542 = vpop.f32.mrf.mxu0
    %v2543 = vadd.f32 %v645, %v2542
    %2544 = vmatmul.bf16.gmra.mxu0 %v1732
    %v2545 = vpop.f32.mrf.mxu0
    %v2546 = vadd.f32 %v645, %v2545
    %v2547 = vpop.f32.mrf.mxu0
    %v2548 = vadd.f32 %v645, %v2547
    %2549 = vmatmul.bf16.gmra.mxu0 %v1733
    %v2550 = vpop.f32.mrf.mxu0
    %v2551 = vadd.f32 %v645, %v2550
    %v2552 = vpop.f32.mrf.mxu0
    %v2553 = vadd.f32 %v645, %v2552
    %2554 = vmatmul.bf16.gmra.mxu0 %v1734
    %v2555 = vpop.f32.mrf.mxu0
    %v2556 = vadd.f32 %v645, %v2555
    %v2557 = vpop.f32.mrf.mxu0
    %v2558 = vadd.f32 %v645, %v2557
    %2559 = vmatmul.bf16.gmra.mxu0 %v1735
    %v2560 = vpop.f32.mrf.mxu0
    %v2561 = vadd.f32 %v645, %v2560
    %v2562 = vpop.f32.mrf.mxu0
    %v2563 = vadd.f32 %v645, %v2562
    %2564 = vmatmul.bf16.gmra.mxu0 %v1736
    %v2565 = vpop.f32.mrf.mxu0
    %v2566 = vadd.f32 %v645, %v2565
    %v2567 = vpop.f32.mrf.mxu0
    %v2568 = vadd.f32 %v645, %v2567
    %2569 = vmatmul.bf16.gmra.mxu0 %v1737
    %v2570 = vpop.f32.mrf.mxu0
    %v2571 = vadd.f32 %v645, %v2570
    %v2572 = vpop.f32.mrf.mxu0
    %v2573 = vadd.f32 %v645, %v2572
    %2574 = vmatmul.bf16.gmra.mxu0 %v1738
    %v2575 = vpop.f32.mrf.mxu0
    %v2576 = vadd.f32 %v645, %v2575
    %v2577 = vpop.f32.mrf.mxu0
    %v2578 = vadd.f32 %v645, %v2577
    %2579 = vmatmul.bf16.gmra.mxu0 %v1739
    %v2580 = vpop.f32.mrf.mxu0
    %v2581 = vadd.f32 %v645, %v2580
    %v2582 = vpop.f32.mrf.mxu0
    %v2583 = vadd.f32 %v645, %v2582
    %2584 = vmatmul.bf16.gmra.mxu0 %v1740
    %v2585 = vpop.f32.mrf.mxu0
    %v2586 = vadd.f32 %v645, %v2585
    %v2587 = vpop.f32.mrf.mxu0
    %v2588 = vadd.f32 %v645, %v2587
    %2589 = vmatmul.bf16.gmra.mxu0 %v1741
    %v2590 = vpop.f32.mrf.mxu0
    %v2591 = vadd.f32 %v645, %v2590
    %v2592 = vpop.f32.mrf.mxu0
    %v2593 = vadd.f32 %v645, %v2592
    %2594 = vmatmul.bf16.gmra.mxu0 %v1742
    %v2595 = vpop.f32.mrf.mxu0
    %v2596 = vadd.f32 %v645, %v2595
    %v2597 = vpop.f32.mrf.mxu0
    %v2598 = vadd.f32 %v645, %v2597
    %2599 = vmatmul.bf16.gmra.mxu0 %v1743
    %v2600 = vpop.f32.mrf.mxu0
    %v2601 = vadd.f32 %v645, %v2600
    %v2602 = vpop.f32.mrf.mxu0
    %v2603 = vadd.f32 %v645, %v2602
    %2604 = vmatmul.bf16.gmra.mxu0 %v1744
    %v2605 = vpop.f32.mrf.mxu0
    %v2606 = vadd.f32 %v645, %v2605
    %v2607 = vpop.f32.mrf.mxu0
    %v2608 = vadd.f32 %v645, %v2607
    %2609 = vmatmul.bf16.gmra.mxu0 %v1745
    %v2610 = vpop.f32.mrf.mxu0
    %v2611 = vadd.f32 %v645, %v2610
    %v2612 = vpop.f32.mrf.mxu0
    %v2613 = vadd.f32 %v645, %v2612
    %2614 = vmatmul.bf16.gmra.mxu0 %v1746
    %v2615 = vpop.f32.mrf.mxu0
    %v2616 = vadd.f32 %v645, %v2615
    %v2617 = vpop.f32.mrf.mxu0
    %v2618 = vadd.f32 %v645, %v2617
    %2619 = vmatmul.bf16.gmra.mxu0 %v1747
    %v2620 = vpop.f32.mrf.mxu0
    %v2621 = vadd.f32 %v645, %v2620
    %v2622 = vpop.f32.mrf.mxu0
    %v2623 = vadd.f32 %v645, %v2622
    %2624 = vmatmul.bf16.gmra.mxu0 %v1748
    %v2625 = vpop.f32.mrf.mxu0
    %v2626 = vadd.f32 %v645, %v2625
    %v2627 = vpop.f32.mrf.mxu0
    %v2628 = vadd.f32 %v645, %v2627
    %2629 = vmatmul.bf16.gmra.mxu0 %v1749
    %v2630 = vpop.f32.mrf.mxu0
    %v2631 = vadd.f32 %v645, %v2630
    %v2632 = vpop.f32.mrf.mxu0
    %v2633 = vadd.f32 %v645, %v2632
    %2634 = vmatmul.bf16.gmra.mxu0 %v1750
    %v2635 = vpop.f32.mrf.mxu0
    %v2636 = vadd.f32 %v645, %v2635
    %v2637 = vpop.f32.mrf.mxu0
    %v2638 = vadd.f32 %v645, %v2637
    %2639 = vmatmul.bf16.gmra.mxu0 %v1751
    %v2640 = vpop.f32.mrf.mxu0
    %v2641 = vadd.f32 %v645, %v2640
    %v2642 = vpop.f32.mrf.mxu0
    %v2643 = vadd.f32 %v645, %v2642
    %2644 = vmatmul.bf16.gmra.mxu0 %v1752
    %v2645 = vpop.f32.mrf.mxu0
    %v2646 = vadd.f32 %v645, %v2645
    %v2647 = vpop.f32.mrf.mxu0
    %v2648 = vadd.f32 %v645, %v2647
    %2649 = vmatmul.bf16.gmra.mxu0 %v1753
    %v2650 = vpop.f32.mrf.mxu0
    %v2651 = vadd.f32 %v645, %v2650
    %v2652 = vpop.f32.mrf.mxu0
    %v2653 = vadd.f32 %v645, %v2652
    %2654 = vmatmul.bf16.gmra.mxu0 %v1754
    %v2655 = vpop.f32.mrf.mxu0
    %v2656 = vadd.f32 %v645, %v2655
    %v2657 = vpop.f32.mrf.mxu0
    %v2658 = vadd.f32 %v645, %v2657
    %2659 = vmatmul.bf16.gmra.mxu0 %v1755
    %v2660 = vpop.f32.mrf.mxu0
    %v2661 = vadd.f32 %v645, %v2660
    %v2662 = vpop.f32.mrf.mxu0
    %v2663 = vadd.f32 %v645, %v2662
    %2664 = vmatmul.bf16.gmra.mxu0 %v1756
    %v2665 = vpop.f32.mrf.mxu0
    %v2666 = vadd.f32 %v645, %v2665
    %v2667 = vpop.f32.mrf.mxu0
    %v2668 = vadd.f32 %v645, %v2667
    %2669 = vmatmul.bf16.gmra.mxu0 %v1757
    %v2670 = vpop.f32.mrf.mxu0
    %v2671 = vadd.f32 %v645, %v2670
    %v2672 = vpop.f32.mrf.mxu0
    %v2673 = vadd.f32 %v645, %v2672
    %2674 = vmatmul.bf16.gmra.mxu0 %v1758
    %v2675 = vpop.f32.mrf.mxu0
    %v2676 = vadd.f32 %v645, %v2675
    %v2677 = vpop.f32.mrf.mxu0
    %v2678 = vadd.f32 %v645, %v2677
    %2679 = vmatmul.bf16.gmra.mxu0 %v1759
    %v2680 = vpop.f32.mrf.mxu0
    %v2681 = vadd.f32 %v645, %v2680
    %v2682 = vpop.f32.mrf.mxu0
    %v2683 = vadd.f32 %v645, %v2682
    %2684 = vmatmul.bf16.gmra.mxu0 %v1760
    %v2685 = vpop.f32.mrf.mxu0
    %v2686 = vadd.f32 %v645, %v2685
    %v2687 = vpop.f32.mrf.mxu0
    %v2688 = vadd.f32 %v645, %v2687
    %2689 = vmatmul.bf16.gmra.mxu0 %v1761
    %v2690 = vpop.f32.mrf.mxu0
    %v2691 = vadd.f32 %v645, %v2690
    %v2692 = vpop.f32.mrf.mxu0
    %v2693 = vadd.f32 %v645, %v2692
    %2694 = vmatmul.bf16.gmra.mxu0 %v1762
    %v2695 = vpop.f32.mrf.mxu0
    %v2696 = vadd.f32 %v645, %v2695
    %v2697 = vpop.f32.mrf.mxu0
    %v2698 = vadd.f32 %v645, %v2697
    %2699 = vmatmul.bf16.gmra.mxu0 %v1763
    %v2700 = vpop.f32.mrf.mxu0
    %v2701 = vadd.f32 %v645, %v2700
    %v2702 = vpop.f32.mrf.mxu0
    %v2703 = vadd.f32 %v645, %v2702
    %2704 = vmatmul.bf16.gmra.mxu0 %v1764
    %v2705 = vpop.f32.mrf.mxu0
    %v2706 = vadd.f32 %v645, %v2705
    %v2707 = vpop.f32.mrf.mxu0
    %v2708 = vadd.f32 %v645, %v2707
    %2709 = vmatmul.bf16.gmra.mxu0 %v1765
    %v2710 = vpop.f32.mrf.mxu0
    %v2711 = vadd.f32 %v645, %v2710
    %v2712 = vpop.f32.mrf.mxu0
    %v2713 = vadd.f32 %v645, %v2712
    %2714 = vmatmul.bf16.gmra.mxu0 %v1766
    %v2715 = vpop.f32.mrf.mxu0
    %v2716 = vadd.f32 %v645, %v2715
    %v2717 = vpop.f32.mrf.mxu0
    %v2718 = vadd.f32 %v645, %v2717
    %2719 = vmatmul.bf16.gmra.mxu0 %v1767
    %v2720 = vpop.f32.mrf.mxu0
    %v2721 = vadd.f32 %v645, %v2720
    %v2722 = vpop.f32.mrf.mxu0
    %v2723 = vadd.f32 %v645, %v2722
    %2724 = vmatmul.bf16.gmra.mxu0 %v1768
    %v2725 = vpop.f32.mrf.mxu0
    %v2726 = vadd.f32 %v645, %v2725
    %v2727 = vpop.f32.mrf.mxu0
    %v2728 = vadd.f32 %v645, %v2727
    %2729 = vmatmul.bf16.gmra.mxu0 %v1769
    %v2730 = vpop.f32.mrf.mxu0
    %v2731 = vadd.f32 %v645, %v2730
    %v2732 = vpop.f32.mrf.mxu0
    %v2733 = vadd.f32 %v645, %v2732
    %2734 = vmatmul.bf16.gmra.mxu0 %v1770
    %v2735 = vpop.f32.mrf.mxu0
    %v2736 = vadd.f32 %v645, %v2735
    %v2737 = vpop.f32.mrf.mxu0
    %v2738 = vadd.f32 %v645, %v2737
    %2739 = vmatmul.bf16.gmra.mxu0 %v1771
    %v2740 = vpop.f32.mrf.mxu0
    %v2741 = vadd.f32 %v645, %v2740
    %v2742 = vpop.f32.mrf.mxu0
    %v2743 = vadd.f32 %v645, %v2742
    %2744 = vmatmul.bf16.gmra.mxu0 %v1772
    %v2745 = vpop.f32.mrf.mxu0
    %v2746 = vadd.f32 %v645, %v2745
    %v2747 = vpop.f32.mrf.mxu0
    %v2748 = vadd.f32 %v645, %v2747
    %2749 = vmatmul.bf16.gmra.mxu0 %v1773
    %v2750 = vpop.f32.mrf.mxu0
    %v2751 = vadd.f32 %v645, %v2750
    %v2752 = vpop.f32.mrf.mxu0
    %v2753 = vadd.f32 %v645, %v2752
    %2754 = vmatmul.bf16.gmra.mxu0 %v1774
    %v2755 = vpop.f32.mrf.mxu0
    %v2756 = vadd.f32 %v645, %v2755
    %v2757 = vpop.f32.mrf.mxu0
    %v2758 = vadd.f32 %v645, %v2757
    %2759 = vmatmul.bf16.gmra.mxu0 %v1775
    %v2760 = vpop.f32.mrf.mxu0
    %v2761 = vadd.f32 %v645, %v2760
    %v2762 = vpop.f32.mrf.mxu0
    %v2763 = vadd.f32 %v645, %v2762
    %2764 = vmatmul.bf16.gmra.mxu0 %v1776
    %v2765 = vpop.f32.mrf.mxu0
    %v2766 = vadd.f32 %v645, %v2765
    %v2767 = vpop.f32.mrf.mxu0
    %v2768 = vadd.f32 %v645, %v2767
    %2769 = vmatmul.bf16.gmra.mxu0 %v1777
    %v2770 = vpop.f32.mrf.mxu0
    %v2771 = vadd.f32 %v645, %v2770
    %v2772 = vpop.f32.mrf.mxu0
    %v2773 = vadd.f32 %v645, %v2772
    %2774 = vmatmul.bf16.gmra.mxu0 %v1778
    %v2775 = vpop.f32.mrf.mxu0
    %v2776 = vadd.f32 %v645, %v2775
    %v2777 = vpop.f32.mrf.mxu0
    %v2778 = vadd.f32 %v645, %v2777
    %2779 = vmatmul.bf16.gmra.mxu0 %v1779
    %v2780 = vpop.f32.mrf.mxu0
    %v2781 = vadd.f32 %v645, %v2780
    %v2782 = vpop.f32.mrf.mxu0
    %v2783 = vadd.f32 %v645, %v2782
    %2784 = vmatmul.bf16.gmra.mxu0 %v1780
    %v2785 = vpop.f32.mrf.mxu0
    %v2786 = vadd.f32 %v645, %v2785
    %v2787 = vpop.f32.mrf.mxu0
    %v2788 = vadd.f32 %v645, %v2787
    %2789 = vmatmul.bf16.gmra.mxu0 %v1781
    %v2790 = vpop.f32.mrf.mxu0
    %v2791 = vadd.f32 %v645, %v2790
    %v2792 = vpop.f32.mrf.mxu0
    %v2793 = vadd.f32 %v645, %v2792
    %2794 = vmatmul.bf16.gmra.mxu0 %v1782
    %v2795 = vpop.f32.mrf.mxu0
    %v2796 = vadd.f32 %v645, %v2795
    %v2797 = vpop.f32.mrf.mxu0
    %v2798 = vadd.f32 %v645, %v2797
    %2799 = vmatmul.bf16.gmra.mxu0 %v1783
    %v2800 = vpop.f32.mrf.mxu0
    %v2801 = vadd.f32 %v645, %v2800
    %v2802 = vpop.f32.mrf.mxu0
    %v2803 = vadd.f32 %v645, %v2802
    %2804 = vmatmul.bf16.gmra.mxu0 %v1784
    %v2805 = vpop.f32.mrf.mxu0
    %v2806 = vadd.f32 %v645, %v2805
    %v2807 = vpop.f32.mrf.mxu0
    %v2808 = vadd.f32 %v645, %v2807
    %2809 = vmatmul.bf16.gmra.mxu0 %v1785
    %v2810 = vpop.f32.mrf.mxu0
    %v2811 = vadd.f32 %v645, %v2810
    %v2812 = vpop.f32.mrf.mxu0
    %v2813 = vadd.f32 %v645, %v2812
    %2814 = vmatmul.bf16.gmra.mxu0 %v1786
    %v2815 = vpop.f32.mrf.mxu0
    %v2816 = vadd.f32 %v645, %v2815
    %v2817 = vpop.f32.mrf.mxu0
    %v2818 = vadd.f32 %v645, %v2817
    %2819 = vmatmul.bf16.gmra.mxu0 %v1787
    %v2820 = vpop.f32.mrf.mxu0
    %v2821 = vadd.f32 %v645, %v2820
    %v2822 = vpop.f32.mrf.mxu0
    %v2823 = vadd.f32 %v645, %v2822
    %2824 = vmatmul.bf16.gmra.mxu0 %v1788
    %v2825 = vpop.f32.mrf.mxu0
    %v2826 = vadd.f32 %v645, %v2825
    %v2827 = vpop.f32.mrf.mxu0
    %v2828 = vadd.f32 %v645, %v2827
    %2829 = vmatmul.bf16.gmra.mxu0 %v1789
    %v2830 = vpop.f32.mrf.mxu0
    %v2831 = vadd.f32 %v645, %v2830
    %v2832 = vpop.f32.mrf.mxu0
    %v2833 = vadd.f32 %v645, %v2832
    %2834 = vmatmul.bf16.gmra.mxu0 %v1790
    %v2835 = vpop.f32.mrf.mxu0
    %v2836 = vadd.f32 %v645, %v2835
    %v2837 = vpop.f32.mrf.mxu0
    %v2838 = vadd.f32 %v645, %v2837
    %2839 = vmatmul.bf16.gmra.mxu0 %v1791
    %v2840 = vpop.f32.mrf.mxu0
    %v2841 = vadd.f32 %v645, %v2840
    %v2842 = vpop.f32.mrf.mxu0
    %v2843 = vadd.f32 %v645, %v2842
    %2844 = vmatmul.bf16.gmra.mxu0 %v1792
    %v2845 = vpop.f32.mrf.mxu0
    %v2846 = vadd.f32 %v645, %v2845
    %v2847 = vpop.f32.mrf.mxu0
    %v2848 = vadd.f32 %v645, %v2847
    %2849 = vmatmul.bf16.gmra.mxu0 %v1793
    %v2850 = vpop.f32.mrf.mxu0
    %v2851 = vadd.f32 %v645, %v2850
    %v2852 = vpop.f32.mrf.mxu0
    %v2853 = vadd.f32 %v645, %v2852
    %2854 = vmatmul.bf16.gmra.mxu0 %v1794
    %v2855 = vpop.f32.mrf.mxu0
    %v2856 = vadd.f32 %v645, %v2855
    %v2857 = vpop.f32.mrf.mxu0
    %v2858 = vadd.f32 %v645, %v2857
    %2859 = vmatmul.bf16.gmra.mxu0 %v1795
    %v2860 = vpop.f32.mrf.mxu0
    %v2861 = vadd.f32 %v645, %v2860
    %v2862 = vpop.f32.mrf.mxu0
    %v2863 = vadd.f32 %v645, %v2862
    %2864 = vmatmul.bf16.gmra.mxu0 %v1796
    %v2865 = vpop.f32.mrf.mxu0
    %v2866 = vadd.f32 %v645, %v2865
    %v2867 = vpop.f32.mrf.mxu0
    %v2868 = vadd.f32 %v645, %v2867
    %2869 = vmatmul.bf16.gmra.mxu0 %v1797
    %v2870 = vpop.f32.mrf.mxu0
    %v2871 = vadd.f32 %v645, %v2870
    %v2872 = vpop.f32.mrf.mxu0
    %v2873 = vadd.f32 %v645, %v2872
    %2874 = vmatmul.bf16.gmra.mxu0 %v1798
    %v2875 = vpop.f32.mrf.mxu0
    %v2876 = vadd.f32 %v645, %v2875
    %v2877 = vpop.f32.mrf.mxu0
    %v2878 = vadd.f32 %v645, %v2877
    %2879 = vmatmul.bf16.gmra.mxu0 %v1799
    %v2880 = vpop.f32.mrf.mxu0
    %v2881 = vadd.f32 %v645, %v2880
    %v2882 = vpop.f32.mrf.mxu0
    %v2883 = vadd.f32 %v645, %v2882
    %2884 = vmatmul.bf16.gmra.mxu0 %v1800
    %v2885 = vpop.f32.mrf.mxu0
    %v2886 = vadd.f32 %v645, %v2885
    %v2887 = vpop.f32.mrf.mxu0
    %v2888 = vadd.f32 %v645, %v2887
    %2889 = vmatmul.bf16.gmra.mxu0 %v1801
    %v2890 = vpop.f32.mrf.mxu0
    %v2891 = vadd.f32 %v645, %v2890
    %v2892 = vpop.f32.mrf.mxu0
    %v2893 = vadd.f32 %v645, %v2892
    %2894 = vmatmul.bf16.gmra.mxu0 %v1802
    %v2895 = vpop.f32.mrf.mxu0
    %v2896 = vadd.f32 %v645, %v2895
    %v2897 = vpop.f32.mrf.mxu0
    %v2898 = vadd.f32 %v645, %v2897
    %2899 = vmatmul.bf16.gmra.mxu0 %v1803
    %v2900 = vpop.f32.mrf.mxu0
    %v2901 = vadd.f32 %v645, %v2900
    %v2902 = vpop.f32.mrf.mxu0
    %v2903 = vadd.f32 %v645, %v2902
    %2904 = vmatmul.bf16.gmra.mxu0 %v1804
    %v2905 = vpop.f32.mrf.mxu0
    %v2906 = vadd.f32 %v645, %v2905
    %v2907 = vpop.f32.mrf.mxu0
    %v2908 = vadd.f32 %v645, %v2907
    %2909 = vmatmul.bf16.gmra.mxu0 %v1805
    %v2910 = vpop.f32.mrf.mxu0
    %v2911 = vadd.f32 %v645, %v2910
    %v2912 = vpop.f32.mrf.mxu0
    %v2913 = vadd.f32 %v645, %v2912
    %2914 = vmatmul.bf16.gmra.mxu0 %v1806
    %v2915 = vpop.f32.mrf.mxu0
    %v2916 = vadd.f32 %v645, %v2915
    %v2917 = vpop.f32.mrf.mxu0
    %v2918 = vadd.f32 %v645, %v2917
    %2919 = vmatmul.bf16.gmra.mxu0 %v1807
    %v2920 = vpop.f32.mrf.mxu0
    %v2921 = vadd.f32 %v645, %v2920
    %v2922 = vpop.f32.mrf.mxu0
    %v2923 = vadd.f32 %v645, %v2922
    %2924 = vmatmul.bf16.gmra.mxu0 %v1808
    %v2925 = vpop.f32.mrf.mxu0
    %v2926 = vadd.f32 %v645, %v2925
    %v2927 = vpop.f32.mrf.mxu0
    %v2928 = vadd.f32 %v645, %v2927
    %2929 = vmatmul.bf16.gmra.mxu0 %v1809
    %v2930 = vpop.f32.mrf.mxu0
    %v2931 = vadd.f32 %v645, %v2930
    %v2932 = vpop.f32.mrf.mxu0
    %v2933 = vadd.f32 %v645, %v2932
    %2934 = vmatmul.bf16.gmra.mxu0 %v1810
    %v2935 = vpop.f32.mrf.mxu0
    %v2936 = vadd.f32 %v645, %v2935
    %v2937 = vpop.f32.mrf.mxu0
    %v2938 = vadd.f32 %v645, %v2937
    %2939 = vmatmul.bf16.gmra.mxu0 %v1811
    %v2940 = vpop.f32.mrf.mxu0
    %v2941 = vadd.f32 %v645, %v2940
    %v2942 = vpop.f32.mrf.mxu0
    %v2943 = vadd.f32 %v645, %v2942
    %2944 = vmatmul.bf16.gmra.mxu0 %v1812
    %v2945 = vpop.f32.mrf.mxu0
    %v2946 = vadd.f32 %v645, %v2945
    %v2947 = vpop.f32.mrf.mxu0
    %v2948 = vadd.f32 %v645, %v2947
    %2949 = vmatmul.bf16.gmra.mxu0 %v1813
    %v2950 = vpop.f32.mrf.mxu0
    %v2951 = vadd.f32 %v645, %v2950
    %v2952 = vpop.f32.mrf.mxu0
    %v2953 = vadd.f32 %v645, %v2952
    %2954 = vmatmul.bf16.gmra.mxu0 %v1814
    %v2955 = vpop.f32.mrf.mxu0
    %v2956 = vadd.f32 %v645, %v2955
    %v2957 = vpop.f32.mrf.mxu0
    %v2958 = vadd.f32 %v645, %v2957
    %2959 = vmatmul.bf16.gmra.mxu0 %v1815
    %v2960 = vpop.f32.mrf.mxu0
    %v2961 = vadd.f32 %v645, %v2960
    %v2962 = vpop.f32.mrf.mxu0
    %v2963 = vadd.f32 %v645, %v2962
    %2964 = vmatmul.bf16.gmra.mxu0 %v1816
    %v2965 = vpop.f32.mrf.mxu0
    %v2966 = vadd.f32 %v645, %v2965
    %v2967 = vpop.f32.mrf.mxu0
    %v2968 = vadd.f32 %v645, %v2967
    %2969 = vmatmul.bf16.gmra.mxu0 %v1817
    %v2970 = vpop.f32.mrf.mxu0
    %v2971 = vadd.f32 %v645, %v2970
    %v2972 = vpop.f32.mrf.mxu0
    %v2973 = vadd.f32 %v645, %v2972
    %2974 = vmatmul.bf16.gmra.mxu0 %v1818
    %v2975 = vpop.f32.mrf.mxu0
    %v2976 = vadd.f32 %v645, %v2975
    %v2977 = vpop.f32.mrf.mxu0
    %v2978 = vadd.f32 %v645, %v2977
    %2979 = vmatmul.bf16.gmra.mxu0 %v1819
    %v2980 = vpop.f32.mrf.mxu0
    %v2981 = vadd.f32 %v645, %v2980
    %v2982 = vpop.f32.mrf.mxu0
    %v2983 = vadd.f32 %v645, %v2982
    %2984 = vmatmul.bf16.gmra.mxu0 %v1820
    %v2985 = vpop.f32.mrf.mxu0
    %v2986 = vadd.f32 %v645, %v2985
    %v2987 = vpop.f32.mrf.mxu0
    %v2988 = vadd.f32 %v645, %v2987
    %2989 = vmatmul.bf16.gmra.mxu0 %v1821
    %v2990 = vpop.f32.mrf.mxu0
    %v2991 = vadd.f32 %v645, %v2990
    %v2992 = vpop.f32.mrf.mxu0
    %v2993 = vadd.f32 %v645, %v2992
    %2994 = vmatmul.bf16.gmra.mxu0 %v1822
    %v2995 = vpop.f32.mrf.mxu0
    %v2996 = vadd.f32 %v645, %v2995
    %v2997 = vpop.f32.mrf.mxu0
    %v2998 = vadd.f32 %v645, %v2997
    %2999 = vmatmul.bf16.gmra.mxu0 %v1823
    %v3000 = vpop.f32.mrf.mxu0
    %v3001 = vadd.f32 %v645, %v3000
    %v3002 = vpop.f32.mrf.mxu0
    %v3003 = vadd.f32 %v645, %v3002
    %3004 = vmatmul.bf16.gmra.mxu0 %v1824
    %v3005 = vpop.f32.mrf.mxu0
    %v3006 = vadd.f32 %v645, %v3005
    %v3007 = vpop.f32.mrf.mxu0
    %v3008 = vadd.f32 %v645, %v3007
    %3009 = vmatmul.bf16.gmra.mxu0 %v1825
    %v3010 = vpop.f32.mrf.mxu0
    %v3011 = vadd.f32 %v645, %v3010
    %v3012 = vpop.f32.mrf.mxu0
    %v3013 = vadd.f32 %v645, %v3012
    %3014 = vmatmul.bf16.gmra.mxu0 %v1826
    %v3015 = vpop.f32.mrf.mxu0
    %v3016 = vadd.f32 %v645, %v3015
    %v3017 = vpop.f32.mrf.mxu0
    %v3018 = vadd.f32 %v645, %v3017
    %3019 = vmatmul.bf16.gmra.mxu0 %v1827
    %v3020 = vpop.f32.mrf.mxu0
    %v3021 = vadd.f32 %v645, %v3020
    %v3022 = vpop.f32.mrf.mxu0
    %v3023 = vadd.f32 %v645, %v3022
    %3024 = vmatmul.bf16.gmra.mxu0 %v1828
    %v3025 = vpop.f32.mrf.mxu0
    %v3026 = vadd.f32 %v645, %v3025
    %v3027 = vpop.f32.mrf.mxu0
    %v3028 = vadd.f32 %v645, %v3027
    %3029 = vmatmul.bf16.gmra.mxu0 %v1829
    %v3030 = vpop.f32.mrf.mxu0
    %v3031 = vadd.f32 %v645, %v3030
    %v3032 = vpop.f32.mrf.mxu0
    %v3033 = vadd.f32 %v645, %v3032
    %3034 = vmatmul.bf16.gmra.mxu0 %v1830
    %v3035 = vpop.f32.mrf.mxu0
    %v3036 = vadd.f32 %v645, %v3035
    %v3037 = vpop.f32.mrf.mxu0
    %v3038 = vadd.f32 %v645, %v3037
    %3039 = vmatmul.bf16.gmra.mxu0 %v1831
    %v3040 = vpop.f32.mrf.mxu0
    %v3041 = vadd.f32 %v645, %v3040
    %v3042 = vpop.f32.mrf.mxu0
    %v3043 = vadd.f32 %v645, %v3042
    %3044 = vmatmul.bf16.gmra.mxu0 %v1832
    %v3045 = vpop.f32.mrf.mxu0
    %v3046 = vadd.f32 %v645, %v3045
    %v3047 = vpop.f32.mrf.mxu0
    %v3048 = vadd.f32 %v645, %v3047
    %3049 = vmatmul.bf16.gmra.mxu0 %v1833
    %v3050 = vpop.f32.mrf.mxu0
    %v3051 = vadd.f32 %v645, %v3050
    %v3052 = vpop.f32.mrf.mxu0
    %v3053 = vadd.f32 %v645, %v3052
    %3054 = vmatmul.bf16.gmra.mxu0 %v1834
    %v3055 = vpop.f32.mrf.mxu0
    %v3056 = vadd.f32 %v645, %v3055
    %v3057 = vpop.f32.mrf.mxu0
    %v3058 = vadd.f32 %v645, %v3057
    %3059 = vmatmul.bf16.gmra.mxu0 %v1835
    %v3060 = vpop.f32.mrf.mxu0
    %v3061 = vadd.f32 %v645, %v3060
    %v3062 = vpop.f32.mrf.mxu0
    %v3063 = vadd.f32 %v645, %v3062
    %3064 = vmatmul.bf16.gmra.mxu0 %v1836
    %v3065 = vpop.f32.mrf.mxu0
    %v3066 = vadd.f32 %v645, %v3065
    %v3067 = vpop.f32.mrf.mxu0
    %v3068 = vadd.f32 %v645, %v3067
    %3069 = vmatmul.bf16.gmra.mxu0 %v1837
    %v3070 = vpop.f32.mrf.mxu0
    %v3071 = vadd.f32 %v645, %v3070
    %v3072 = vpop.f32.mrf.mxu0
    %v3073 = vadd.f32 %v645, %v3072
    %3074 = vmatmul.bf16.gmra.mxu0 %v1838
    %v3075 = vpop.f32.mrf.mxu0
    %v3076 = vadd.f32 %v645, %v3075
    %v3077 = vpop.f32.mrf.mxu0
    %v3078 = vadd.f32 %v645, %v3077
    %3079 = vmatmul.bf16.gmra.mxu0 %v1839
    %v3080 = vpop.f32.mrf.mxu0
    %v3081 = vadd.f32 %v645, %v3080
    %v3082 = vpop.f32.mrf.mxu0
    %v3083 = vadd.f32 %v645, %v3082
    %3084 = vmatmul.bf16.gmra.mxu0 %v1840
    %v3085 = vpop.f32.mrf.mxu0
    %v3086 = vadd.f32 %v645, %v3085
    %v3087 = vpop.f32.mrf.mxu0
    %v3088 = vadd.f32 %v645, %v3087
    %3089 = vmatmul.bf16.gmra.mxu0 %v1841
    %v3090 = vpop.f32.mrf.mxu0
    %v3091 = vadd.f32 %v645, %v3090
    %v3092 = vpop.f32.mrf.mxu0
    %v3093 = vadd.f32 %v645, %v3092
    %3094 = vmatmul.bf16.gmra.mxu0 %v1842
    %v3095 = vpop.f32.mrf.mxu0
    %v3096 = vadd.f32 %v645, %v3095
    %v3097 = vpop.f32.mrf.mxu0
    %v3098 = vadd.f32 %v645, %v3097
    %3099 = vmatmul.bf16.gmra.mxu0 %v1843
    %v3100 = vpop.f32.mrf.mxu0
    %v3101 = vadd.f32 %v645, %v3100
    %v3102 = vpop.f32.mrf.mxu0
    %v3103 = vadd.f32 %v645, %v3102
    %3104 = vmatmul.bf16.gmra.mxu0 %v1844
    %v3105 = vpop.f32.mrf.mxu0
    %v3106 = vadd.f32 %v645, %v3105
    %v3107 = vpop.f32.mrf.mxu0
    %v3108 = vadd.f32 %v645, %v3107
    %3109 = vmatmul.bf16.gmra.mxu0 %v1845
    %v3110 = vpop.f32.mrf.mxu0
    %v3111 = vadd.f32 %v645, %v3110
    %v3112 = vpop.f32.mrf.mxu0
    %v3113 = vadd.f32 %v645, %v3112
    %3114 = vmatmul.bf16.gmra.mxu0 %v1846
    %v3115 = vpop.f32.mrf.mxu0
    %v3116 = vadd.f32 %v645, %v3115
    %v3117 = vpop.f32.mrf.mxu0
    %v3118 = vadd.f32 %v645, %v3117
    %3119 = vmatmul.bf16.gmra.mxu0 %v1847
    %v3120 = vpop.f32.mrf.mxu0
    %v3121 = vadd.f32 %v645, %v3120
    %v3122 = vpop.f32.mrf.mxu0
    %v3123 = vadd.f32 %v645, %v3122
    %3124 = vmatmul.bf16.gmra.mxu0 %v1848
    %v3125 = vpop.f32.mrf.mxu0
    %v3126 = vadd.f32 %v645, %v3125
    %v3127 = vpop.f32.mrf.mxu0
    %v3128 = vadd.f32 %v645, %v3127
    %3129 = vmatmul.bf16.gmra.mxu0 %v1849
    %v3130 = vpop.f32.mrf.mxu0
    %v3131 = vadd.f32 %v645, %v3130
    %v3132 = vpop.f32.mrf.mxu0
    %v3133 = vadd.f32 %v645, %v3132
    %3134 = vmatmul.bf16.gmra.mxu0 %v1850
    %v3135 = vpop.f32.mrf.mxu0
    %v3136 = vadd.f32 %v645, %v3135
    %v3137 = vpop.f32.mrf.mxu0
    %v3138 = vadd.f32 %v645, %v3137
    %3139 = vmatmul.bf16.gmra.mxu0 %v1851
    %v3140 = vpop.f32.mrf.mxu0
    %v3141 = vadd.f32 %v645, %v3140
    %v3142 = vpop.f32.mrf.mxu0
    %v3143 = vadd.f32 %v645, %v3142
    %3144 = vmatmul.bf16.gmra.mxu0 %v1852
    %v3145 = vpop.f32.mrf.mxu0
    %v3146 = vadd.f32 %v645, %v3145
    %v3147 = vpop.f32.mrf.mxu0
    %v3148 = vadd.f32 %v645, %v3147
    %3149 = vmatmul.bf16.gmra.mxu0 %v1853
    %v3150 = vpop.f32.mrf.mxu0
    %v3151 = vadd.f32 %v645, %v3150
    %v3152 = vpop.f32.mrf.mxu0
    %v3153 = vadd.f32 %v645, %v3152
    %3154 = vmatmul.bf16.gmra.mxu0 %v1854
    %v3155 = vpop.f32.mrf.mxu0
    %v3156 = vadd.f32 %v645, %v3155
    %v3157 = vpop.f32.mrf.mxu0
    %v3158 = vadd.f32 %v645, %v3157
    %3159 = vmatmul.bf16.gmra.mxu0 %v1855
    %v3160 = vpop.f32.mrf.mxu0
    %v3161 = vadd.f32 %v645, %v3160
    %v3162 = vpop.f32.mrf.mxu0
    %v3163 = vadd.f32 %v645, %v3162
    %3164 = vmatmul.bf16.gmra.mxu0 %v1856
    %v3165 = vpop.f32.mrf.mxu0
    %v3166 = vadd.f32 %v645, %v3165
    %v3167 = vpop.f32.mrf.mxu0
    %v3168 = vadd.f32 %v645, %v3167
    %3169 = vmatmul.bf16.gmra.mxu0 %v1857
    %v3170 = vpop.f32.mrf.mxu0
    %v3171 = vadd.f32 %v645, %v3170
    %v3172 = vpop.f32.mrf.mxu0
    %v3173 = vadd.f32 %v645, %v3172
    %3174 = vmatmul.bf16.gmra.mxu0 %v1858
    %v3175 = vpop.f32.mrf.mxu0
    %v3176 = vadd.f32 %v645, %v3175
    %v3177 = vpop.f32.mrf.mxu0
    %v3178 = vadd.f32 %v645, %v3177
    %3179 = vmatmul.bf16.gmra.mxu0 %v1859
    %v3180 = vpop.f32.mrf.mxu0
    %v3181 = vadd.f32 %v645, %v3180
    %v3182 = vpop.f32.mrf.mxu0
    %v3183 = vadd.f32 %v645, %v3182
    %3184 = vmatmul.bf16.gmra.mxu0 %v1860
    %v3185 = vpop.f32.mrf.mxu0
    %v3186 = vadd.f32 %v645, %v3185
    %v3187 = vpop.f32.mrf.mxu0
    %v3188 = vadd.f32 %v645, %v3187
    %3189 = vmatmul.bf16.gmra.mxu0 %v1861
    %v3190 = vpop.f32.mrf.mxu0
    %v3191 = vadd.f32 %v645, %v3190
    %v3192 = vpop.f32.mrf.mxu0
    %v3193 = vadd.f32 %v645, %v3192
    %3194 = vmatmul.bf16.gmra.mxu0 %v1862
    %v3195 = vpop.f32.mrf.mxu0
    %v3196 = vadd.f32 %v645, %v3195
    %v3197 = vpop.f32.mrf.mxu0
    %v3198 = vadd.f32 %v645, %v3197
    %3199 = vmatmul.bf16.gmra.mxu0 %v1863
    %v3200 = vpop.f32.mrf.mxu0
    %v3201 = vadd.f32 %v645, %v3200
    %v3202 = vpop.f32.mrf.mxu0
    %v3203 = vadd.f32 %v645, %v3202
    %3204 = vmatmul.bf16.gmra.mxu0 %v1864
    %v3205 = vpop.f32.mrf.mxu0
    %v3206 = vadd.f32 %v645, %v3205
    %v3207 = vpop.f32.mrf.mxu0
    %v3208 = vadd.f32 %v645, %v3207
    %3209 = vmatmul.bf16.gmra.mxu0 %v1865
    %v3210 = vpop.f32.mrf.mxu0
    %v3211 = vadd.f32 %v645, %v3210
    %v3212 = vpop.f32.mrf.mxu0
    %v3213 = vadd.f32 %v645, %v3212
    %3214 = vmatmul.bf16.gmra.mxu0 %v1866
    %v3215 = vpop.f32.mrf.mxu0
    %v3216 = vadd.f32 %v645, %v3215
    %v3217 = vpop.f32.mrf.mxu0
    %v3218 = vadd.f32 %v645, %v3217
    %3219 = vmatmul.bf16.gmra.mxu0 %v1867
    %v3220 = vpop.f32.mrf.mxu0
    %v3221 = vadd.f32 %v645, %v3220
    %v3222 = vpop.f32.mrf.mxu0
    %v3223 = vadd.f32 %v645, %v3222
    %3224 = vmatmul.bf16.gmra.mxu0 %v1868
    %v3225 = vpop.f32.mrf.mxu0
    %v3226 = vadd.f32 %v645, %v3225
    %v3227 = vpop.f32.mrf.mxu0
    %v3228 = vadd.f32 %v645, %v3227
    %3229 = vmatmul.bf16.gmra.mxu0 %v1869
    %v3230 = vpop.f32.mrf.mxu0
    %v3231 = vadd.f32 %v645, %v3230
    %v3232 = vpop.f32.mrf.mxu0
    %v3233 = vadd.f32 %v645, %v3232
    %3234 = vmatmul.bf16.gmra.mxu0 %v1870
    %v3235 = vpop.f32.mrf.mxu0
    %v3236 = vadd.f32 %v645, %v3235
    %v3237 = vpop.f32.mrf.mxu0
    %v3238 = vadd.f32 %v645, %v3237
    %3239 = vmatmul.bf16.gmra.mxu0 %v1871
    %v3240 = vpop.f32.mrf.mxu0
    %v3241 = vadd.f32 %v645, %v3240
    %v3242 = vpop.f32.mrf.mxu0
    %v3243 = vadd.f32 %v645, %v3242
    %3244 = vmatmul.bf16.gmra.mxu0 %v1872
    %v3245 = vpop.f32.mrf.mxu0
    %v3246 = vadd.f32 %v645, %v3245
    %v3247 = vpop.f32.mrf.mxu0
    %v3248 = vadd.f32 %v645, %v3247
    %3249 = vmatmul.bf16.gmra.mxu0 %v1873
    %v3250 = vpop.f32.mrf.mxu0
    %v3251 = vadd.f32 %v645, %v3250
    %v3252 = vpop.f32.mrf.mxu0
    %v3253 = vadd.f32 %v645, %v3252
    %3254 = vmatmul.bf16.gmra.mxu0 %v1874
    %v3255 = vpop.f32.mrf.mxu0
    %v3256 = vadd.f32 %v645, %v3255
    %v3257 = vpop.f32.mrf.mxu0
    %v3258 = vadd.f32 %v645, %v3257
    %3259 = vmatmul.bf16.gmra.mxu0 %v1875
    %v3260 = vpop.f32.mrf.mxu0
    %v3261 = vadd.f32 %v645, %v3260
    %v3262 = vpop.f32.mrf.mxu0
    %v3263 = vadd.f32 %v645, %v3262
    %3264 = vmatmul.bf16.gmra.mxu0 %v1876
    %v3265 = vpop.f32.mrf.mxu0
    %v3266 = vadd.f32 %v645, %v3265
    %v3267 = vpop.f32.mrf.mxu0
    %v3268 = vadd.f32 %v645, %v3267
    %3269 = vmatmul.bf16.gmra.mxu0 %v1877
    %v3270 = vpop.f32.mrf.mxu0
    %v3271 = vadd.f32 %v645, %v3270
    %v3272 = vpop.f32.mrf.mxu0
    %v3273 = vadd.f32 %v645, %v3272
    %3274 = vmatmul.bf16.gmra.mxu0 %v1878
    %v3275 = vpop.f32.mrf.mxu0
    %v3276 = vadd.f32 %v645, %v3275
    %v3277 = vpop.f32.mrf.mxu0
    %v3278 = vadd.f32 %v645, %v3277
    %3279 = vmatmul.bf16.gmra.mxu0 %v1879
    %v3280 = vpop.f32.mrf.mxu0
    %v3281 = vadd.f32 %v645, %v3280
    %v3282 = vpop.f32.mrf.mxu0
    %v3283 = vadd.f32 %v645, %v3282
    %3284 = vmatmul.bf16.gmra.mxu0 %v1880
    %v3285 = vpop.f32.mrf.mxu0
    %v3286 = vadd.f32 %v645, %v3285
    %v3287 = vpop.f32.mrf.mxu0
    %v3288 = vadd.f32 %v645, %v3287
    %3289 = vmatmul.bf16.gmra.mxu0 %v1881
    %v3290 = vpop.f32.mrf.mxu0
    %v3291 = vadd.f32 %v645, %v3290
    %v3292 = vpop.f32.mrf.mxu0
    %v3293 = vadd.f32 %v645, %v3292
    %3294 = vmatmul.bf16.gmra.mxu0 %v1882
    %v3295 = vpop.f32.mrf.mxu0
    %v3296 = vadd.f32 %v645, %v3295
    %v3297 = vpop.f32.mrf.mxu0
    %v3298 = vadd.f32 %v645, %v3297
    %3299 = vmatmul.bf16.gmra.mxu0 %v1883
    %v3300 = vpop.f32.mrf.mxu0
    %v3301 = vadd.f32 %v645, %v3300
    %v3302 = vpop.f32.mrf.mxu0
    %v3303 = vadd.f32 %v645, %v3302
    %3304 = vmatmul.bf16.gmra.mxu0 %v1884
    %v3305 = vpop.f32.mrf.mxu0
    %v3306 = vadd.f32 %v645, %v3305
    %v3307 = vpop.f32.mrf.mxu0
    %v3308 = vadd.f32 %v645, %v3307
    %3309 = vmatmul.bf16.gmra.mxu0 %v1885
    %v3310 = vpop.f32.mrf.mxu0
    %v3311 = vadd.f32 %v645, %v3310
    %v3312 = vpop.f32.mrf.mxu0
    %v3313 = vadd.f32 %v645, %v3312
    %3314 = vmatmul.bf16.gmra.mxu0 %v1886
    %v3315 = vpop.f32.mrf.mxu0
    %v3316 = vadd.f32 %v645, %v3315
    %v3317 = vpop.f32.mrf.mxu0
    %v3318 = vadd.f32 %v645, %v3317
    %3319 = vmatmul.bf16.gmra.mxu0 %v1887
    %v3320 = vpop.f32.mrf.mxu0
    %v3321 = vadd.f32 %v645, %v3320
    %v3322 = vpop.f32.mrf.mxu0
    %v3323 = vadd.f32 %v645, %v3322
    %3324 = vmatmul.bf16.gmra.mxu0 %v1888
    %v3325 = vpop.f32.mrf.mxu0
    %v3326 = vadd.f32 %v645, %v3325
    %v3327 = vpop.f32.mrf.mxu0
    %v3328 = vadd.f32 %v645, %v3327
    %3329 = vmatmul.bf16.gmra.mxu0 %v1889
    %v3330 = vpop.f32.mrf.mxu0
    %v3331 = vadd.f32 %v645, %v3330
    %v3332 = vpop.f32.mrf.mxu0
    %v3333 = vadd.f32 %v645, %v3332
    %3334 = vmatmul.bf16.gmra.mxu0 %v1890
    %v3335 = vpop.f32.mrf.mxu0
    %v3336 = vadd.f32 %v645, %v3335
    %v3337 = vpop.f32.mrf.mxu0
    %v3338 = vadd.f32 %v645, %v3337
    %3339 = vmatmul.bf16.gmra.mxu0 %v1891
    %v3340 = vpop.f32.mrf.mxu0
    %v3341 = vadd.f32 %v645, %v3340
    %v3342 = vpop.f32.mrf.mxu0
    %v3343 = vadd.f32 %v645, %v3342
    %3344 = vmatmul.bf16.gmra.mxu0 %v1892
    %v3345 = vpop.f32.mrf.mxu0
    %v3346 = vadd.f32 %v645, %v3345
    %v3347 = vpop.f32.mrf.mxu0
    %v3348 = vadd.f32 %v645, %v3347
    %3349 = vmatmul.bf16.gmra.mxu0 %v1893
    %v3350 = vpop.f32.mrf.mxu0
    %v3351 = vadd.f32 %v645, %v3350
    %v3352 = vpop.f32.mrf.mxu0
    %v3353 = vadd.f32 %v645, %v3352
    %3354 = vmatmul.bf16.gmra.mxu0 %v1894
    %v3355 = vpop.f32.mrf.mxu0
    %v3356 = vadd.f32 %v645, %v3355
    %v3357 = vpop.f32.mrf.mxu0
    %v3358 = vadd.f32 %v645, %v3357
    %3359 = vmatmul.bf16.gmra.mxu0 %v1895
    %v3360 = vpop.f32.mrf.mxu0
    %v3361 = vadd.f32 %v645, %v3360
    %v3362 = vpop.f32.mrf.mxu0
    %v3363 = vadd.f32 %v645, %v3362
    %3364 = vmatmul.bf16.gmra.mxu0 %v1896
    %v3365 = vpop.f32.mrf.mxu0
    %v3366 = vadd.f32 %v645, %v3365
    %v3367 = vpop.f32.mrf.mxu0
    %v3368 = vadd.f32 %v645, %v3367
    %3369 = vmatmul.bf16.gmra.mxu0 %v1897
    %v3370 = vpop.f32.mrf.mxu0
    %v3371 = vadd.f32 %v645, %v3370
    %v3372 = vpop.f32.mrf.mxu0
    %v3373 = vadd.f32 %v645, %v3372
    %3374 = vmatmul.bf16.gmra.mxu0 %v1898
    %v3375 = vpop.f32.mrf.mxu0
    %v3376 = vadd.f32 %v645, %v3375
    %v3377 = vpop.f32.mrf.mxu0
    %v3378 = vadd.f32 %v645, %v3377
    %3379 = vmatmul.bf16.gmra.mxu0 %v1899
    %v3380 = vpop.f32.mrf.mxu0
    %v3381 = vadd.f32 %v645, %v3380
    %v3382 = vpop.f32.mrf.mxu0
    %v3383 = vadd.f32 %v645, %v3382
    %3384 = vmatmul.bf16.gmra.mxu0 %v1900
    %v3385 = vpop.f32.mrf.mxu0
    %v3386 = vadd.f32 %v645, %v3385
    %v3387 = vpop.f32.mrf.mxu0
    %v3388 = vadd.f32 %v645, %v3387
    %3389 = vmatmul.bf16.gmra.mxu0 %v1901
    %v3390 = vpop.f32.mrf.mxu0
    %v3391 = vadd.f32 %v645, %v3390
    %v3392 = vpop.f32.mrf.mxu0
    %v3393 = vadd.f32 %v645, %v3392
    %3394 = vmatmul.bf16.gmra.mxu0 %v1902
    %v3395 = vpop.f32.mrf.mxu0
    %v3396 = vadd.f32 %v645, %v3395
    %v3397 = vpop.f32.mrf.mxu0
    %v3398 = vadd.f32 %v645, %v3397
    %3399 = vmatmul.bf16.gmra.mxu0 %v1903
    %v3400 = vpop.f32.mrf.mxu0
    %v3401 = vadd.f32 %v645, %v3400
    %v3402 = vpop.f32.mrf.mxu0
    %v3403 = vadd.f32 %v645, %v3402
    %3404 = vmatmul.bf16.gmra.mxu0 %v1904
    %v3405 = vpop.f32.mrf.mxu0
    %v3406 = vadd.f32 %v645, %v3405
    %v3407 = vpop.f32.mrf.mxu0
    %v3408 = vadd.f32 %v645, %v3407
    %3409 = vmatmul.bf16.gmra.mxu0 %v1905
    %v3410 = vpop.f32.mrf.mxu0
    %v3411 = vadd.f32 %v645, %v3410
    %v3412 = vpop.f32.mrf.mxu0
    %v3413 = vadd.f32 %v645, %v3412
    %3414 = vmatmul.bf16.gmra.mxu0 %v1906
    %v3415 = vpop.f32.mrf.mxu0
    %v3416 = vadd.f32 %v645, %v3415
    %v3417 = vpop.f32.mrf.mxu0
    %v3418 = vadd.f32 %v645, %v3417
    %3419 = vmatmul.bf16.gmra.mxu0 %v1907
    %v3420 = vpop.f32.mrf.mxu0
    %v3421 = vadd.f32 %v645, %v3420
    %v3422 = vpop.f32.mrf.mxu0
    %v3423 = vadd.f32 %v645, %v3422
    %3424 = vmatmul.bf16.gmra.mxu0 %v1908
    %v3425 = vpop.f32.mrf.mxu0
    %v3426 = vadd.f32 %v645, %v3425
    %v3427 = vpop.f32.mrf.mxu0
    %v3428 = vadd.f32 %v645, %v3427
    %3429 = vmatmul.bf16.gmra.mxu0 %v1909
    %v3430 = vpop.f32.mrf.mxu0
    %v3431 = vadd.f32 %v645, %v3430
    %v3432 = vpop.f32.mrf.mxu0
    %v3433 = vadd.f32 %v645, %v3432
    %3434 = vmatmul.bf16.gmra.mxu0 %v1910
    %v3435 = vpop.f32.mrf.mxu0
    %v3436 = vadd.f32 %v645, %v3435
    %v3437 = vpop.f32.mrf.mxu0
    %v3438 = vadd.f32 %v645, %v3437
    %3439 = vmatmul.bf16.gmra.mxu0 %v1911
    %v3440 = vpop.f32.mrf.mxu0
    %v3441 = vadd.f32 %v645, %v3440
    %v3442 = vpop.f32.mrf.mxu0
    %v3443 = vadd.f32 %v645, %v3442
    %3444 = vmatmul.bf16.gmra.mxu0 %v1912
    %v3445 = vpop.f32.mrf.mxu0
    %v3446 = vadd.f32 %v645, %v3445
    %v3447 = vpop.f32.mrf.mxu0
    %v3448 = vadd.f32 %v645, %v3447
    %3449 = vmatmul.bf16.gmra.mxu0 %v1913
    %v3450 = vpop.f32.mrf.mxu0
    %v3451 = vadd.f32 %v645, %v3450
    %v3452 = vpop.f32.mrf.mxu0
    %v3453 = vadd.f32 %v645, %v3452
    %3454 = vmatmul.bf16.gmra.mxu0 %v1914
    %v3455 = vpop.f32.mrf.mxu0
    %v3456 = vadd.f32 %v645, %v3455
    %v3457 = vpop.f32.mrf.mxu0
    %v3458 = vadd.f32 %v645, %v3457
    %3459 = vmatmul.bf16.gmra.mxu0 %v1915
    %v3460 = vpop.f32.mrf.mxu0
    %v3461 = vadd.f32 %v645, %v3460
    %v3462 = vpop.f32.mrf.mxu0
    %v3463 = vadd.f32 %v645, %v3462
    %3464 = vmatmul.bf16.gmra.mxu0 %v1916
    %v3465 = vpop.f32.mrf.mxu0
    %v3466 = vadd.f32 %v645, %v3465
    %v3467 = vpop.f32.mrf.mxu0
    %v3468 = vadd.f32 %v645, %v3467
    %3469 = vmatmul.bf16.gmra.mxu0 %v1917
    %v3470 = vpop.f32.mrf.mxu0
    %v3471 = vadd.f32 %v645, %v3470
    %v3472 = vpop.f32.mrf.mxu0
    %v3473 = vadd.f32 %v645, %v3472
    %3474 = vmatmul.bf16.gmra.mxu0 %v1918
    %v3475 = vpop.f32.mrf.mxu0
    %v3476 = vadd.f32 %v645, %v3475
    %v3477 = vpop.f32.mrf.mxu0
    %v3478 = vadd.f32 %v645, %v3477
    %3479 = vmatmul.bf16.gmra.mxu0 %v1919
    %v3480 = vpop.f32.mrf.mxu0
    %v3481 = vadd.f32 %v645, %v3480
    %v3482 = vpop.f32.mrf.mxu0
    %v3483 = vadd.f32 %v645, %v3482
    %3484 = vmatmul.bf16.gmra.mxu0 %v1920
    %v3485 = vpop.f32.mrf.mxu0
    %v3486 = vadd.f32 %v645, %v3485
    %v3487 = vpop.f32.mrf.mxu0
    %v3488 = vadd.f32 %v645, %v3487
    %3489 = vmatmul.bf16.gmra.mxu0 %v1921
    %v3490 = vpop.f32.mrf.mxu0
    %v3491 = vadd.f32 %v645, %v3490
    %v3492 = vpop.f32.mrf.mxu0
    %v3493 = vadd.f32 %v645, %v3492
    %3494 = vmatmul.bf16.gmra.mxu0 %v1922
    %v3495 = vpop.f32.mrf.mxu0
    %v3496 = vadd.f32 %v645, %v3495
    %v3497 = vpop.f32.mrf.mxu0
    %v3498 = vadd.f32 %v645, %v3497
    %3499 = vmatmul.bf16.gmra.mxu0 %v1923
    %v3500 = vpop.f32.mrf.mxu0
    %v3501 = vadd.f32 %v645, %v3500
    %v3502 = vpop.f32.mrf.mxu0
    %v3503 = vadd.f32 %v645, %v3502
    %3504 = vmatmul.bf16.gmra.mxu0 %v1924
    %v3505 = vpop.f32.mrf.mxu0
    %v3506 = vadd.f32 %v645, %v3505
    %v3507 = vpop.f32.mrf.mxu0
    %v3508 = vadd.f32 %v645, %v3507
    %3509 = vmatmul.bf16.gmra.mxu0 %v1925
    %v3510 = vpop.f32.mrf.mxu0
    %v3511 = vadd.f32 %v645, %v3510
    %v3512 = vpop.f32.mrf.mxu0
    %v3513 = vadd.f32 %v645, %v3512
    %3514 = vmatmul.bf16.gmra.mxu0 %v1926
    %v3515 = vpop.f32.mrf.mxu0
    %v3516 = vadd.f32 %v645, %v3515
    %v3517 = vpop.f32.mrf.mxu0
    %v3518 = vadd.f32 %v645, %v3517
    %3519 = vdwg.mxu0
    %v3520 = vmax.f32 %v2241, 0.0
    %v3521 = vmax.f32 %v2243, 0.0
    %v3522 = vmax.f32 %v2246, 0.0
    %v3523 = vmax.f32 %v2248, 0.0
    %v3524 = vmax.f32 %v2251, 0.0
    %v3525 = vmax.f32 %v2253, 0.0
    %v3526 = vmax.f32 %v2256, 0.0
    %v3527 = vmax.f32 %v2258, 0.0
    %v3528 = vmax.f32 %v2261, 0.0
    %v3529 = vmax.f32 %v2263, 0.0
    %v3530 = vmax.f32 %v2266, 0.0
    %v3531 = vmax.f32 %v2268, 0.0
    %v3532 = vmax.f32 %v2271, 0.0
    %v3533 = vmax.f32 %v2273, 0.0
    %v3534 = vmax.f32 %v2276, 0.0
    %v3535 = vmax.f32 %v2278, 0.0
    %v3536 = vmax.f32 %v2281, 0.0
    %v3537 = vmax.f32 %v2283, 0.0
    %v3538 = vmax.f32 %v2286, 0.0
    %v3539 = vmax.f32 %v2288, 0.0
    %v3540 = vmax.f32 %v2291, 0.0
    %v3541 = vmax.f32 %v2293, 0.0
    %v3542 = vmax.f32 %v2296, 0.0
    %v3543 = vmax.f32 %v2298, 0.0
    %v3544 = vmax.f32 %v2301, 0.0
    %v3545 = vmax.f32 %v2303, 0.0
    %v3546 = vmax.f32 %v2306, 0.0
    %v3547 = vmax.f32 %v2308, 0.0
    %v3548 = vmax.f32 %v2311, 0.0
    %v3549 = vmax.f32 %v2313, 0.0
    %v3550 = vmax.f32 %v2316, 0.0
    %v3551 = vmax.f32 %v2318, 0.0
    %v3552 = vmax.f32 %v2321, 0.0
    %v3553 = vmax.f32 %v2323, 0.0
    %v3554 = vmax.f32 %v2326, 0.0
    %v3555 = vmax.f32 %v2328, 0.0
    %v3556 = vmax.f32 %v2331, 0.0
    %v3557 = vmax.f32 %v2333, 0.0
    %v3558 = vmax.f32 %v2336, 0.0
    %v3559 = vmax.f32 %v2338, 0.0
    %v3560 = vmax.f32 %v2341, 0.0
    %v3561 = vmax.f32 %v2343, 0.0
    %v3562 = vmax.f32 %v2346, 0.0
    %v3563 = vmax.f32 %v2348, 0.0
    %v3564 = vmax.f32 %v2351, 0.0
    %v3565 = vmax.f32 %v2353, 0.0
    %v3566 = vmax.f32 %v2356, 0.0
    %v3567 = vmax.f32 %v2358, 0.0
    %v3568 = vmax.f32 %v2361, 0.0
    %v3569 = vmax.f32 %v2363, 0.0
    %v3570 = vmax.f32 %v2366, 0.0
    %v3571 = vmax.f32 %v2368, 0.0
    %v3572 = vmax.f32 %v2371, 0.0
    %v3573 = vmax.f32 %v2373, 0.0
    %v3574 = vmax.f32 %v2376, 0.0
    %v3575 = vmax.f32 %v2378, 0.0
    %v3576 = vmax.f32 %v2381, 0.0
    %v3577 = vmax.f32 %v2383, 0.0
    %v3578 = vmax.f32 %v2386, 0.0
    %v3579 = vmax.f32 %v2388, 0.0
    %v3580 = vmax.f32 %v2391, 0.0
    %v3581 = vmax.f32 %v2393, 0.0
    %v3582 = vmax.f32 %v2396, 0.0
    %v3583 = vmax.f32 %v2398, 0.0
    %v3584 = vmax.f32 %v2401, 0.0
    %v3585 = vmax.f32 %v2403, 0.0
    %v3586 = vmax.f32 %v2406, 0.0
    %v3587 = vmax.f32 %v2408, 0.0
    %v3588 = vmax.f32 %v2411, 0.0
    %v3589 = vmax.f32 %v2413, 0.0
    %v3590 = vmax.f32 %v2416, 0.0
    %v3591 = vmax.f32 %v2418, 0.0
    %v3592 = vmax.f32 %v2421, 0.0
    %v3593 = vmax.f32 %v2423, 0.0
    %v3594 = vmax.f32 %v2426, 0.0
    %v3595 = vmax.f32 %v2428, 0.0
    %v3596 = vmax.f32 %v2431, 0.0
    %v3597 = vmax.f32 %v2433, 0.0
    %v3598 = vmax.f32 %v2436, 0.0
    %v3599 = vmax.f32 %v2438, 0.0
    %v3600 = vmax.f32 %v2441, 0.0
    %v3601 = vmax.f32 %v2443, 0.0
    %v3602 = vmax.f32 %v2446, 0.0
    %v3603 = vmax.f32 %v2448, 0.0
    %v3604 = vmax.f32 %v2451, 0.0
    %v3605 = vmax.f32 %v2453, 0.0
    %v3606 = vmax.f32 %v2456, 0.0
    %v3607 = vmax.f32 %v2458, 0.0
    %v3608 = vmax.f32 %v2461, 0.0
    %v3609 = vmax.f32 %v2463, 0.0
    %v3610 = vmax.f32 %v2466, 0.0
    %v3611 = vmax.f32 %v2468, 0.0
    %v3612 = vmax.f32 %v2471, 0.0
    %v3613 = vmax.f32 %v2473, 0.0
    %v3614 = vmax.f32 %v2476, 0.0
    %v3615 = vmax.f32 %v2478, 0.0
    %v3616 = vmax.f32 %v2481, 0.0
    %v3617 = vmax.f32 %v2483, 0.0
    %v3618 = vmax.f32 %v2486, 0.0
    %v3619 = vmax.f32 %v2488, 0.0
    %v3620 = vmax.f32 %v2491, 0.0
    %v3621 = vmax.f32 %v2493, 0.0
    %v3622 = vmax.f32 %v2496, 0.0
    %v3623 = vmax.f32 %v2498, 0.0
    %v3624 = vmax.f32 %v2501, 0.0
    %v3625 = vmax.f32 %v2503, 0.0
    %v3626 = vmax.f32 %v2506, 0.0
    %v3627 = vmax.f32 %v2508, 0.0
    %v3628 = vmax.f32 %v2511, 0.0
    %v3629 = vmax.f32 %v2513, 0.0
    %v3630 = vmax.f32 %v2516, 0.0
    %v3631 = vmax.f32 %v2518, 0.0
    %v3632 = vmax.f32 %v2521, 0.0
    %v3633 = vmax.f32 %v2523, 0.0
    %v3634 = vmax.f32 %v2526, 0.0
    %v3635 = vmax.f32 %v2528, 0.0
    %v3636 = vmax.f32 %v2531, 0.0
    %v3637 = vmax.f32 %v2533, 0.0
    %v3638 = vmax.f32 %v2536, 0.0
    %v3639 = vmax.f32 %v2538, 0.0
    %v3640 = vmax.f32 %v2541, 0.0
    %v3641 = vmax.f32 %v2543, 0.0
    %v3642 = vmax.f32 %v2546, 0.0
    %v3643 = vmax.f32 %v2548, 0.0
    %v3644 = vmax.f32 %v2551, 0.0
    %v3645 = vmax.f32 %v2553, 0.0
    %v3646 = vmax.f32 %v2556, 0.0
    %v3647 = vmax.f32 %v2558, 0.0
    %v3648 = vmax.f32 %v2561, 0.0
    %v3649 = vmax.f32 %v2563, 0.0
    %v3650 = vmax.f32 %v2566, 0.0
    %v3651 = vmax.f32 %v2568, 0.0
    %v3652 = vmax.f32 %v2571, 0.0
    %v3653 = vmax.f32 %v2573, 0.0
    %v3654 = vmax.f32 %v2576, 0.0
    %v3655 = vmax.f32 %v2578, 0.0
    %v3656 = vmax.f32 %v2581, 0.0
    %v3657 = vmax.f32 %v2583, 0.0
    %v3658 = vmax.f32 %v2586, 0.0
    %v3659 = vmax.f32 %v2588, 0.0
    %v3660 = vmax.f32 %v2591, 0.0
    %v3661 = vmax.f32 %v2593, 0.0
    %v3662 = vmax.f32 %v2596, 0.0
    %v3663 = vmax.f32 %v2598, 0.0
    %v3664 = vmax.f32 %v2601, 0.0
    %v3665 = vmax.f32 %v2603, 0.0
    %v3666 = vmax.f32 %v2606, 0.0
    %v3667 = vmax.f32 %v2608, 0.0
    %v3668 = vmax.f32 %v2611, 0.0
    %v3669 = vmax.f32 %v2613, 0.0
    %v3670 = vmax.f32 %v2616, 0.0
    %v3671 = vmax.f32 %v2618, 0.0
    %v3672 = vmax.f32 %v2621, 0.0
    %v3673 = vmax.f32 %v2623, 0.0
    %v3674 = vmax.f32 %v2626, 0.0
    %v3675 = vmax.f32 %v2628, 0.0
    %v3676 = vmax.f32 %v2631, 0.0
    %v3677 = vmax.f32 %v2633, 0.0
    %v3678 = vmax.f32 %v2636, 0.0
    %v3679 = vmax.f32 %v2638, 0.0
    %v3680 = vmax.f32 %v2641, 0.0
    %v3681 = vmax.f32 %v2643, 0.0
    %v3682 = vmax.f32 %v2646, 0.0
    %v3683 = vmax.f32 %v2648, 0.0
    %v3684 = vmax.f32 %v2651, 0.0
    %v3685 = vmax.f32 %v2653, 0.0
    %v3686 = vmax.f32 %v2656, 0.0
    %v3687 = vmax.f32 %v2658, 0.0
    %v3688 = vmax.f32 %v2661, 0.0
    %v3689 = vmax.f32 %v2663, 0.0
    %v3690 = vmax.f32 %v2666, 0.0
    %v3691 = vmax.f32 %v2668, 0.0
    %v3692 = vmax.f32 %v2671, 0.0
    %v3693 = vmax.f32 %v2673, 0.0
    %v3694 = vmax.f32 %v2676, 0.0
    %v3695 = vmax.f32 %v2678, 0.0
    %v3696 = vmax.f32 %v2681, 0.0
    %v3697 = vmax.f32 %v2683, 0.0
    %v3698 = vmax.f32 %v2686, 0.0
    %v3699 = vmax.f32 %v2688, 0.0
    %v3700 = vmax.f32 %v2691, 0.0
    %v3701 = vmax.f32 %v2693, 0.0
    %v3702 = vmax.f32 %v2696, 0.0
    %v3703 = vmax.f32 %v2698, 0.0
    %v3704 = vmax.f32 %v2701, 0.0
    %v3705 = vmax.f32 %v2703, 0.0
    %v3706 = vmax.f32 %v2706, 0.0
    %v3707 = vmax.f32 %v2708, 0.0
    %v3708 = vmax.f32 %v2711, 0.0
    %v3709 = vmax.f32 %v2713, 0.0
    %v3710 = vmax.f32 %v2716, 0.0
    %v3711 = vmax.f32 %v2718, 0.0
    %v3712 = vmax.f32 %v2721, 0.0
    %v3713 = vmax.f32 %v2723, 0.0
    %v3714 = vmax.f32 %v2726, 0.0
    %v3715 = vmax.f32 %v2728, 0.0
    %v3716 = vmax.f32 %v2731, 0.0
    %v3717 = vmax.f32 %v2733, 0.0
    %v3718 = vmax.f32 %v2736, 0.0
    %v3719 = vmax.f32 %v2738, 0.0
    %v3720 = vmax.f32 %v2741, 0.0
    %v3721 = vmax.f32 %v2743, 0.0
    %v3722 = vmax.f32 %v2746, 0.0
    %v3723 = vmax.f32 %v2748, 0.0
    %v3724 = vmax.f32 %v2751, 0.0
    %v3725 = vmax.f32 %v2753, 0.0
    %v3726 = vmax.f32 %v2756, 0.0
    %v3727 = vmax.f32 %v2758, 0.0
    %v3728 = vmax.f32 %v2761, 0.0
    %v3729 = vmax.f32 %v2763, 0.0
    %v3730 = vmax.f32 %v2766, 0.0
    %v3731 = vmax.f32 %v2768, 0.0
    %v3732 = vmax.f32 %v2771, 0.0
    %v3733 = vmax.f32 %v2773, 0.0
    %v3734 = vmax.f32 %v2776, 0.0
    %v3735 = vmax.f32 %v2778, 0.0
    %v3736 = vmax.f32 %v2781, 0.0
    %v3737 = vmax.f32 %v2783, 0.0
    %v3738 = vmax.f32 %v2786, 0.0
    %v3739 = vmax.f32 %v2788, 0.0
    %v3740 = vmax.f32 %v2791, 0.0
    %v3741 = vmax.f32 %v2793, 0.0
    %v3742 = vmax.f32 %v2796, 0.0
    %v3743 = vmax.f32 %v2798, 0.0
    %v3744 = vmax.f32 %v2801, 0.0
    %v3745 = vmax.f32 %v2803, 0.0
    %v3746 = vmax.f32 %v2806, 0.0
    %v3747 = vmax.f32 %v2808, 0.0
    %v3748 = vmax.f32 %v2811, 0.0
    %v3749 = vmax.f32 %v2813, 0.0
    %v3750 = vmax.f32 %v2816, 0.0
    %v3751 = vmax.f32 %v2818, 0.0
    %v3752 = vmax.f32 %v2821, 0.0
    %v3753 = vmax.f32 %v2823, 0.0
    %v3754 = vmax.f32 %v2826, 0.0
    %v3755 = vmax.f32 %v2828, 0.0
    %v3756 = vmax.f32 %v2831, 0.0
    %v3757 = vmax.f32 %v2833, 0.0
    %v3758 = vmax.f32 %v2836, 0.0
    %v3759 = vmax.f32 %v2838, 0.0
    %v3760 = vmax.f32 %v2841, 0.0
    %v3761 = vmax.f32 %v2843, 0.0
    %v3762 = vmax.f32 %v2846, 0.0
    %v3763 = vmax.f32 %v2848, 0.0
    %v3764 = vmax.f32 %v2851, 0.0
    %v3765 = vmax.f32 %v2853, 0.0
    %v3766 = vmax.f32 %v2856, 0.0
    %v3767 = vmax.f32 %v2858, 0.0
    %v3768 = vmax.f32 %v2861, 0.0
    %v3769 = vmax.f32 %v2863, 0.0
    %v3770 = vmax.f32 %v2866, 0.0
    %v3771 = vmax.f32 %v2868, 0.0
    %v3772 = vmax.f32 %v2871, 0.0
    %v3773 = vmax.f32 %v2873, 0.0
    %v3774 = vmax.f32 %v2876, 0.0
    %v3775 = vmax.f32 %v2878, 0.0
    %v3776 = vmax.f32 %v2881, 0.0
    %v3777 = vmax.f32 %v2883, 0.0
    %v3778 = vmax.f32 %v2886, 0.0
    %v3779 = vmax.f32 %v2888, 0.0
    %v3780 = vmax.f32 %v2891, 0.0
    %v3781 = vmax.f32 %v2893, 0.0
    %v3782 = vmax.f32 %v2896, 0.0
    %v3783 = vmax.f32 %v2898, 0.0
    %v3784 = vmax.f32 %v2901, 0.0
    %v3785 = vmax.f32 %v2903, 0.0
    %v3786 = vmax.f32 %v2906, 0.0
    %v3787 = vmax.f32 %v2908, 0.0
    %v3788 = vmax.f32 %v2911, 0.0
    %v3789 = vmax.f32 %v2913, 0.0
    %v3790 = vmax.f32 %v2916, 0.0
    %v3791 = vmax.f32 %v2918, 0.0
    %v3792 = vmax.f32 %v2921, 0.0
    %v3793 = vmax.f32 %v2923, 0.0
    %v3794 = vmax.f32 %v2926, 0.0
    %v3795 = vmax.f32 %v2928, 0.0
    %v3796 = vmax.f32 %v2931, 0.0
    %v3797 = vmax.f32 %v2933, 0.0
    %v3798 = vmax.f32 %v2936, 0.0
    %v3799 = vmax.f32 %v2938, 0.0
    %v3800 = vmax.f32 %v2941, 0.0
    %v3801 = vmax.f32 %v2943, 0.0
    %v3802 = vmax.f32 %v2946, 0.0
    %v3803 = vmax.f32 %v2948, 0.0
    %v3804 = vmax.f32 %v2951, 0.0
    %v3805 = vmax.f32 %v2953, 0.0
    %v3806 = vmax.f32 %v2956, 0.0
    %v3807 = vmax.f32 %v2958, 0.0
    %v3808 = vmax.f32 %v2961, 0.0
    %v3809 = vmax.f32 %v2963, 0.0
    %v3810 = vmax.f32 %v2966, 0.0
    %v3811 = vmax.f32 %v2968, 0.0
    %v3812 = vmax.f32 %v2971, 0.0
    %v3813 = vmax.f32 %v2973, 0.0
    %v3814 = vmax.f32 %v2976, 0.0
    %v3815 = vmax.f32 %v2978, 0.0
    %v3816 = vmax.f32 %v2981, 0.0
    %v3817 = vmax.f32 %v2983, 0.0
    %v3818 = vmax.f32 %v2986, 0.0
    %v3819 = vmax.f32 %v2988, 0.0
    %v3820 = vmax.f32 %v2991, 0.0
    %v3821 = vmax.f32 %v2993, 0.0
    %v3822 = vmax.f32 %v2996, 0.0
    %v3823 = vmax.f32 %v2998, 0.0
    %v3824 = vmax.f32 %v3001, 0.0
    %v3825 = vmax.f32 %v3003, 0.0
    %v3826 = vmax.f32 %v3006, 0.0
    %v3827 = vmax.f32 %v3008, 0.0
    %v3828 = vmax.f32 %v3011, 0.0
    %v3829 = vmax.f32 %v3013, 0.0
    %v3830 = vmax.f32 %v3016, 0.0
    %v3831 = vmax.f32 %v3018, 0.0
    %v3832 = vmax.f32 %v3021, 0.0
    %v3833 = vmax.f32 %v3023, 0.0
    %v3834 = vmax.f32 %v3026, 0.0
    %v3835 = vmax.f32 %v3028, 0.0
    %v3836 = vmax.f32 %v3031, 0.0
    %v3837 = vmax.f32 %v3033, 0.0
    %v3838 = vmax.f32 %v3036, 0.0
    %v3839 = vmax.f32 %v3038, 0.0
    %v3840 = vmax.f32 %v3041, 0.0
    %v3841 = vmax.f32 %v3043, 0.0
    %v3842 = vmax.f32 %v3046, 0.0
    %v3843 = vmax.f32 %v3048, 0.0
    %v3844 = vmax.f32 %v3051, 0.0
    %v3845 = vmax.f32 %v3053, 0.0
    %v3846 = vmax.f32 %v3056, 0.0
    %v3847 = vmax.f32 %v3058, 0.0
    %v3848 = vmax.f32 %v3061, 0.0
    %v3849 = vmax.f32 %v3063, 0.0
    %v3850 = vmax.f32 %v3066, 0.0
    %v3851 = vmax.f32 %v3068, 0.0
    %v3852 = vmax.f32 %v3071, 0.0
    %v3853 = vmax.f32 %v3073, 0.0
    %v3854 = vmax.f32 %v3076, 0.0
    %v3855 = vmax.f32 %v3078, 0.0
    %v3856 = vmax.f32 %v3081, 0.0
    %v3857 = vmax.f32 %v3083, 0.0
    %v3858 = vmax.f32 %v3086, 0.0
    %v3859 = vmax.f32 %v3088, 0.0
    %v3860 = vmax.f32 %v3091, 0.0
    %v3861 = vmax.f32 %v3093, 0.0
    %v3862 = vmax.f32 %v3096, 0.0
    %v3863 = vmax.f32 %v3098, 0.0
    %v3864 = vmax.f32 %v3101, 0.0
    %v3865 = vmax.f32 %v3103, 0.0
    %v3866 = vmax.f32 %v3106, 0.0
    %v3867 = vmax.f32 %v3108, 0.0
    %v3868 = vmax.f32 %v3111, 0.0
    %v3869 = vmax.f32 %v3113, 0.0
    %v3870 = vmax.f32 %v3116, 0.0
    %v3871 = vmax.f32 %v3118, 0.0
    %v3872 = vmax.f32 %v3121, 0.0
    %v3873 = vmax.f32 %v3123, 0.0
    %v3874 = vmax.f32 %v3126, 0.0
    %v3875 = vmax.f32 %v3128, 0.0
    %v3876 = vmax.f32 %v3131, 0.0
    %v3877 = vmax.f32 %v3133, 0.0
    %v3878 = vmax.f32 %v3136, 0.0
    %v3879 = vmax.f32 %v3138, 0.0
    %v3880 = vmax.f32 %v3141, 0.0
    %v3881 = vmax.f32 %v3143, 0.0
    %v3882 = vmax.f32 %v3146, 0.0
    %v3883 = vmax.f32 %v3148, 0.0
    %v3884 = vmax.f32 %v3151, 0.0
    %v3885 = vmax.f32 %v3153, 0.0
    %v3886 = vmax.f32 %v3156, 0.0
    %v3887 = vmax.f32 %v3158, 0.0
    %v3888 = vmax.f32 %v3161, 0.0
    %v3889 = vmax.f32 %v3163, 0.0
    %v3890 = vmax.f32 %v3166, 0.0
    %v3891 = vmax.f32 %v3168, 0.0
    %v3892 = vmax.f32 %v3171, 0.0
    %v3893 = vmax.f32 %v3173, 0.0
    %v3894 = vmax.f32 %v3176, 0.0
    %v3895 = vmax.f32 %v3178, 0.0
    %v3896 = vmax.f32 %v3181, 0.0
    %v3897 = vmax.f32 %v3183, 0.0
    %v3898 = vmax.f32 %v3186, 0.0
    %v3899 = vmax.f32 %v3188, 0.0
    %v3900 = vmax.f32 %v3191, 0.0
    %v3901 = vmax.f32 %v3193, 0.0
    %v3902 = vmax.f32 %v3196, 0.0
    %v3903 = vmax.f32 %v3198, 0.0
    %v3904 = vmax.f32 %v3201, 0.0
    %v3905 = vmax.f32 %v3203, 0.0
    %v3906 = vmax.f32 %v3206, 0.0
    %v3907 = vmax.f32 %v3208, 0.0
    %v3908 = vmax.f32 %v3211, 0.0
    %v3909 = vmax.f32 %v3213, 0.0
    %v3910 = vmax.f32 %v3216, 0.0
    %v3911 = vmax.f32 %v3218, 0.0
    %v3912 = vmax.f32 %v3221, 0.0
    %v3913 = vmax.f32 %v3223, 0.0
    %v3914 = vmax.f32 %v3226, 0.0
    %v3915 = vmax.f32 %v3228, 0.0
    %v3916 = vmax.f32 %v3231, 0.0
    %v3917 = vmax.f32 %v3233, 0.0
    %v3918 = vmax.f32 %v3236, 0.0
    %v3919 = vmax.f32 %v3238, 0.0
    %v3920 = vmax.f32 %v3241, 0.0
    %v3921 = vmax.f32 %v3243, 0.0
    %v3922 = vmax.f32 %v3246, 0.0
    %v3923 = vmax.f32 %v3248, 0.0
    %v3924 = vmax.f32 %v3251, 0.0
    %v3925 = vmax.f32 %v3253, 0.0
    %v3926 = vmax.f32 %v3256, 0.0
    %v3927 = vmax.f32 %v3258, 0.0
    %v3928 = vmax.f32 %v3261, 0.0
    %v3929 = vmax.f32 %v3263, 0.0
    %v3930 = vmax.f32 %v3266, 0.0
    %v3931 = vmax.f32 %v3268, 0.0
    %v3932 = vmax.f32 %v3271, 0.0
    %v3933 = vmax.f32 %v3273, 0.0
    %v3934 = vmax.f32 %v3276, 0.0
    %v3935 = vmax.f32 %v3278, 0.0
    %v3936 = vmax.f32 %v3281, 0.0
    %v3937 = vmax.f32 %v3283, 0.0
    %v3938 = vmax.f32 %v3286, 0.0
    %v3939 = vmax.f32 %v3288, 0.0
    %v3940 = vmax.f32 %v3291, 0.0
    %v3941 = vmax.f32 %v3293, 0.0
    %v3942 = vmax.f32 %v3296, 0.0
    %v3943 = vmax.f32 %v3298, 0.0
    %v3944 = vmax.f32 %v3301, 0.0
    %v3945 = vmax.f32 %v3303, 0.0
    %v3946 = vmax.f32 %v3306, 0.0
    %v3947 = vmax.f32 %v3308, 0.0
    %v3948 = vmax.f32 %v3311, 0.0
    %v3949 = vmax.f32 %v3313, 0.0
    %v3950 = vmax.f32 %v3316, 0.0
    %v3951 = vmax.f32 %v3318, 0.0
    %v3952 = vmax.f32 %v3321, 0.0
    %v3953 = vmax.f32 %v3323, 0.0
    %v3954 = vmax.f32 %v3326, 0.0
    %v3955 = vmax.f32 %v3328, 0.0
    %v3956 = vmax.f32 %v3331, 0.0
    %v3957 = vmax.f32 %v3333, 0.0
    %v3958 = vmax.f32 %v3336, 0.0
    %v3959 = vmax.f32 %v3338, 0.0
    %v3960 = vmax.f32 %v3341, 0.0
    %v3961 = vmax.f32 %v3343, 0.0
    %v3962 = vmax.f32 %v3346, 0.0
    %v3963 = vmax.f32 %v3348, 0.0
    %v3964 = vmax.f32 %v3351, 0.0
    %v3965 = vmax.f32 %v3353, 0.0
    %v3966 = vmax.f32 %v3356, 0.0
    %v3967 = vmax.f32 %v3358, 0.0
    %v3968 = vmax.f32 %v3361, 0.0
    %v3969 = vmax.f32 %v3363, 0.0
    %v3970 = vmax.f32 %v3366, 0.0
    %v3971 = vmax.f32 %v3368, 0.0
    %v3972 = vmax.f32 %v3371, 0.0
    %v3973 = vmax.f32 %v3373, 0.0
    %v3974 = vmax.f32 %v3376, 0.0
    %v3975 = vmax.f32 %v3378, 0.0
    %v3976 = vmax.f32 %v3381, 0.0
    %v3977 = vmax.f32 %v3383, 0.0
    %v3978 = vmax.f32 %v3386, 0.0
    %v3979 = vmax.f32 %v3388, 0.0
    %v3980 = vmax.f32 %v3391, 0.0
    %v3981 = vmax.f32 %v3393, 0.0
    %v3982 = vmax.f32 %v3396, 0.0
    %v3983 = vmax.f32 %v3398, 0.0
    %v3984 = vmax.f32 %v3401, 0.0
    %v3985 = vmax.f32 %v3403, 0.0
    %v3986 = vmax.f32 %v3406, 0.0
    %v3987 = vmax.f32 %v3408, 0.0
    %v3988 = vmax.f32 %v3411, 0.0
    %v3989 = vmax.f32 %v3413, 0.0
    %v3990 = vmax.f32 %v3416, 0.0
    %v3991 = vmax.f32 %v3418, 0.0
    %v3992 = vmax.f32 %v3421, 0.0
    %v3993 = vmax.f32 %v3423, 0.0
    %v3994 = vmax.f32 %v3426, 0.0
    %v3995 = vmax.f32 %v3428, 0.0
    %v3996 = vmax.f32 %v3431, 0.0
    %v3997 = vmax.f32 %v3433, 0.0
    %v3998 = vmax.f32 %v3436, 0.0
    %v3999 = vmax.f32 %v3438, 0.0
    %v4000 = vmax.f32 %v3441, 0.0
    %v4001 = vmax.f32 %v3443, 0.0
    %v4002 = vmax.f32 %v3446, 0.0
    %v4003 = vmax.f32 %v3448, 0.0
    %v4004 = vmax.f32 %v3451, 0.0
    %v4005 = vmax.f32 %v3453, 0.0
    %v4006 = vmax.f32 %v3456, 0.0
    %v4007 = vmax.f32 %v3458, 0.0
    %v4008 = vmax.f32 %v3461, 0.0
    %v4009 = vmax.f32 %v3463, 0.0
    %v4010 = vmax.f32 %v3466, 0.0
    %v4011 = vmax.f32 %v3468, 0.0
    %v4012 = vmax.f32 %v3471, 0.0
    %v4013 = vmax.f32 %v3473, 0.0
    %v4014 = vmax.f32 %v3476, 0.0
    %v4015 = vmax.f32 %v3478, 0.0
    %v4016 = vmax.f32 %v3481, 0.0
    %v4017 = vmax.f32 %v3483, 0.0
    %v4018 = vmax.f32 %v3486, 0.0
    %v4019 = vmax.f32 %v3488, 0.0
    %v4020 = vmax.f32 %v3491, 0.0
    %v4021 = vmax.f32 %v3493, 0.0
    %v4022 = vmax.f32 %v3496, 0.0
    %v4023 = vmax.f32 %v3498, 0.0
    %v4024 = vmax.f32 %v3501, 0.0
    %v4025 = vmax.f32 %v3503, 0.0
    %v4026 = vmax.f32 %v3506, 0.0
    %v4027 = vmax.f32 %v3508, 0.0
    %v4028 = vmax.f32 %v3511, 0.0
    %v4029 = vmax.f32 %v3513, 0.0
    %v4030 = vmax.f32 %v3516, 0.0
    %v4031 = vmax.f32 %v3518, 0.0
    %v4032 = vld [vmem:[#allocation7] sm:$0xff]
    %v4033 = vld [vmem:[#allocation7 + $0x8] sm:$0xff]
    %v4034 = vld [vmem:[#allocation7 + $0x10] sm:$0xff]
    %v4035 = vld [vmem:[#allocation7 + $0x18] sm:$0xff]
    %v4036 = vld [vmem:[#allocation7 + $0x20] sm:$0xff]
    %v4037 = vld [vmem:[#allocation7 + $0x28] sm:$0xff]
    %v4038 = vld [vmem:[#allocation7 + $0x30] sm:$0xff]
    %v4039 = vld [vmem:[#allocation7 + $0x38] sm:$0xff]
    %v4040 = vld [vmem:[#allocation7 + $0x40] sm:$0xff]
    %v4041 = vld [vmem:[#allocation7 + $0x48] sm:$0xff]
    %v4042 = vld [vmem:[#allocation7 + $0x50] sm:$0xff]
    %v4043 = vld [vmem:[#allocation7 + $0x58] sm:$0xff]
    %v4044 = vld [vmem:[#allocation7 + $0x60] sm:$0xff]
    %v4045 = vld [vmem:[#allocation7 + $0x68] sm:$0xff]
    %v4046 = vld [vmem:[#allocation7 + $0x70] sm:$0xff]
    %v4047 = vld [vmem:[#allocation7 + $0x78] sm:$0xff]
    %v4048 = vld [vmem:[#allocation7 + $0x80] sm:$0xff]
    %v4049 = vld [vmem:[#allocation7 + $0x88] sm:$0xff]
    %v4050 = vld [vmem:[#allocation7 + $0x90] sm:$0xff]
    %v4051 = vld [vmem:[#allocation7 + $0x98] sm:$0xff]
    %v4052 = vld [vmem:[#allocation7 + $0xa0] sm:$0xff]
    %v4053 = vld [vmem:[#allocation7 + $0xa8] sm:$0xff]
    %v4054 = vld [vmem:[#allocation7 + $0xb0] sm:$0xff]
    %v4055 = vld [vmem:[#allocation7 + $0xb8] sm:$0xff]
    %v4056 = vld [vmem:[#allocation7 + $0xc0] sm:$0xff]
    %v4057 = vld [vmem:[#allocation7 + $0xc8] sm:$0xff]
    %v4058 = vld [vmem:[#allocation7 + $0xd0] sm:$0xff]
    %v4059 = vld [vmem:[#allocation7 + $0xd8] sm:$0xff]
    %v4060 = vld [vmem:[#allocation7 + $0xe0] sm:$0xff]
    %v4061 = vld [vmem:[#allocation7 + $0xe8] sm:$0xff]
    %v4062 = vld [vmem:[#allocation7 + $0xf0] sm:$0xff]
    %v4063 = vld [vmem:[#allocation7 + $0xf8] sm:$0xff]
    %v4064 = vld [vmem:[#allocation7 + $0x100] sm:$0xff]
    %v4065 = vld [vmem:[#allocation7 + $0x108] sm:$0xff]
    %v4066 = vld [vmem:[#allocation7 + $0x110] sm:$0xff]
    %v4067 = vld [vmem:[#allocation7 + $0x118] sm:$0xff]
    %v4068 = vld [vmem:[#allocation7 + $0x120] sm:$0xff]
    %v4069 = vld [vmem:[#allocation7 + $0x128] sm:$0xff]
    %v4070 = vld [vmem:[#allocation7 + $0x130] sm:$0xff]
    %v4071 = vld [vmem:[#allocation7 + $0x138] sm:$0xff]
    %v4072 = vld [vmem:[#allocation7 + $0x140] sm:$0xff]
    %v4073 = vld [vmem:[#allocation7 + $0x148] sm:$0xff]
    %v4074 = vld [vmem:[#allocation7 + $0x150] sm:$0xff]
    %v4075 = vld [vmem:[#allocation7 + $0x158] sm:$0xff]
    %v4076 = vld [vmem:[#allocation7 + $0x160] sm:$0xff]
    %v4077 = vld [vmem:[#allocation7 + $0x168] sm:$0xff]
    %v4078 = vld [vmem:[#allocation7 + $0x170] sm:$0xff]
    %v4079 = vld [vmem:[#allocation7 + $0x178] sm:$0xff]
    %v4080 = vld [vmem:[#allocation7 + $0x180] sm:$0xff]
    %v4081 = vld [vmem:[#allocation7 + $0x188] sm:$0xff]
    %v4082 = vld [vmem:[#allocation7 + $0x190] sm:$0xff]
    %v4083 = vld [vmem:[#allocation7 + $0x198] sm:$0xff]
    %v4084 = vld [vmem:[#allocation7 + $0x1a0] sm:$0xff]
    %v4085 = vld [vmem:[#allocation7 + $0x1a8] sm:$0xff]
    %v4086 = vld [vmem:[#allocation7 + $0x1b0] sm:$0xff]
    %v4087 = vld [vmem:[#allocation7 + $0x1b8] sm:$0xff]
    %v4088 = vld [vmem:[#allocation7 + $0x1c0] sm:$0xff]
    %v4089 = vld [vmem:[#allocation7 + $0x1c8] sm:$0xff]
    %v4090 = vld [vmem:[#allocation7 + $0x1d0] sm:$0xff]
    %v4091 = vld [vmem:[#allocation7 + $0x1d8] sm:$0xff]
    %v4092 = vld [vmem:[#allocation7 + $0x1e0] sm:$0xff]
    %v4093 = vld [vmem:[#allocation7 + $0x1e8] sm:$0xff]
    %v4094 = vld [vmem:[#allocation7 + $0x1f0] sm:$0xff]
    %v4095 = vld [vmem:[#allocation7 + $0x1f8] sm:$0xff]
    %4096 = vmatpush.msra.mxu0 %v3535
    %4097 = vmatpush.msra.mxu0 %v3534
    %4098 = vmatpush.msra.mxu0 %v3533
    %4099 = vmatpush.msra.mxu0 %v3532
    %4100 = vmatpush.msra.mxu0 %v3531
    %4101 = vmatpush.msra.mxu0 %v3530
    %4102 = vmatpush.msra.mxu0 %v3529
    %4103 = vmatpush.msra.mxu0 %v3528
    %4104 = vmatpush.msra.mxu0 %v3527
    %4105 = vmatpush.msra.mxu0 %v3526
    %4106 = vmatpush.msra.mxu0 %v3525
    %4107 = vmatpush.msra.mxu0 %v3524
    %4108 = vmatpush.msra.mxu0 %v3523
    %4109 = vmatpush.msra.mxu0 %v3522
    %4110 = vmatpush.msra.mxu0 %v3521
    %4111 = vmatpush.msra.mxu0 %v3520
    %4112 = vmatmul.f32.gmra.mxu0 %v4032
    %v4113 = vpop.f32.mrf.mxu0
    %v4114 = vadd.f32 0.0, %v4113
    %4115 = vmatmul.f32.gmra.mxu0 %v4064
    %v4116 = vpop.f32.mrf.mxu0
    %v4117 = vadd.f32 0.0, %v4116
    %4118 = vdwg.mxu0
    %4119 = vmatpush.msra.mxu0 %v3551
    %4120 = vmatpush.msra.mxu0 %v3550
    %4121 = vmatpush.msra.mxu0 %v3549
    %4122 = vmatpush.msra.mxu0 %v3548
    %4123 = vmatpush.msra.mxu0 %v3547
    %4124 = vmatpush.msra.mxu0 %v3546
    %4125 = vmatpush.msra.mxu0 %v3545
    %4126 = vmatpush.msra.mxu0 %v3544
    %4127 = vmatpush.msra.mxu0 %v3543
    %4128 = vmatpush.msra.mxu0 %v3542
    %4129 = vmatpush.msra.mxu0 %v3541
    %4130 = vmatpush.msra.mxu0 %v3540
    %4131 = vmatpush.msra.mxu0 %v3539
    %4132 = vmatpush.msra.mxu0 %v3538
    %4133 = vmatpush.msra.mxu0 %v3537
    %4134 = vmatpush.msra.mxu0 %v3536
    %4135 = vmatmul.f32.gmra.mxu0 %v4033
    %v4136 = vpop.f32.mrf.mxu0
    %v4137 = vadd.f32 %v4114, %v4136
    %4138 = vmatmul.f32.gmra.mxu0 %v4065
    %v4139 = vpop.f32.mrf.mxu0
    %v4140 = vadd.f32 %v4117, %v4139
    %4141 = vdwg.mxu0
    %4142 = vmatpush.msra.mxu0 %v3567
    %4143 = vmatpush.msra.mxu0 %v3566
    %4144 = vmatpush.msra.mxu0 %v3565
    %4145 = vmatpush.msra.mxu0 %v3564
    %4146 = vmatpush.msra.mxu0 %v3563
    %4147 = vmatpush.msra.mxu0 %v3562
    %4148 = vmatpush.msra.mxu0 %v3561
    %4149 = vmatpush.msra.mxu0 %v3560
    %4150 = vmatpush.msra.mxu0 %v3559
    %4151 = vmatpush.msra.mxu0 %v3558
    %4152 = vmatpush.msra.mxu0 %v3557
    %4153 = vmatpush.msra.mxu0 %v3556
    %4154 = vmatpush.msra.mxu0 %v3555
    %4155 = vmatpush.msra.mxu0 %v3554
    %4156 = vmatpush.msra.mxu0 %v3553
    %4157 = vmatpush.msra.mxu0 %v3552
    %4158 = vmatmul.f32.gmra.mxu0 %v4034
    %v4159 = vpop.f32.mrf.mxu0
    %v4160 = vadd.f32 %v4137, %v4159
    %4161 = vmatmul.f32.gmra.mxu0 %v4066
    %v4162 = vpop.f32.mrf.mxu0
    %v4163 = vadd.f32 %v4140, %v4162
    %4164 = vdwg.mxu0
    %4165 = vmatpush.msra.mxu0 %v3583
    %4166 = vmatpush.msra.mxu0 %v3582
    %4167 = vmatpush.msra.mxu0 %v3581
    %4168 = vmatpush.msra.mxu0 %v3580
    %4169 = vmatpush.msra.mxu0 %v3579
    %4170 = vmatpush.msra.mxu0 %v3578
    %4171 = vmatpush.msra.mxu0 %v3577
    %4172 = vmatpush.msra.mxu0 %v3576
    %4173 = vmatpush.msra.mxu0 %v3575
    %4174 = vmatpush.msra.mxu0 %v3574
    %4175 = vmatpush.msra.mxu0 %v3573
    %4176 = vmatpush.msra.mxu0 %v3572
    %4177 = vmatpush.msra.mxu0 %v3571
    %4178 = vmatpush.msra.mxu0 %v3570
    %4179 = vmatpush.msra.mxu0 %v3569
    %4180 = vmatpush.msra.mxu0 %v3568
    %4181 = vmatmul.f32.gmra.mxu0 %v4035
    %v4182 = vpop.f32.mrf.mxu0
    %v4183 = vadd.f32 %v4160, %v4182
    %4184 = vmatmul.f32.gmra.mxu0 %v4067
    %v4185 = vpop.f32.mrf.mxu0
    %v4186 = vadd.f32 %v4163, %v4185
    %4187 = vdwg.mxu0
    %4188 = vmatpush.msra.mxu0 %v3599
    %4189 = vmatpush.msra.mxu0 %v3598
    %4190 = vmatpush.msra.mxu0 %v3597
    %4191 = vmatpush.msra.mxu0 %v3596
    %4192 = vmatpush.msra.mxu0 %v3595
    %4193 = vmatpush.msra.mxu0 %v3594
    %4194 = vmatpush.msra.mxu0 %v3593
    %4195 = vmatpush.msra.mxu0 %v3592
    %4196 = vmatpush.msra.mxu0 %v3591
    %4197 = vmatpush.msra.mxu0 %v3590
    %4198 = vmatpush.msra.mxu0 %v3589
    %4199 = vmatpush.msra.mxu0 %v3588
    %4200 = vmatpush.msra.mxu0 %v3587
    %4201 = vmatpush.msra.mxu0 %v3586
    %4202 = vmatpush.msra.mxu0 %v3585
    %4203 = vmatpush.msra.mxu0 %v3584
    %4204 = vmatmul.f32.gmra.mxu0 %v4036
    %v4205 = vpop.f32.mrf.mxu0
    %v4206 = vadd.f32 %v4183, %v4205
    %4207 = vmatmul.f32.gmra.mxu0 %v4068
    %v4208 = vpop.f32.mrf.mxu0
    %v4209 = vadd.f32 %v4186, %v4208
    %4210 = vdwg.mxu0
    %4211 = vmatpush.msra.mxu0 %v3615
    %4212 = vmatpush.msra.mxu0 %v3614
    %4213 = vmatpush.msra.mxu0 %v3613
    %4214 = vmatpush.msra.mxu0 %v3612
    %4215 = vmatpush.msra.mxu0 %v3611
    %4216 = vmatpush.msra.mxu0 %v3610
    %4217 = vmatpush.msra.mxu0 %v3609
    %4218 = vmatpush.msra.mxu0 %v3608
    %4219 = vmatpush.msra.mxu0 %v3607
    %4220 = vmatpush.msra.mxu0 %v3606
    %4221 = vmatpush.msra.mxu0 %v3605
    %4222 = vmatpush.msra.mxu0 %v3604
    %4223 = vmatpush.msra.mxu0 %v3603
    %4224 = vmatpush.msra.mxu0 %v3602
    %4225 = vmatpush.msra.mxu0 %v3601
    %4226 = vmatpush.msra.mxu0 %v3600
    %4227 = vmatmul.f32.gmra.mxu0 %v4037
    %v4228 = vpop.f32.mrf.mxu0
    %v4229 = vadd.f32 %v4206, %v4228
    %4230 = vmatmul.f32.gmra.mxu0 %v4069
    %v4231 = vpop.f32.mrf.mxu0
    %v4232 = vadd.f32 %v4209, %v4231
    %4233 = vdwg.mxu0
    %4234 = vmatpush.msra.mxu0 %v3631
    %4235 = vmatpush.msra.mxu0 %v3630
    %4236 = vmatpush.msra.mxu0 %v3629
    %4237 = vmatpush.msra.mxu0 %v3628
    %4238 = vmatpush.msra.mxu0 %v3627
    %4239 = vmatpush.msra.mxu0 %v3626
    %4240 = vmatpush.msra.mxu0 %v3625
    %4241 = vmatpush.msra.mxu0 %v3624
    %4242 = vmatpush.msra.mxu0 %v3623
    %4243 = vmatpush.msra.mxu0 %v3622
    %4244 = vmatpush.msra.mxu0 %v3621
    %4245 = vmatpush.msra.mxu0 %v3620
    %4246 = vmatpush.msra.mxu0 %v3619
    %4247 = vmatpush.msra.mxu0 %v3618
    %4248 = vmatpush.msra.mxu0 %v3617
    %4249 = vmatpush.msra.mxu0 %v3616
    %4250 = vmatmul.f32.gmra.mxu0 %v4038
    %v4251 = vpop.f32.mrf.mxu0
    %v4252 = vadd.f32 %v4229, %v4251
    %4253 = vmatmul.f32.gmra.mxu0 %v4070
    %v4254 = vpop.f32.mrf.mxu0
    %v4255 = vadd.f32 %v4232, %v4254
    %4256 = vdwg.mxu0
    %4257 = vmatpush.msra.mxu0 %v3647
    %4258 = vmatpush.msra.mxu0 %v3646
    %4259 = vmatpush.msra.mxu0 %v3645
    %4260 = vmatpush.msra.mxu0 %v3644
    %4261 = vmatpush.msra.mxu0 %v3643
    %4262 = vmatpush.msra.mxu0 %v3642
    %4263 = vmatpush.msra.mxu0 %v3641
    %4264 = vmatpush.msra.mxu0 %v3640
    %4265 = vmatpush.msra.mxu0 %v3639
    %4266 = vmatpush.msra.mxu0 %v3638
    %4267 = vmatpush.msra.mxu0 %v3637
    %4268 = vmatpush.msra.mxu0 %v3636
    %4269 = vmatpush.msra.mxu0 %v3635
    %4270 = vmatpush.msra.mxu0 %v3634
    %4271 = vmatpush.msra.mxu0 %v3633
    %4272 = vmatpush.msra.mxu0 %v3632
    %4273 = vmatmul.f32.gmra.mxu0 %v4039
    %v4274 = vpop.f32.mrf.mxu0
    %v4275 = vadd.f32 %v4252, %v4274
    %4276 = vmatmul.f32.gmra.mxu0 %v4071
    %v4277 = vpop.f32.mrf.mxu0
    %v4278 = vadd.f32 %v4255, %v4277
    %4279 = vdwg.mxu0
    %4280 = vmatpush.msra.mxu0 %v3663
    %4281 = vmatpush.msra.mxu0 %v3662
    %4282 = vmatpush.msra.mxu0 %v3661
    %4283 = vmatpush.msra.mxu0 %v3660
    %4284 = vmatpush.msra.mxu0 %v3659
    %4285 = vmatpush.msra.mxu0 %v3658
    %4286 = vmatpush.msra.mxu0 %v3657
    %4287 = vmatpush.msra.mxu0 %v3656
    %4288 = vmatpush.msra.mxu0 %v3655
    %4289 = vmatpush.msra.mxu0 %v3654
    %4290 = vmatpush.msra.mxu0 %v3653
    %4291 = vmatpush.msra.mxu0 %v3652
    %4292 = vmatpush.msra.mxu0 %v3651
    %4293 = vmatpush.msra.mxu0 %v3650
    %4294 = vmatpush.msra.mxu0 %v3649
    %4295 = vmatpush.msra.mxu0 %v3648
    %4296 = vmatmul.f32.gmra.mxu0 %v4040
    %v4297 = vpop.f32.mrf.mxu0
    %v4298 = vadd.f32 %v4275, %v4297
    %4299 = vmatmul.f32.gmra.mxu0 %v4072
    %v4300 = vpop.f32.mrf.mxu0
    %v4301 = vadd.f32 %v4278, %v4300
    %4302 = vdwg.mxu0
    %4303 = vmatpush.msra.mxu0 %v3679
    %4304 = vmatpush.msra.mxu0 %v3678
    %4305 = vmatpush.msra.mxu0 %v3677
    %4306 = vmatpush.msra.mxu0 %v3676
    %4307 = vmatpush.msra.mxu0 %v3675
    %4308 = vmatpush.msra.mxu0 %v3674
    %4309 = vmatpush.msra.mxu0 %v3673
    %4310 = vmatpush.msra.mxu0 %v3672
    %4311 = vmatpush.msra.mxu0 %v3671
    %4312 = vmatpush.msra.mxu0 %v3670
    %4313 = vmatpush.msra.mxu0 %v3669
    %4314 = vmatpush.msra.mxu0 %v3668
    %4315 = vmatpush.msra.mxu0 %v3667
    %4316 = vmatpush.msra.mxu0 %v3666
    %4317 = vmatpush.msra.mxu0 %v3665
    %4318 = vmatpush.msra.mxu0 %v3664
    %4319 = vmatmul.f32.gmra.mxu0 %v4041
    %v4320 = vpop.f32.mrf.mxu0
    %v4321 = vadd.f32 %v4298, %v4320
    %4322 = vmatmul.f32.gmra.mxu0 %v4073
    %v4323 = vpop.f32.mrf.mxu0
    %v4324 = vadd.f32 %v4301, %v4323
    %4325 = vdwg.mxu0
    %4326 = vmatpush.msra.mxu0 %v3695
    %4327 = vmatpush.msra.mxu0 %v3694
    %4328 = vmatpush.msra.mxu0 %v3693
    %4329 = vmatpush.msra.mxu0 %v3692
    %4330 = vmatpush.msra.mxu0 %v3691
    %4331 = vmatpush.msra.mxu0 %v3690
    %4332 = vmatpush.msra.mxu0 %v3689
    %4333 = vmatpush.msra.mxu0 %v3688
    %4334 = vmatpush.msra.mxu0 %v3687
    %4335 = vmatpush.msra.mxu0 %v3686
    %4336 = vmatpush.msra.mxu0 %v3685
    %4337 = vmatpush.msra.mxu0 %v3684
    %4338 = vmatpush.msra.mxu0 %v3683
    %4339 = vmatpush.msra.mxu0 %v3682
    %4340 = vmatpush.msra.mxu0 %v3681
    %4341 = vmatpush.msra.mxu0 %v3680
    %4342 = vmatmul.f32.gmra.mxu0 %v4042
    %v4343 = vpop.f32.mrf.mxu0
    %v4344 = vadd.f32 %v4321, %v4343
    %4345 = vmatmul.f32.gmra.mxu0 %v4074
    %v4346 = vpop.f32.mrf.mxu0
    %v4347 = vadd.f32 %v4324, %v4346
    %4348 = vdwg.mxu0
    %4349 = vmatpush.msra.mxu0 %v3711
    %4350 = vmatpush.msra.mxu0 %v3710
    %4351 = vmatpush.msra.mxu0 %v3709
    %4352 = vmatpush.msra.mxu0 %v3708
    %4353 = vmatpush.msra.mxu0 %v3707
    %4354 = vmatpush.msra.mxu0 %v3706
    %4355 = vmatpush.msra.mxu0 %v3705
    %4356 = vmatpush.msra.mxu0 %v3704
    %4357 = vmatpush.msra.mxu0 %v3703
    %4358 = vmatpush.msra.mxu0 %v3702
    %4359 = vmatpush.msra.mxu0 %v3701
    %4360 = vmatpush.msra.mxu0 %v3700
    %4361 = vmatpush.msra.mxu0 %v3699
    %4362 = vmatpush.msra.mxu0 %v3698
    %4363 = vmatpush.msra.mxu0 %v3697
    %4364 = vmatpush.msra.mxu0 %v3696
    %4365 = vmatmul.f32.gmra.mxu0 %v4043
    %v4366 = vpop.f32.mrf.mxu0
    %v4367 = vadd.f32 %v4344, %v4366
    %4368 = vmatmul.f32.gmra.mxu0 %v4075
    %v4369 = vpop.f32.mrf.mxu0
    %v4370 = vadd.f32 %v4347, %v4369
    %4371 = vdwg.mxu0
    %4372 = vmatpush.msra.mxu0 %v3727
    %4373 = vmatpush.msra.mxu0 %v3726
    %4374 = vmatpush.msra.mxu0 %v3725
    %4375 = vmatpush.msra.mxu0 %v3724
    %4376 = vmatpush.msra.mxu0 %v3723
    %4377 = vmatpush.msra.mxu0 %v3722
    %4378 = vmatpush.msra.mxu0 %v3721
    %4379 = vmatpush.msra.mxu0 %v3720
    %4380 = vmatpush.msra.mxu0 %v3719
    %4381 = vmatpush.msra.mxu0 %v3718
    %4382 = vmatpush.msra.mxu0 %v3717
    %4383 = vmatpush.msra.mxu0 %v3716
    %4384 = vmatpush.msra.mxu0 %v3715
    %4385 = vmatpush.msra.mxu0 %v3714
    %4386 = vmatpush.msra.mxu0 %v3713
    %4387 = vmatpush.msra.mxu0 %v3712
    %4388 = vmatmul.f32.gmra.mxu0 %v4044
    %v4389 = vpop.f32.mrf.mxu0
    %v4390 = vadd.f32 %v4367, %v4389
    %4391 = vmatmul.f32.gmra.mxu0 %v4076
    %v4392 = vpop.f32.mrf.mxu0
    %v4393 = vadd.f32 %v4370, %v4392
    %4394 = vdwg.mxu0
    %4395 = vmatpush.msra.mxu0 %v3743
    %4396 = vmatpush.msra.mxu0 %v3742
    %4397 = vmatpush.msra.mxu0 %v3741
    %4398 = vmatpush.msra.mxu0 %v3740
    %4399 = vmatpush.msra.mxu0 %v3739
    %4400 = vmatpush.msra.mxu0 %v3738
    %4401 = vmatpush.msra.mxu0 %v3737
    %4402 = vmatpush.msra.mxu0 %v3736
    %4403 = vmatpush.msra.mxu0 %v3735
    %4404 = vmatpush.msra.mxu0 %v3734
    %4405 = vmatpush.msra.mxu0 %v3733
    %4406 = vmatpush.msra.mxu0 %v3732
    %4407 = vmatpush.msra.mxu0 %v3731
    %4408 = vmatpush.msra.mxu0 %v3730
    %4409 = vmatpush.msra.mxu0 %v3729
    %4410 = vmatpush.msra.mxu0 %v3728
    %4411 = vmatmul.f32.gmra.mxu0 %v4045
    %v4412 = vpop.f32.mrf.mxu0
    %v4413 = vadd.f32 %v4390, %v4412
    %4414 = vmatmul.f32.gmra.mxu0 %v4077
    %v4415 = vpop.f32.mrf.mxu0
    %v4416 = vadd.f32 %v4393, %v4415
    %4417 = vdwg.mxu0
    %4418 = vmatpush.msra.mxu0 %v3759
    %4419 = vmatpush.msra.mxu0 %v3758
    %4420 = vmatpush.msra.mxu0 %v3757
    %4421 = vmatpush.msra.mxu0 %v3756
    %4422 = vmatpush.msra.mxu0 %v3755
    %4423 = vmatpush.msra.mxu0 %v3754
    %4424 = vmatpush.msra.mxu0 %v3753
    %4425 = vmatpush.msra.mxu0 %v3752
    %4426 = vmatpush.msra.mxu0 %v3751
    %4427 = vmatpush.msra.mxu0 %v3750
    %4428 = vmatpush.msra.mxu0 %v3749
    %4429 = vmatpush.msra.mxu0 %v3748
    %4430 = vmatpush.msra.mxu0 %v3747
    %4431 = vmatpush.msra.mxu0 %v3746
    %4432 = vmatpush.msra.mxu0 %v3745
    %4433 = vmatpush.msra.mxu0 %v3744
    %4434 = vmatmul.f32.gmra.mxu0 %v4046
    %v4435 = vpop.f32.mrf.mxu0
    %v4436 = vadd.f32 %v4413, %v4435
    %4437 = vmatmul.f32.gmra.mxu0 %v4078
    %v4438 = vpop.f32.mrf.mxu0
    %v4439 = vadd.f32 %v4416, %v4438
    %4440 = vdwg.mxu0
    %4441 = vmatpush.msra.mxu0 %v3775
    %4442 = vmatpush.msra.mxu0 %v3774
    %4443 = vmatpush.msra.mxu0 %v3773
    %4444 = vmatpush.msra.mxu0 %v3772
    %4445 = vmatpush.msra.mxu0 %v3771
    %4446 = vmatpush.msra.mxu0 %v3770
    %4447 = vmatpush.msra.mxu0 %v3769
    %4448 = vmatpush.msra.mxu0 %v3768
    %4449 = vmatpush.msra.mxu0 %v3767
    %4450 = vmatpush.msra.mxu0 %v3766
    %4451 = vmatpush.msra.mxu0 %v3765
    %4452 = vmatpush.msra.mxu0 %v3764
    %4453 = vmatpush.msra.mxu0 %v3763
    %4454 = vmatpush.msra.mxu0 %v3762
    %4455 = vmatpush.msra.mxu0 %v3761
    %4456 = vmatpush.msra.mxu0 %v3760
    %4457 = vmatmul.f32.gmra.mxu0 %v4047
    %v4458 = vpop.f32.mrf.mxu0
    %v4459 = vadd.f32 %v4436, %v4458
    %4460 = vmatmul.f32.gmra.mxu0 %v4079
    %v4461 = vpop.f32.mrf.mxu0
    %v4462 = vadd.f32 %v4439, %v4461
    %4463 = vdwg.mxu0
    %4464 = vmatpush.msra.mxu0 %v3791
    %4465 = vmatpush.msra.mxu0 %v3790
    %4466 = vmatpush.msra.mxu0 %v3789
    %4467 = vmatpush.msra.mxu0 %v3788
    %4468 = vmatpush.msra.mxu0 %v3787
    %4469 = vmatpush.msra.mxu0 %v3786
    %4470 = vmatpush.msra.mxu0 %v3785
    %4471 = vmatpush.msra.mxu0 %v3784
    %4472 = vmatpush.msra.mxu0 %v3783
    %4473 = vmatpush.msra.mxu0 %v3782
    %4474 = vmatpush.msra.mxu0 %v3781
    %4475 = vmatpush.msra.mxu0 %v3780
    %4476 = vmatpush.msra.mxu0 %v3779
    %4477 = vmatpush.msra.mxu0 %v3778
    %4478 = vmatpush.msra.mxu0 %v3777
    %4479 = vmatpush.msra.mxu0 %v3776
    %4480 = vmatmul.f32.gmra.mxu0 %v4048
    %v4481 = vpop.f32.mrf.mxu0
    %v4482 = vadd.f32 %v4459, %v4481
    %4483 = vmatmul.f32.gmra.mxu0 %v4080
    %v4484 = vpop.f32.mrf.mxu0
    %v4485 = vadd.f32 %v4462, %v4484
    %4486 = vdwg.mxu0
    %4487 = vmatpush.msra.mxu0 %v3807
    %4488 = vmatpush.msra.mxu0 %v3806
    %4489 = vmatpush.msra.mxu0 %v3805
    %4490 = vmatpush.msra.mxu0 %v3804
    %4491 = vmatpush.msra.mxu0 %v3803
    %4492 = vmatpush.msra.mxu0 %v3802
    %4493 = vmatpush.msra.mxu0 %v3801
    %4494 = vmatpush.msra.mxu0 %v3800
    %4495 = vmatpush.msra.mxu0 %v3799
    %4496 = vmatpush.msra.mxu0 %v3798
    %4497 = vmatpush.msra.mxu0 %v3797
    %4498 = vmatpush.msra.mxu0 %v3796
    %4499 = vmatpush.msra.mxu0 %v3795
    %4500 = vmatpush.msra.mxu0 %v3794
    %4501 = vmatpush.msra.mxu0 %v3793
    %4502 = vmatpush.msra.mxu0 %v3792
    %4503 = vmatmul.f32.gmra.mxu0 %v4049
    %v4504 = vpop.f32.mrf.mxu0
    %v4505 = vadd.f32 %v4482, %v4504
    %4506 = vmatmul.f32.gmra.mxu0 %v4081
    %v4507 = vpop.f32.mrf.mxu0
    %v4508 = vadd.f32 %v4485, %v4507
    %4509 = vdwg.mxu0
    %4510 = vmatpush.msra.mxu0 %v3823
    %4511 = vmatpush.msra.mxu0 %v3822
    %4512 = vmatpush.msra.mxu0 %v3821
    %4513 = vmatpush.msra.mxu0 %v3820
    %4514 = vmatpush.msra.mxu0 %v3819
    %4515 = vmatpush.msra.mxu0 %v3818
    %4516 = vmatpush.msra.mxu0 %v3817
    %4517 = vmatpush.msra.mxu0 %v3816
    %4518 = vmatpush.msra.mxu0 %v3815
    %4519 = vmatpush.msra.mxu0 %v3814
    %4520 = vmatpush.msra.mxu0 %v3813
    %4521 = vmatpush.msra.mxu0 %v3812
    %4522 = vmatpush.msra.mxu0 %v3811
    %4523 = vmatpush.msra.mxu0 %v3810
    %4524 = vmatpush.msra.mxu0 %v3809
    %4525 = vmatpush.msra.mxu0 %v3808
    %4526 = vmatmul.f32.gmra.mxu0 %v4050
    %v4527 = vpop.f32.mrf.mxu0
    %v4528 = vadd.f32 %v4505, %v4527
    %4529 = vmatmul.f32.gmra.mxu0 %v4082
    %v4530 = vpop.f32.mrf.mxu0
    %v4531 = vadd.f32 %v4508, %v4530
    %4532 = vdwg.mxu0
    %4533 = vmatpush.msra.mxu0 %v3839
    %4534 = vmatpush.msra.mxu0 %v3838
    %4535 = vmatpush.msra.mxu0 %v3837
    %4536 = vmatpush.msra.mxu0 %v3836
    %4537 = vmatpush.msra.mxu0 %v3835
    %4538 = vmatpush.msra.mxu0 %v3834
    %4539 = vmatpush.msra.mxu0 %v3833
    %4540 = vmatpush.msra.mxu0 %v3832
    %4541 = vmatpush.msra.mxu0 %v3831
    %4542 = vmatpush.msra.mxu0 %v3830
    %4543 = vmatpush.msra.mxu0 %v3829
    %4544 = vmatpush.msra.mxu0 %v3828
    %4545 = vmatpush.msra.mxu0 %v3827
    %4546 = vmatpush.msra.mxu0 %v3826
    %4547 = vmatpush.msra.mxu0 %v3825
    %4548 = vmatpush.msra.mxu0 %v3824
    %4549 = vmatmul.f32.gmra.mxu0 %v4051
    %v4550 = vpop.f32.mrf.mxu0
    %v4551 = vadd.f32 %v4528, %v4550
    %4552 = vmatmul.f32.gmra.mxu0 %v4083
    %v4553 = vpop.f32.mrf.mxu0
    %v4554 = vadd.f32 %v4531, %v4553
    %4555 = vdwg.mxu0
    %4556 = vmatpush.msra.mxu0 %v3855
    %4557 = vmatpush.msra.mxu0 %v3854
    %4558 = vmatpush.msra.mxu0 %v3853
    %4559 = vmatpush.msra.mxu0 %v3852
    %4560 = vmatpush.msra.mxu0 %v3851
    %4561 = vmatpush.msra.mxu0 %v3850
    %4562 = vmatpush.msra.mxu0 %v3849
    %4563 = vmatpush.msra.mxu0 %v3848
    %4564 = vmatpush.msra.mxu0 %v3847
    %4565 = vmatpush.msra.mxu0 %v3846
    %4566 = vmatpush.msra.mxu0 %v3845
    %4567 = vmatpush.msra.mxu0 %v3844
    %4568 = vmatpush.msra.mxu0 %v3843
    %4569 = vmatpush.msra.mxu0 %v3842
    %4570 = vmatpush.msra.mxu0 %v3841
    %4571 = vmatpush.msra.mxu0 %v3840
    %4572 = vmatmul.f32.gmra.mxu0 %v4052
    %v4573 = vpop.f32.mrf.mxu0
    %v4574 = vadd.f32 %v4551, %v4573
    %4575 = vmatmul.f32.gmra.mxu0 %v4084
    %v4576 = vpop.f32.mrf.mxu0
    %v4577 = vadd.f32 %v4554, %v4576
    %4578 = vdwg.mxu0
    %4579 = vmatpush.msra.mxu0 %v3871
    %4580 = vmatpush.msra.mxu0 %v3870
    %4581 = vmatpush.msra.mxu0 %v3869
    %4582 = vmatpush.msra.mxu0 %v3868
    %4583 = vmatpush.msra.mxu0 %v3867
    %4584 = vmatpush.msra.mxu0 %v3866
    %4585 = vmatpush.msra.mxu0 %v3865
    %4586 = vmatpush.msra.mxu0 %v3864
    %4587 = vmatpush.msra.mxu0 %v3863
    %4588 = vmatpush.msra.mxu0 %v3862
    %4589 = vmatpush.msra.mxu0 %v3861
    %4590 = vmatpush.msra.mxu0 %v3860
    %4591 = vmatpush.msra.mxu0 %v3859
    %4592 = vmatpush.msra.mxu0 %v3858
    %4593 = vmatpush.msra.mxu0 %v3857
    %4594 = vmatpush.msra.mxu0 %v3856
    %4595 = vmatmul.f32.gmra.mxu0 %v4053
    %v4596 = vpop.f32.mrf.mxu0
    %v4597 = vadd.f32 %v4574, %v4596
    %4598 = vmatmul.f32.gmra.mxu0 %v4085
    %v4599 = vpop.f32.mrf.mxu0
    %v4600 = vadd.f32 %v4577, %v4599
    %4601 = vdwg.mxu0
    %4602 = vmatpush.msra.mxu0 %v3887
    %4603 = vmatpush.msra.mxu0 %v3886
    %4604 = vmatpush.msra.mxu0 %v3885
    %4605 = vmatpush.msra.mxu0 %v3884
    %4606 = vmatpush.msra.mxu0 %v3883
    %4607 = vmatpush.msra.mxu0 %v3882
    %4608 = vmatpush.msra.mxu0 %v3881
    %4609 = vmatpush.msra.mxu0 %v3880
    %4610 = vmatpush.msra.mxu0 %v3879
    %4611 = vmatpush.msra.mxu0 %v3878
    %4612 = vmatpush.msra.mxu0 %v3877
    %4613 = vmatpush.msra.mxu0 %v3876
    %4614 = vmatpush.msra.mxu0 %v3875
    %4615 = vmatpush.msra.mxu0 %v3874
    %4616 = vmatpush.msra.mxu0 %v3873
    %4617 = vmatpush.msra.mxu0 %v3872
    %4618 = vmatmul.f32.gmra.mxu0 %v4054
    %v4619 = vpop.f32.mrf.mxu0
    %v4620 = vadd.f32 %v4597, %v4619
    %4621 = vmatmul.f32.gmra.mxu0 %v4086
    %v4622 = vpop.f32.mrf.mxu0
    %v4623 = vadd.f32 %v4600, %v4622
    %4624 = vdwg.mxu0
    %4625 = vmatpush.msra.mxu0 %v3903
    %4626 = vmatpush.msra.mxu0 %v3902
    %4627 = vmatpush.msra.mxu0 %v3901
    %4628 = vmatpush.msra.mxu0 %v3900
    %4629 = vmatpush.msra.mxu0 %v3899
    %4630 = vmatpush.msra.mxu0 %v3898
    %4631 = vmatpush.msra.mxu0 %v3897
    %4632 = vmatpush.msra.mxu0 %v3896
    %4633 = vmatpush.msra.mxu0 %v3895
    %4634 = vmatpush.msra.mxu0 %v3894
    %4635 = vmatpush.msra.mxu0 %v3893
    %4636 = vmatpush.msra.mxu0 %v3892
    %4637 = vmatpush.msra.mxu0 %v3891
    %4638 = vmatpush.msra.mxu0 %v3890
    %4639 = vmatpush.msra.mxu0 %v3889
    %4640 = vmatpush.msra.mxu0 %v3888
    %4641 = vmatmul.f32.gmra.mxu0 %v4055
    %v4642 = vpop.f32.mrf.mxu0
    %v4643 = vadd.f32 %v4620, %v4642
    %4644 = vmatmul.f32.gmra.mxu0 %v4087
    %v4645 = vpop.f32.mrf.mxu0
    %v4646 = vadd.f32 %v4623, %v4645
    %4647 = vdwg.mxu0
    %4648 = vmatpush.msra.mxu0 %v3919
    %4649 = vmatpush.msra.mxu0 %v3918
    %4650 = vmatpush.msra.mxu0 %v3917
    %4651 = vmatpush.msra.mxu0 %v3916
    %4652 = vmatpush.msra.mxu0 %v3915
    %4653 = vmatpush.msra.mxu0 %v3914
    %4654 = vmatpush.msra.mxu0 %v3913
    %4655 = vmatpush.msra.mxu0 %v3912
    %4656 = vmatpush.msra.mxu0 %v3911
    %4657 = vmatpush.msra.mxu0 %v3910
    %4658 = vmatpush.msra.mxu0 %v3909
    %4659 = vmatpush.msra.mxu0 %v3908
    %4660 = vmatpush.msra.mxu0 %v3907
    %4661 = vmatpush.msra.mxu0 %v3906
    %4662 = vmatpush.msra.mxu0 %v3905
    %4663 = vmatpush.msra.mxu0 %v3904
    %4664 = vmatmul.f32.gmra.mxu0 %v4056
    %v4665 = vpop.f32.mrf.mxu0
    %v4666 = vadd.f32 %v4643, %v4665
    %4667 = vmatmul.f32.gmra.mxu0 %v4088
    %v4668 = vpop.f32.mrf.mxu0
    %v4669 = vadd.f32 %v4646, %v4668
    %4670 = vdwg.mxu0
    %4671 = vmatpush.msra.mxu0 %v3935
    %4672 = vmatpush.msra.mxu0 %v3934
    %4673 = vmatpush.msra.mxu0 %v3933
    %4674 = vmatpush.msra.mxu0 %v3932
    %4675 = vmatpush.msra.mxu0 %v3931
    %4676 = vmatpush.msra.mxu0 %v3930
    %4677 = vmatpush.msra.mxu0 %v3929
    %4678 = vmatpush.msra.mxu0 %v3928
    %4679 = vmatpush.msra.mxu0 %v3927
    %4680 = vmatpush.msra.mxu0 %v3926
    %4681 = vmatpush.msra.mxu0 %v3925
    %4682 = vmatpush.msra.mxu0 %v3924
    %4683 = vmatpush.msra.mxu0 %v3923
    %4684 = vmatpush.msra.mxu0 %v3922
    %4685 = vmatpush.msra.mxu0 %v3921
    %4686 = vmatpush.msra.mxu0 %v3920
    %4687 = vmatmul.f32.gmra.mxu0 %v4057
    %v4688 = vpop.f32.mrf.mxu0
    %v4689 = vadd.f32 %v4666, %v4688
    %4690 = vmatmul.f32.gmra.mxu0 %v4089
    %v4691 = vpop.f32.mrf.mxu0
    %v4692 = vadd.f32 %v4669, %v4691
    %4693 = vdwg.mxu0
    %4694 = vmatpush.msra.mxu0 %v3951
    %4695 = vmatpush.msra.mxu0 %v3950
    %4696 = vmatpush.msra.mxu0 %v3949
    %4697 = vmatpush.msra.mxu0 %v3948
    %4698 = vmatpush.msra.mxu0 %v3947
    %4699 = vmatpush.msra.mxu0 %v3946
    %4700 = vmatpush.msra.mxu0 %v3945
    %4701 = vmatpush.msra.mxu0 %v3944
    %4702 = vmatpush.msra.mxu0 %v3943
    %4703 = vmatpush.msra.mxu0 %v3942
    %4704 = vmatpush.msra.mxu0 %v3941
    %4705 = vmatpush.msra.mxu0 %v3940
    %4706 = vmatpush.msra.mxu0 %v3939
    %4707 = vmatpush.msra.mxu0 %v3938
    %4708 = vmatpush.msra.mxu0 %v3937
    %4709 = vmatpush.msra.mxu0 %v3936
    %4710 = vmatmul.f32.gmra.mxu0 %v4058
    %v4711 = vpop.f32.mrf.mxu0
    %v4712 = vadd.f32 %v4689, %v4711
    %4713 = vmatmul.f32.gmra.mxu0 %v4090
    %v4714 = vpop.f32.mrf.mxu0
    %v4715 = vadd.f32 %v4692, %v4714
    %4716 = vdwg.mxu0
    %4717 = vmatpush.msra.mxu0 %v3967
    %4718 = vmatpush.msra.mxu0 %v3966
    %4719 = vmatpush.msra.mxu0 %v3965
    %4720 = vmatpush.msra.mxu0 %v3964
    %4721 = vmatpush.msra.mxu0 %v3963
    %4722 = vmatpush.msra.mxu0 %v3962
    %4723 = vmatpush.msra.mxu0 %v3961
    %4724 = vmatpush.msra.mxu0 %v3960
    %4725 = vmatpush.msra.mxu0 %v3959
    %4726 = vmatpush.msra.mxu0 %v3958
    %4727 = vmatpush.msra.mxu0 %v3957
    %4728 = vmatpush.msra.mxu0 %v3956
    %4729 = vmatpush.msra.mxu0 %v3955
    %4730 = vmatpush.msra.mxu0 %v3954
    %4731 = vmatpush.msra.mxu0 %v3953
    %4732 = vmatpush.msra.mxu0 %v3952
    %4733 = vmatmul.f32.gmra.mxu0 %v4059
    %v4734 = vpop.f32.mrf.mxu0
    %v4735 = vadd.f32 %v4712, %v4734
    %4736 = vmatmul.f32.gmra.mxu0 %v4091
    %v4737 = vpop.f32.mrf.mxu0
    %v4738 = vadd.f32 %v4715, %v4737
    %4739 = vdwg.mxu0
    %4740 = vmatpush.msra.mxu0 %v3983
    %4741 = vmatpush.msra.mxu0 %v3982
    %4742 = vmatpush.msra.mxu0 %v3981
    %4743 = vmatpush.msra.mxu0 %v3980
    %4744 = vmatpush.msra.mxu0 %v3979
    %4745 = vmatpush.msra.mxu0 %v3978
    %4746 = vmatpush.msra.mxu0 %v3977
    %4747 = vmatpush.msra.mxu0 %v3976
    %4748 = vmatpush.msra.mxu0 %v3975
    %4749 = vmatpush.msra.mxu0 %v3974
    %4750 = vmatpush.msra.mxu0 %v3973
    %4751 = vmatpush.msra.mxu0 %v3972
    %4752 = vmatpush.msra.mxu0 %v3971
    %4753 = vmatpush.msra.mxu0 %v3970
    %4754 = vmatpush.msra.mxu0 %v3969
    %4755 = vmatpush.msra.mxu0 %v3968
    %4756 = vmatmul.f32.gmra.mxu0 %v4060
    %v4757 = vpop.f32.mrf.mxu0
    %v4758 = vadd.f32 %v4735, %v4757
    %4759 = vmatmul.f32.gmra.mxu0 %v4092
    %v4760 = vpop.f32.mrf.mxu0
    %v4761 = vadd.f32 %v4738, %v4760
    %4762 = vdwg.mxu0
    %4763 = vmatpush.msra.mxu0 %v3999
    %4764 = vmatpush.msra.mxu0 %v3998
    %4765 = vmatpush.msra.mxu0 %v3997
    %4766 = vmatpush.msra.mxu0 %v3996
    %4767 = vmatpush.msra.mxu0 %v3995
    %4768 = vmatpush.msra.mxu0 %v3994
    %4769 = vmatpush.msra.mxu0 %v3993
    %4770 = vmatpush.msra.mxu0 %v3992
    %4771 = vmatpush.msra.mxu0 %v3991
    %4772 = vmatpush.msra.mxu0 %v3990
    %4773 = vmatpush.msra.mxu0 %v3989
    %4774 = vmatpush.msra.mxu0 %v3988
    %4775 = vmatpush.msra.mxu0 %v3987
    %4776 = vmatpush.msra.mxu0 %v3986
    %4777 = vmatpush.msra.mxu0 %v3985
    %4778 = vmatpush.msra.mxu0 %v3984
    %4779 = vmatmul.f32.gmra.mxu0 %v4061
    %v4780 = vpop.f32.mrf.mxu0
    %v4781 = vadd.f32 %v4758, %v4780
    %4782 = vmatmul.f32.gmra.mxu0 %v4093
    %v4783 = vpop.f32.mrf.mxu0
    %v4784 = vadd.f32 %v4761, %v4783
    %4785 = vdwg.mxu0
    %4786 = vmatpush.msra.mxu0 %v4015
    %4787 = vmatpush.msra.mxu0 %v4014
    %4788 = vmatpush.msra.mxu0 %v4013
    %4789 = vmatpush.msra.mxu0 %v4012
    %4790 = vmatpush.msra.mxu0 %v4011
    %4791 = vmatpush.msra.mxu0 %v4010
    %4792 = vmatpush.msra.mxu0 %v4009
    %4793 = vmatpush.msra.mxu0 %v4008
    %4794 = vmatpush.msra.mxu0 %v4007
    %4795 = vmatpush.msra.mxu0 %v4006
    %4796 = vmatpush.msra.mxu0 %v4005
    %4797 = vmatpush.msra.mxu0 %v4004
    %4798 = vmatpush.msra.mxu0 %v4003
    %4799 = vmatpush.msra.mxu0 %v4002
    %4800 = vmatpush.msra.mxu0 %v4001
    %4801 = vmatpush.msra.mxu0 %v4000
    %4802 = vmatmul.f32.gmra.mxu0 %v4062
    %v4803 = vpop.f32.mrf.mxu0
    %v4804 = vadd.f32 %v4781, %v4803
    %4805 = vmatmul.f32.gmra.mxu0 %v4094
    %v4806 = vpop.f32.mrf.mxu0
    %v4807 = vadd.f32 %v4784, %v4806
    %4808 = vdwg.mxu0
    %4809 = vmatpush.msra.mxu0 %v4031
    %4810 = vmatpush.msra.mxu0 %v4030
    %4811 = vmatpush.msra.mxu0 %v4029
    %4812 = vmatpush.msra.mxu0 %v4028
    %4813 = vmatpush.msra.mxu0 %v4027
    %4814 = vmatpush.msra.mxu0 %v4026
    %4815 = vmatpush.msra.mxu0 %v4025
    %4816 = vmatpush.msra.mxu0 %v4024
    %4817 = vmatpush.msra.mxu0 %v4023
    %4818 = vmatpush.msra.mxu0 %v4022
    %4819 = vmatpush.msra.mxu0 %v4021
    %4820 = vmatpush.msra.mxu0 %v4020
    %4821 = vmatpush.msra.mxu0 %v4019
    %4822 = vmatpush.msra.mxu0 %v4018
    %4823 = vmatpush.msra.mxu0 %v4017
    %4824 = vmatpush.msra.mxu0 %v4016
    %4825 = vmatmul.f32.gmra.mxu0 %v4063
    %v4826 = vpop.f32.mrf.mxu0
    %v4827 = vadd.f32 %v4804, %v4826
    %4828 = vmatmul.f32.gmra.mxu0 %v4095
    %v4829 = vpop.f32.mrf.mxu0
    %v4830 = vadd.f32 %v4807, %v4829
    %4831 = vdwg.mxu0
    %v4832 = vld [vmem:[%s4] sm:$0xff]
    %v4833 = vld [vmem:[%s4 + $0x8] sm:$0xff]
    %v4834 = vld [vmem:[%s4 + $0x10] sm:$0xff]
    %v4835 = vld [vmem:[%s4 + $0x18] sm:$0xff]
    %v4836 = vld [vmem:[%s4 + $0x20] sm:$0xff]
    %v4837 = vld [vmem:[%s4 + $0x28] sm:$0xff]
    %v4838 = vld [vmem:[%s4 + $0x30] sm:$0xff]
    %v4839 = vld [vmem:[%s4 + $0x38] sm:$0xff]
    %v4840 = vld [vmem:[%s4 + $0x40] sm:$0xff]
    %v4841 = vld [vmem:[%s4 + $0x48] sm:$0xff]
    %v4842 = vld [vmem:[%s4 + $0x50] sm:$0xff]
    %v4843 = vld [vmem:[%s4 + $0x58] sm:$0xff]
    %v4844 = vld [vmem:[%s4 + $0x60] sm:$0xff]
    %v4845 = vld [vmem:[%s4 + $0x68] sm:$0xff]
    %v4846 = vld [vmem:[%s4 + $0x70] sm:$0xff]
    %v4847 = vld [vmem:[%s4 + $0x78] sm:$0xff]
    %v4848 = vld [vmem:[#allocation8] sm:$0x1]
    %v4850 = vperm.slane %v4848, 0
    %4852 = vmatpush.msra.mxu0 %v4847
    %4853 = vmatpush.msra.mxu0 %v4846
    %4854 = vmatpush.msra.mxu0 %v4845
    %4855 = vmatpush.msra.mxu0 %v4844
    %4856 = vmatpush.msra.mxu0 %v4843
    %4857 = vmatpush.msra.mxu0 %v4842
    %4858 = vmatpush.msra.mxu0 %v4841
    %4859 = vmatpush.msra.mxu0 %v4840
    %4860 = vmatpush.msra.mxu0 %v4839
    %4861 = vmatpush.msra.mxu0 %v4838
    %4862 = vmatpush.msra.mxu0 %v4837
    %4863 = vmatpush.msra.mxu0 %v4836
    %4864 = vmatpush.msra.mxu0 %v4835
    %4865 = vmatpush.msra.mxu0 %v4834
    %4866 = vmatpush.msra.mxu0 %v4833
    %4867 = vmatpush.msra.mxu0 %v4832
    %4868 = vmatmul.f32.gmra.mxu0 %v4827
    %v4869 = vpop.f32.mrf.mxu0
    %v4870 = vadd.f32 %v4850, %v4869
    %4871 = vmatmul.f32.gmra.mxu0 %v4830
    %v4872 = vpop.f32.mrf.mxu0
    %v4873 = vadd.f32 %v4850, %v4872
    %4874 = vdwg.mxu0
    %v4875 = vmax.f32 %v4870, 0.0
    %v4876 = vmax.f32 %v4873, 0.0
    %v4877 = vld [vmem:[#allocation10] sm:$0xff]
    %v4878 = vld [vmem:[#allocation10 + $0x8] sm:$0xff]
    %v4879 = vld [vmem:[#allocation10 + $0x10] sm:$0xff]
    %v4880 = vld [vmem:[#allocation10 + $0x18] sm:$0xff]
    %v4881 = vld [vmem:[#allocation10 + $0x20] sm:$0xff]
    %v4882 = vld [vmem:[#allocation10 + $0x28] sm:$0xff]
    %v4883 = vld [vmem:[#allocation10 + $0x30] sm:$0xff]
    %v4884 = vld [vmem:[#allocation10 + $0x38] sm:$0xff]
    %v4885 = vld [vmem:[#allocation10 + $0x40] sm:$0xff]
    %v4886 = vld [vmem:[#allocation10 + $0x48] sm:$0xff]
    %v4887 = vld [vmem:[#allocation10 + $0x50] sm:$0xff]
    %v4888 = vld [vmem:[#allocation10 + $0x58] sm:$0xff]
    %v4889 = vld [vmem:[#allocation10 + $0x60] sm:$0xff]
    %v4890 = vld [vmem:[#allocation10 + $0x68] sm:$0xff]
    %v4891 = vld [vmem:[#allocation10 + $0x70] sm:$0xff]
    %v4892 = vld [vmem:[#allocation10 + $0x78] sm:$0xff]
    %4893 = vmatpush.msra.mxu0 %v4892
    %4894 = vmatpush.msra.mxu0 %v4891
    %4895 = vmatpush.msra.mxu0 %v4890
    %4896 = vmatpush.msra.mxu0 %v4889
    %4897 = vmatpush.msra.mxu0 %v4888
    %4898 = vmatpush.msra.mxu0 %v4887
    %4899 = vmatpush.msra.mxu0 %v4886
    %4900 = vmatpush.msra.mxu0 %v4885
    %4901 = vmatpush.msra.mxu0 %v4884
    %4902 = vmatpush.msra.mxu0 %v4883
    %4903 = vmatpush.msra.mxu0 %v4882
    %4904 = vmatpush.msra.mxu0 %v4881
    %4905 = vmatpush.msra.mxu0 %v4880
    %4906 = vmatpush.msra.mxu0 %v4879
    %4907 = vmatpush.msra.mxu0 %v4878
    %4908 = vmatpush.msra.mxu0 %v4877
    %4909 = vmatmul.f32.gmra.mxu0 %v4875
    %v4910 = vpop.f32.mrf.mxu0
    %v4911 = vadd.f32 0.0, %v4910
    %4912 = vmatmul.f32.gmra.mxu0 %v4876
    %v4913 = vpop.f32.mrf.mxu0
    %v4914 = vadd.f32 0.0, %v4913
    %4915 = vdwg.mxu0
    %v4916 = vtanh.pop %v4911
    %v4917 = vtanh.pop %v4914
    %v4918 = vld [vmem:[%s7] sm:$0x1]
    %v4920 = vperm.slane %v4918, 0
    %v4922 = vmul.f32 %v4916, %v4920
    %v4923 = vmul.f32 %v4917, %v4920
    %4924 = vadd.xlane.f32.xlu0 %v4922
    %v4925 = vpop.xlane.xlu0 %4924
    %4926 = vadd.xlane.f32.xlu0 %v4923
    %v4927 = vpop.xlane.xlu0 %4926
    %v4928 = vmax.f32 %v4925, %v4927
    %v4929 = vrot.slane %v4928, 4
    %v4930 = vmax.f32 %v4928, %v4929
    %v4931 = vrot.slane %v4930, 2
    %v4932 = vmax.f32 %v4930, %v4931
    %v4933 = vrot.slane %v4932, 1
    %v4934 = vmax.f32 %v4932, %v4933
    %v4935 = vsub.f32 %v4925, %v4934
    %v4936 = vsub.f32 %v4927, %v4934
    %v4937 = vmul.f32 %v4935, 1.442695
    %v4938 = vpow.pop %v4937
    %v4939 = vmul.f32 %v4936, 1.442695
    %v4940 = vpow.pop %v4939
    %v4941 = vld [vmem:[%s8] sm:$0x3]
    %v4942 = vmul.f32 %v4938, %v4875
    %v4943 = vmul.f32 %v4940, %v4876
    %vm4944 = vcmask 130048
    %v4946 = vsel %vm4944, %v4941, 0
    %4948 = vmatpush.msra.mxu0 0.0
    %4949 = vmatpush.msra.mxu0 0.0
    %4950 = vmatpush.msra.mxu0 0.0
    %4951 = vmatpush.msra.mxu0 0.0
    %4952 = vmatpush.msra.mxu0 0.0
    %4953 = vmatpush.msra.mxu0 0.0
    %4954 = vmatpush.msra.mxu0 0.0
    %4955 = vmatpush.msra.mxu0 0.0
    %4956 = vmatpush.msra.mxu0 0.0
    %4957 = vmatpush.msra.mxu0 0.0
    %4958 = vmatpush.msra.mxu0 0.0
    %4959 = vmatpush.msra.mxu0 0.0
    %4960 = vmatpush.msra.mxu0 0.0
    %4961 = vmatpush.msra.mxu0 0.0
    %4962 = vmatpush.msra.mxu0 %v4943
    %4963 = vmatpush.msra.mxu0 %v4942
    %4964 = vmatmul.f32.gmra.mxu0 %v4946
    %v4965 = vpop.f32.mrf.mxu0
    %v4966 = vadd.f32 0.0, %v4965
    %4967 = vdwg.mxu0
    %4968 = vmatpush.msra.mxu0 0.0
    %4969 = vmatpush.msra.mxu0 0.0
    %4970 = vmatpush.msra.mxu0 0.0
    %4971 = vmatpush.msra.mxu0 0.0
    %4972 = vmatpush.msra.mxu0 0.0
    %4973 = vmatpush.msra.mxu0 0.0
    %4974 = vmatpush.msra.mxu0 0.0
    %4975 = vmatpush.msra.mxu0 0.0
    %4976 = vmatpush.msra.mxu0 0.0
    %4977 = vmatpush.msra.mxu0 0.0
    %4978 = vmatpush.msra.mxu0 0.0
    %4979 = vmatpush.msra.mxu0 0.0
    %4980 = vmatpush.msra.mxu0 0.0
    %4981 = vmatpush.msra.mxu0 0.0
    %4982 = vmatpush.msra.mxu0 %v4940
    %4983 = vmatpush.msra.mxu0 %v4938
    %4984 = vmatmul.f32.gmra.mxu0 %v4946
    %v4985 = vpop.f32.mrf.mxu0
    %v4986 = vadd.f32 0.0, %v4985
    %4987 = vdwg.mxu0
    %v4988 = vrcp.pop %v4986
    %4990 = vset.pattern.permute.xlu0 0
    %4991 = vperm.xlu0 %4990, %v4988
    %v4992 = vpop.permute.xlu0 %4991
    %v4994 = vmul.f32 %v4966, %v4992
    %v4995 = vld [vmem:[%s9] sm:$0xff]
    %v4996 = vld [vmem:[%s9 + $0x8] sm:$0xff]
    %v4997 = vld [vmem:[%s9 + $0x10] sm:$0xff]
    %v4998 = vld [vmem:[%s9 + $0x18] sm:$0xff]
    %v4999 = vld [vmem:[%s9 + $0x20] sm:$0xff]
    %v5000 = vld [vmem:[%s9 + $0x28] sm:$0xff]
    %v5001 = vld [vmem:[%s9 + $0x30] sm:$0xff]
    %v5002 = vld [vmem:[%s9 + $0x38] sm:$0xff]
    %v5003 = vld [vmem:[%s9 + $0x40] sm:$0xff]
    %v5004 = vld [vmem:[%s9 + $0x48] sm:$0xff]
    %v5005 = vld [vmem:[%s9 + $0x50] sm:$0xff]
    %v5006 = vld [vmem:[%s9 + $0x58] sm:$0xff]
    %v5007 = vld [vmem:[%s9 + $0x60] sm:$0xff]
    %v5008 = vld [vmem:[%s9 + $0x68] sm:$0xff]
    %v5009 = vld [vmem:[%s9 + $0x70] sm:$0xff]
    %v5010 = vld [vmem:[%s9 + $0x78] sm:$0xff]
    %v5011 = vld [vmem:[%s10] sm:$0x1]
    %v5013 = vperm.slane %v5011, 0
    %5015 = vmatpush.msra.mxu0 %v5010
    %5016 = vmatpush.msra.mxu0 %v5009
    %5017 = vmatpush.msra.mxu0 %v5008
    %5018 = vmatpush.msra.mxu0 %v5007
    %5019 = vmatpush.msra.mxu0 %v5006
    %5020 = vmatpush.msra.mxu0 %v5005
    %5021 = vmatpush.msra.mxu0 %v5004
    %5022 = vmatpush.msra.mxu0 %v5003
    %5023 = vmatpush.msra.mxu0 %v5002
    %5024 = vmatpush.msra.mxu0 %v5001
    %5025 = vmatpush.msra.mxu0 %v5000
    %5026 = vmatpush.msra.mxu0 %v4999
    %5027 = vmatpush.msra.mxu0 %v4998
    %5028 = vmatpush.msra.mxu0 %v4997
    %5029 = vmatpush.msra.mxu0 %v4996
    %5030 = vmatpush.msra.mxu0 %v4995
    %5031 = vmatmul.f32.gmra.mxu0 %v4994
    %v5032 = vpop.f32.mrf.mxu0
    %v5033 = vadd.f32 %v5013, %v5032
    %5034 = vdwg.mxu0
    %vm5035 = vcmask 9216
    %5036 = vst.msk [vmem:[#allocation11] sm:$0x3] %vm5035, %v5033
    // Predicated region
    $region66: #{tpu_custom_call.1} parent=1 // pred_check
      _
    $region67: #{tpu_custom_call.1} parent=1 // pred_check_branch
      %5038 = sbr.rel (0) target = $region69
    $region68: #{tpu_custom_call.1} parent=1 // pred_region
      %5040 = vsyncadd [#allocation4], 0
      %s5042 = sshll.u32 [#allocation11], 4
      %s5043 = int_to_ptr.vmem [resolvable:$true] %s5042
      %s5044 = sshll.u32 %s11, 4
      %s5045 = int_to_ptr.hbm [resolvable:$true] %s5044
      %5047 = dma.vmem_to_hbm [thread:$0]  %s5043, 32, %s5045, [#allocation4]
    $region69: #{tpu_custom_call.1} parent=1 // pred_fallthru
      _
    // Predicated region
    $region70: #{tpu_custom_call.1} parent=1 // pred_check
      _
    $region71: #{tpu_custom_call.1} parent=1 // pred_check_branch
      %5049 = sbr.rel (0) target = $region73
    $region72: #{tpu_custom_call.1} parent=1 // pred_region
      %5051 = dma.done [#allocation4], 32
    $region73: #{tpu_custom_call.1} parent=1 // pred_fallthru
      _
    %5052 = vsyncpa [#allocation3], 1
    %5053 = vsyncpa [#allocation6], 1
    %5054 = vsyncpa [#allocation9], 1
    %5055 = vsyncpa [#allocation4], 1

</llo_original>
